<compile_context>
chip_gen: v7x
topology: tpu7x:2x2x1
jax: 0.10.0
libtpu: 0.0.40
codegen_flags: <defaults>
</compile_context>

<pallas_src>
import functools
import math

import jax
import jax.numpy as jnp
from jax import image as jimage
from jax.experimental import pallas as pl
from jax.experimental.pallas import tpu as pltpu


# -----------------------------------------------------------------------------
# Pallas kernels
# -----------------------------------------------------------------------------
def _conv_kernel(*refs, kh, kw, dil, pad, act, neg_slope,
                 has_pre_add, has_gate, has_res):
    """Fused stride-1 conv on one NHWC image.

    refs (in order): x, [x2 pre-add], w (KH*KW, Cin, Cout), bias (1, Cout),
                     [gate], [residual, scales(SMEM,(2,))], out,
                     [xpad VMEM scratch (when pad > 0)].
    out = sa * (gate * act(conv(x [+ x2]) + bias)) + sb * residual
    """
    idx = 0
    x_ref = refs[idx]; idx += 1
    x2_ref = None
    if has_pre_add:
        x2_ref = refs[idx]; idx += 1
    w_ref = refs[idx]; idx += 1
    b_ref = refs[idx]; idx += 1
    g_ref = None
    if has_gate:
        g_ref = refs[idx]; idx += 1
    r_ref = s_ref = None
    if has_res:
        r_ref = refs[idx]; idx += 1
        s_ref = refs[idx]; idx += 1
    o_ref = refs[idx]; idx += 1
    xpad_ref = refs[idx] if pad > 0 else None

    H, W, cin = x_ref.shape
    hout, wout, cout = o_ref.shape

    if has_pre_add:
        xin = x_ref[...] + x2_ref[...]
    elif pad > 0:
        xin = x_ref[...]
    else:
        xin = None

    if pad > 0:
        # in-kernel zero padding: zero the scratch, write the interior.
        xpad_ref[...] = jnp.zeros(xpad_ref.shape, xpad_ref.dtype)
        xpad_ref[pad:pad + H, pad:pad + W, :] = xin

        def tap(i, j):
            return xpad_ref[i * dil:i * dil + hout, j * dil:j * dil + wout, :]
    elif has_pre_add:
        def tap(i, j):
            return xin[i * dil:i * dil + hout, j * dil:j * dil + wout, :]
    else:
        def tap(i, j):
            return x_ref[i * dil:i * dil + hout, j * dil:j * dil + wout, :]

    # one flattened-spatial matmul per tap (<= 9 taps), f32 accumulator.
    acc = jnp.zeros((hout * wout, cout), jnp.float32)
    t = 0
    for i in range(kh):
        for j in range(kw):
            a = tap(i, j).reshape(hout * wout, cin)
            acc = acc + jnp.dot(a, w_ref[t], preferred_element_type=jnp.float32)
            t += 1
    acc = acc + b_ref[...]                                   # (1, Cout) bcast

    if act == "lrelu":
        acc = jnp.where(acc >= 0.0, acc, acc * neg_slope)
    elif act == "relu":
        acc = jnp.maximum(acc, 0.0)
    elif act == "hsigmoid":                                  # relu6(x+3)/6
        acc = jnp.clip(acc + 3.0, 0.0, 6.0) * (1.0 / 6.0)

    out = acc.reshape(hout, wout, cout)
    if has_gate:
        out = g_ref[...] * out
    if has_res:
        out = s_ref[0] * out + s_ref[1] * r_ref[...]
    o_ref[...] = out.astype(o_ref.dtype)


def _red_kernel(*refs, has_res):
    """Fused LRFFB reduction: conv1x1(channel_shuffle(cat(a, b), 2)) =
    a @ Wa + b @ Wb  (weight permutation precomputed), optional residual."""
    a_ref, b_ref, wa_ref, wb_ref, bias_ref = refs[:5]
    idx = 5
    r_ref = s_ref = None
    if has_res:
        r_ref = refs[idx]; s_ref = refs[idx + 1]; idx += 2
    o_ref = refs[idx]

    h, w, cin = a_ref.shape
    cout = o_ref.shape[-1]
    af = a_ref[...].reshape(h * w, cin)
    bf = b_ref[...].reshape(h * w, cin)
    acc = jnp.dot(af, wa_ref[...], preferred_element_type=jnp.float32)
    acc = acc + jnp.dot(bf, wb_ref[...], preferred_element_type=jnp.float32)
    acc = acc + bias_ref[...]
    out = acc.reshape(h, w, cout)
    if has_res:
        out = s_ref[0] * out + s_ref[1] * r_ref[...]
    o_ref[...] = out.astype(o_ref.dtype)


def _maxpool_kernel(x_ref, o_ref, *, ksize, stride):
    """Max pool on one NHWC image; each window = one vectorized max, one store."""
    hout, wout, _ = o_ref.shape
    rows = []
    for oh in range(hout):
        cols = []
        for ow in range(wout):
            win = x_ref[oh * stride:oh * stride + ksize,
                        ow * stride:ow * stride + ksize, :]
            cols.append(jnp.max(win, axis=(0, 1), keepdims=True))   # (1,1,C)
        rows.append(jnp.concatenate(cols, axis=1) if wout > 1 else cols[0])
    out = jnp.concatenate(rows, axis=0) if hout > 1 else rows[0]
    o_ref[...] = out.astype(o_ref.dtype)


# -----------------------------------------------------------------------------
# Pallas wrappers
# -----------------------------------------------------------------------------
def conv2d(x, w, b, *, padding=0, dilation=1, act=None, neg_slope=0.05,
           pre_add=None, gate=None, res=None, scales=None):
    """Fused conv. x: (B,H,W,Cin); w: (KH,KW,Cin,Cout); b: (1,Cout).
    Optional fusions: pre_add (added to x before conv), gate (multiplied after
    activation), res/scales (out = scales[0]*out + scales[1]*res)."""
    B, H, W, Cin = x.shape
    KH, KW, _, Cout = w.shape
    Hout = H + 2 * padding - dilation * (KH - 1)
    Wout = W + 2 * padding - dilation * (KW - 1)
    w2 = w.reshape(KH * KW, Cin, Cout)

    args = [x]
    in_specs = [pl.BlockSpec((None, H, W, Cin), lambda i: (i, 0, 0, 0))]
    if pre_add is not None:
        args.append(pre_add)
        in_specs.append(pl.BlockSpec((None, H, W, Cin), lambda i: (i, 0, 0, 0)))
    args += [w2, b]
    in_specs += [pl.BlockSpec((KH * KW, Cin, Cout), lambda i: (0, 0, 0)),
                 pl.BlockSpec((1, Cout), lambda i: (0, 0))]
    if gate is not None:
        args.append(gate)
        in_specs.append(pl.BlockSpec((None, Hout, Wout, Cout), lambda i: (i, 0, 0, 0)))
    if res is not None:
        if scales is None:
            scales = jnp.ones((2,), jnp.float32)
        args += [res, scales]
        in_specs += [pl.BlockSpec((None, Hout, Wout, Cout), lambda i: (i, 0, 0, 0)),
                     pl.BlockSpec(memory_space=pltpu.MemorySpace.SMEM)]
    scratch = []
    if padding > 0:
        scratch.append(pltpu.VMEM((H + 2 * padding, W + 2 * padding, Cin),
                                  jnp.float32))

    kernel = functools.partial(
        _conv_kernel, kh=KH, kw=KW, dil=dilation, pad=padding, act=act,
        neg_slope=neg_slope, has_pre_add=pre_add is not None,
        has_gate=gate is not None, has_res=res is not None)

    flops = 2 * B * Hout * Wout * KH * KW * Cin * Cout
    bytes_acc = 4 * (x.size + w.size + b.size + B * Hout * Wout * Cout
                     + (0 if gate is None else gate.size)
                     + (0 if res is None else res.size))

    return pl.pallas_call(
        kernel,
        out_shape=jax.ShapeDtypeStruct((B, Hout, Wout, Cout), jnp.float32),
        grid=(B,),
        in_specs=in_specs,
        out_specs=pl.BlockSpec((None, Hout, Wout, Cout), lambda i: (i, 0, 0, 0)),
        scratch_shapes=scratch,
        compiler_params=pltpu.CompilerParams(dimension_semantics=("parallel",)),
        cost_estimate=pl.CostEstimate(flops=flops, transcendentals=0,
                                      bytes_accessed=bytes_acc),
    )(*args)


def conv2d_strided(x, w, b, *, stride, padding=0):
    """Strided conv: gather the KH*KW strided taps in JAX (tiny tensors) and do
    a single (Hout*Wout, KH*KW*Cin) x (KH*KW*Cin, Cout) matmul in the conv
    kernel.  No dense compute + subsample."""
    B, H, W, Cin = x.shape
    KH, KW, _, Cout = w.shape
    if padding:
        x = jnp.pad(x, ((0, 0), (padding, padding), (padding, padding), (0, 0)))
    Hp, Wp = H + 2 * padding, W + 2 * padding
    Hout = (Hp - KH) // stride + 1
    Wout = (Wp - KW) // stride + 1
    taps = []
    for i in range(KH):
        for j in range(KW):
            taps.append(x[:, i:i + (Hout - 1) * stride + 1:stride,
                          j:j + (Wout - 1) * stride + 1:stride, :])
    patches = jnp.concatenate(taps, axis=-1)                 # (B,Hout,Wout,K*Cin)
    patches = patches.reshape(B, 1, Hout * Wout, KH * KW * Cin)
    wflat = w.reshape(KH * KW * Cin, Cout)[None, None]       # (1,1,K*Cin,Cout)
    out = conv2d(patches, wflat, b)                          # 1x1 matmul kernel
    return out.reshape(B, Hout, Wout, Cout)


def red_conv(a, b, wa, wb, bias, res=None, scales=None):
    B, H, W, C = a.shape
    Cout = wa.shape[-1]
    args = [a, b, wa, wb, bias]
    in_specs = [pl.BlockSpec((None, H, W, C), lambda i: (i, 0, 0, 0)),
                pl.BlockSpec((None, H, W, C), lambda i: (i, 0, 0, 0)),
                pl.BlockSpec((C, Cout), lambda i: (0, 0)),
                pl.BlockSpec((C, Cout), lambda i: (0, 0)),
                pl.BlockSpec((1, Cout), lambda i: (0, 0))]
    if res is not None:
        if scales is None:
            scales = jnp.ones((2,), jnp.float32)
        args += [res, scales]
        in_specs += [pl.BlockSpec((None, H, W, Cout), lambda i: (i, 0, 0, 0)),
                     pl.BlockSpec(memory_space=pltpu.MemorySpace.SMEM)]
    return pl.pallas_call(
        functools.partial(_red_kernel, has_res=res is not None),
        out_shape=jax.ShapeDtypeStruct((B, H, W, Cout), jnp.float32),
        grid=(B,),
        in_specs=in_specs,
        out_specs=pl.BlockSpec((None, H, W, Cout), lambda i: (i, 0, 0, 0)),
        compiler_params=pltpu.CompilerParams(dimension_semantics=("parallel",)),
    )(*args)


def maxpool2d(x, *, ksize, stride):
    B, H, W, C = x.shape
    Hout = (H - ksize) // stride + 1
    Wout = (W - ksize) // stride + 1
    return pl.pallas_call(
        functools.partial(_maxpool_kernel, ksize=ksize, stride=stride),
        out_shape=jax.ShapeDtypeStruct((B, Hout, Wout, C), x.dtype),
        grid=(B,),
        in_specs=[pl.BlockSpec((None, H, W, C), lambda i: (i, 0, 0, 0))],
        out_specs=pl.BlockSpec((None, Hout, Wout, C), lambda i: (i, 0, 0, 0)),
        compiler_params=pltpu.CompilerParams(dimension_semantics=("parallel",)),
    )(x)


# -----------------------------------------------------------------------------
# JAX glue (pure layout)
# -----------------------------------------------------------------------------
def pixel_shuffle_nhwc(x, r):
    B, H, W, C = x.shape
    c_out = C // (r * r)
    x = x.reshape(B, H, W, c_out, r, r)
    x = jnp.transpose(x, (0, 1, 4, 2, 5, 3))
    return x.reshape(B, H * r, W * r, c_out)


# -----------------------------------------------------------------------------
# Model blocks (mirroring the PyTorch modules)
# -----------------------------------------------------------------------------
def efsa_forward(x, skip, scales, p):
    """EFSA with the AAWRU residual fused into conv4's epilogue:
    returns scales[0] * (x * hsigmoid(conv4(c3 + c1_))) + scales[1] * skip."""
    B, H, W, _ = x.shape
    c1_ = conv2d(x, *p["conv1"])                                    # 1x1 nf->f
    c1 = conv2d_strided(c1_, *p["conv2"], stride=2, padding=0)      # 3x3 s2 p0
    v_max = maxpool2d(c1, ksize=7, stride=3)
    v_range = conv2d(v_max, *p["conv_max"], padding=1,
                     act="lrelu", neg_slope=0.05)                   # 3x3 p1
    c3 = conv2d(v_max, *p["conv3"], padding=2, dilation=2,
                act="lrelu", neg_slope=0.05, res=v_range)           # + v_range fused
    # F.interpolate bilinear (align_corners=False); layout-only broadcast here.
    c3 = jimage.resize(c3, (B, H, W, c3.shape[-1]), method="linear")
    # conv4(c3 + c1_) -> hsigmoid -> gate by x -> fused AAWRU residual
    return conv2d(c3, *p["conv4"], act="hsigmoid",
                  pre_add=c1_, gate=x, res=skip, scales=scales)


def aawru_forward(x, p, extra_x=0.0):
    """AAWRU; extra_x folds LRFFB's '+ previous' add into the x_scale term."""
    h = conv2d(x, *p["c1"], padding=1, act="lrelu", neg_slope=0.01)  # wn(conv)+LReLU(0.01)
    h = conv2d(h, *p["c2"], padding=1)                               # wn(conv)
    scales = jnp.stack([p["res_scale"], p["x_scale"] + extra_x])
    return efsa_forward(h, x, scales, p["efsa"])


def lrffb_forward(x, p):
    x0 = aawru_forward(x, p["b0"])
    x1 = aawru_forward(x0, p["b1"], extra_x=1.0)      # + x0 fused
    x2 = aawru_forward(x1, p["b2"], extra_x=1.0)      # + x1 fused
    x3 = aawru_forward(x2, p["b3"])
    wa, wb, bias = p["red_wa"], p["red_wb"], p["red_b"]
    res1 = red_conv(x3, x2, wa, wb, bias)
    res2 = red_conv(res1, x1, wa, wb, bias)
    scales = jnp.stack([p["res_scale"], p["x_scale"]])
    return red_conv(res2, x0, wa, wb, bias, res=x, scales=scales)   # final residual fused


def rfesr_forward(x_nchw, params):
    x = jnp.transpose(x_nchw, (0, 2, 3, 1))                          # NCHW -> NHWC
    out_fea = conv2d(x, *params["fea_conv"], padding=1)
    b = out_fea
    for i in range(4):                                               # B1..B4
        b = lrffb_forward(b, params["B"][i])
    out_lr = conv2d(b, *params["LR_conv"], padding=1, res=out_fea)   # + out_fea fused
    up = conv2d(out_lr, *params["up_conv"], padding=1)               # nf -> out_nc*16
    out = pixel_shuffle_nhwc(up, 4)
    return jnp.transpose(out, (0, 3, 1, 2))                          # NHWC -> NCHW


# -----------------------------------------------------------------------------
# Deterministic parameter init.  weight_norm is an identity reparam at forward
# time, so effective weights are initialized directly.  The LRFFB reduction
# weight's channel-shuffle permutation is folded into (Wa, Wb) at init.
# -----------------------------------------------------------------------------
def init_params(key, in_nc=3, nf=32, out_nc=3):
    keys = iter(jax.random.split(key, 512))

    def conv_p(cin, cout, k):
        wk, bk = jax.random.split(next(keys))
        std = 0.5 / math.sqrt(k * k * cin)
        w = jax.random.normal(wk, (k, k, cin, cout), jnp.float32) * std
        b = jax.random.normal(bk, (1, cout), jnp.float32) * 0.01
        return (w, b)

    one = lambda: jnp.array(1.0, jnp.float32)

    def efsa_p(n):
        f = n // 4
        return dict(conv1=conv_p(n, f, 1), conv2=conv_p(f, f, 3),
                    conv_max=conv_p(f, f, 3), conv3=conv_p(f, f, 3),
                    conv4=conv_p(f, n, 1))

    def aawru_p(n):
        return dict(c1=conv_p(n, n, 3), c2=conv_p(n, n, 3), efsa=efsa_p(n),
                    res_scale=one(), x_scale=one())

    def lrffb_p(n):
        wr, br = conv_p(2 * n, n, 1)
        wr2 = wr.reshape(2 * n, n)
        # shuffled[2m] = a[m], shuffled[2m+1] = b[m]  ->  split even/odd rows.
        return dict(b0=aawru_p(n), b1=aawru_p(n), b2=aawru_p(n), b3=aawru_p(n),
                    red_wa=wr2[0::2, :], red_wb=wr2[1::2, :], red_b=br,
                    res_scale=one(), x_scale=one())

    return dict(
        fea_conv=conv_p(in_nc, nf, 3),
        B=[lrffb_p(nf) for _ in range(4)],
        LR_conv=conv_p(nf, nf, 3),
        up_conv=conv_p(nf, out_nc * 16, 3),    # upscale hard-coded to 4
    )


# -----------------------------------------------------------------------------
if __name__ == "__main__":
    key = jax.random.PRNGKey(0)
    pkey, xkey = jax.random.split(key)
    params = init_params(pkey, in_nc=3, nf=32, out_nc=3)

    # NCHW input like the PyTorch module (16x16 keeps EFSA's stride-2 conv +
    # 7x7/3 max-pool geometry valid).
    x = jax.random.normal(xkey, (2, 3, 16, 16), jnp.float32)

    # --- spot-check the Pallas conv kernels against XLA convolutions ---------
    k1, k2, k3 = jax.random.split(jax.random.PRNGKey(1), 3)

    xc = jax.random.normal(k1, (2, 16, 16, 32), jnp.float32)
    wc, bc = params["LR_conv"]
    ref = jax.lax.conv_general_dilated(
        xc, wc, (1, 1), ((1, 1), (1, 1)),
        dimension_numbers=("NHWC", "HWIO", "NHWC")) + bc.reshape(1, 1, 1, -1)
    got = conv2d(xc, wc, bc, padding=1)
    assert jnp.allclose(got, ref, rtol=2e-2, atol=2e-2), "3x3 conv mismatch"

    xd = jax.random.normal(k2, (2, 16, 16, 8), jnp.float32)
    wd, bd = params["B"][0]["b0"]["efsa"]["conv3"]
    refd = jax.lax.conv_general_dilated(
        xd, wd, (1, 1), ((2, 2), (2, 2)), rhs_dilation=(2, 2),
        dimension_numbers=("NHWC", "HWIO", "NHWC")) + bd.reshape(1, 1, 1, -1)
    gotd = conv2d(xd, wd, bd, padding=2, dilation=2)
    assert jnp.allclose(gotd, refd, rtol=2e-2, atol=2e-2), "dilated conv mismatch"

    xs = jax.random.normal(k3, (2, 16, 16, 8), jnp.float32)
    ws, bs = params["B"][0]["b0"]["efsa"]["conv2"]
    refs2 = jax.lax.conv_general_dilated(
        xs, ws, (2, 2), "VALID",
        dimension_numbers=("NHWC", "HWIO", "NHWC")) + bs.reshape(1, 1, 1, -1)
    gots2 = conv2d_strided(xs, ws, bs, stride=2, padding=0)
    assert jnp.allclose(gots2, refs2, rtol=2e-2, atol=2e-2), "strided conv mismatch"

    # --- full forward ---------------------------------------------------------
    fwd = jax.jit(rfesr_forward)
    out = jax.block_until_ready(fwd(x, params))

    assert out.shape == (2, 3, 64, 64), out.shape       # x4 upscale
    assert bool(jnp.all(jnp.isfinite(out)))
    print("KERNEL_OK")
</pallas_src>

<mosaic_0001>
module attributes {stable_mosaic.version = 11 : i64} {
  func.func @_conv_kernel(%arg0: i32, %arg1: memref<1x16x16x32xf32, #tpu.memory_space<vmem>>, %arg2: memref<9x32x32xf32, #tpu.memory_space<vmem>>, %arg3: memref<1x32xf32, #tpu.memory_space<vmem>>, %arg4: memref<1x16x16x32xf32, #tpu.memory_space<vmem>>, %arg5: memref<18x18x32xf32, #tpu.memory_space<vmem>>) attributes {dimension_semantics = [#tpu.dimension_semantics<parallel>], iteration_bounds = array<i64: 2>, scalar_prefetch = 0 : i64, scratch_operands = 1 : i64, tpu.core_type = #tpu.core_type<tc>, window_params = [{transform_indices = @transform_0, window_bounds = array<i64: 1, 16, 16, 32>}, {pipeline_mode = #tpu.pipeline_mode<synchronous>, transform_indices = @transform_1, window_bounds = array<i64: 9, 32, 32>}, {pipeline_mode = #tpu.pipeline_mode<synchronous>, transform_indices = @transform_2, window_bounds = array<i64: 1, 32>}, {transform_indices = @transform_3, window_bounds = array<i64: 1, 16, 16, 32>}]} {
    %c0 = arith.constant 0 : index
    %c0_0 = arith.constant 0 : index
    %c0_1 = arith.constant 0 : index
    %c0_2 = arith.constant 0 : index
    %0 = vector.load %arg1[%c0, %c0_0, %c0_1, %c0_2] : memref<1x16x16x32xf32, #tpu.memory_space<vmem>>, vector<1x16x16x32xf32>
    %1 = vector.shape_cast %0 : vector<1x16x16x32xf32> to vector<16x16x32xf32>
    %cst = arith.constant 0.000000e+00 : f32
    %2 = vector.broadcast %cst : f32 to vector<18x18x32xf32>
    %c0_3 = arith.constant 0 : index
    %c0_4 = arith.constant 0 : index
    %c0_5 = arith.constant 0 : index
    %3 = vector.load %arg5[%c0_3, %c0_4, %c0_5] : memref<18x18x32xf32, #tpu.memory_space<vmem>>, vector<18x18x32xf32>
    tpu.vector_store %arg5[%c0_3, %c0_4, %c0_5], %2 {strides = array<i32>} : memref<18x18x32xf32, #tpu.memory_space<vmem>>, vector<18x18x32xf32>,
    %c1 = arith.constant 1 : index
    %c1_6 = arith.constant 1 : index
    %c0_7 = arith.constant 0 : index
    %4 = vector.load %arg5[%c1, %c1_6, %c0_7] : memref<18x18x32xf32, #tpu.memory_space<vmem>>, vector<16x16x32xf32>
    tpu.vector_store %arg5[%c1, %c1_6, %c0_7], %1 {strides = array<i32>} : memref<18x18x32xf32, #tpu.memory_space<vmem>>, vector<16x16x32xf32>,
    %cst_8 = arith.constant 0.000000e+00 : f32
    %5 = vector.broadcast %cst_8 : f32 to vector<256x32xf32>
    %c0_9 = arith.constant 0 : index
    %c0_10 = arith.constant 0 : index
    %c0_11 = arith.constant 0 : index
    %6 = vector.load %arg5[%c0_9, %c0_10, %c0_11] : memref<18x18x32xf32, #tpu.memory_space<vmem>>, vector<16x16x32xf32>
    %7 = vector.shape_cast %6 : vector<16x16x32xf32> to vector<256x32xf32>
    %c0_12 = arith.constant 0 : index
    %c0_13 = arith.constant 0 : index
    %c0_14 = arith.constant 0 : index
    %8 = vector.load %arg2[%c0_12, %c0_13, %c0_14] : memref<9x32x32xf32, #tpu.memory_space<vmem>>, vector<1x32x32xf32>
    %9 = vector.shape_cast %8 : vector<1x32x32xf32> to vector<32x32xf32>
    %cst_15 = arith.constant dense<0.000000e+00> : vector<256x32xf32>
    %10 = tpu.matmul %7, %9, %cst_15 {dimension_numbers = #tpu.dot_dimension_numbers<[1], [0], [0], [1], [0, 0, 1, 1], [], []>} : vector<256x32xf32>, vector<32x32xf32>, vector<256x32xf32> -> vector<256x32xf32>
    %11 = arith.addf %5, %10 : vector<256x32xf32>
    %c0_16 = arith.constant 0 : index
    %c1_17 = arith.constant 1 : index
    %c0_18 = arith.constant 0 : index
    %12 = vector.load %arg5[%c0_16, %c1_17, %c0_18] : memref<18x18x32xf32, #tpu.memory_space<vmem>>, vector<16x16x32xf32>
    %13 = vector.shape_cast %12 : vector<16x16x32xf32> to vector<256x32xf32>
    %c1_19 = arith.constant 1 : index
    %c0_20 = arith.constant 0 : index
    %c0_21 = arith.constant 0 : index
    %14 = vector.load %arg2[%c1_19, %c0_20, %c0_21] : memref<9x32x32xf32, #tpu.memory_space<vmem>>, vector<1x32x32xf32>
    %15 = vector.shape_cast %14 : vector<1x32x32xf32> to vector<32x32xf32>
    %cst_22 = arith.constant dense<0.000000e+00> : vector<256x32xf32>
    %16 = tpu.matmul %13, %15, %cst_22 {dimension_numbers = #tpu.dot_dimension_numbers<[1], [0], [0], [1], [0, 0, 1, 1], [], []>} : vector<256x32xf32>, vector<32x32xf32>, vector<256x32xf32> -> vector<256x32xf32>
    %17 = arith.addf %11, %16 : vector<256x32xf32>
    %c0_23 = arith.constant 0 : index
    %c2 = arith.constant 2 : index
    %c0_24 = arith.constant 0 : index
    %18 = vector.load %arg5[%c0_23, %c2, %c0_24] : memref<18x18x32xf32, #tpu.memory_space<vmem>>, vector<16x16x32xf32>
    %19 = vector.shape_cast %18 : vector<16x16x32xf32> to vector<256x32xf32>
    %c2_25 = arith.constant 2 : index
    %c0_26 = arith.constant 0 : index
    %c0_27 = arith.constant 0 : index
    %20 = vector.load %arg2[%c2_25, %c0_26, %c0_27] : memref<9x32x32xf32, #tpu.memory_space<vmem>>, vector<1x32x32xf32>
    %21 = vector.shape_cast %20 : vector<1x32x32xf32> to vector<32x32xf32>
    %cst_28 = arith.constant dense<0.000000e+00> : vector<256x32xf32>
    %22 = tpu.matmul %19, %21, %cst_28 {dimension_numbers = #tpu.dot_dimension_numbers<[1], [0], [0], [1], [0, 0, 1, 1], [], []>} : vector<256x32xf32>, vector<32x32xf32>, vector<256x32xf32> -> vector<256x32xf32>
    %23 = arith.addf %17, %22 : vector<256x32xf32>
    %c1_29 = arith.constant 1 : index
    %c0_30 = arith.constant 0 : index
    %c0_31 = arith.constant 0 : index
    %24 = vector.load %arg5[%c1_29, %c0_30, %c0_31] : memref<18x18x32xf32, #tpu.memory_space<vmem>>, vector<16x16x32xf32>
    %25 = vector.shape_cast %24 : vector<16x16x32xf32> to vector<256x32xf32>
    %c3 = arith.constant 3 : index
    %c0_32 = arith.constant 0 : index
    %c0_33 = arith.constant 0 : index
    %26 = vector.load %arg2[%c3, %c0_32, %c0_33] : memref<9x32x32xf32, #tpu.memory_space<vmem>>, vector<1x32x32xf32>
    %27 = vector.shape_cast %26 : vector<1x32x32xf32> to vector<32x32xf32>
    %cst_34 = arith.constant dense<0.000000e+00> : vector<256x32xf32>
    %28 = tpu.matmul %25, %27, %cst_34 {dimension_numbers = #tpu.dot_dimension_numbers<[1], [0], [0], [1], [0, 0, 1, 1], [], []>} : vector<256x32xf32>, vector<32x32xf32>, vector<256x32xf32> -> vector<256x32xf32>
    %29 = arith.addf %23, %28 : vector<256x32xf32>
    %c1_35 = arith.constant 1 : index
    %c1_36 = arith.constant 1 : index
    %c0_37 = arith.constant 0 : index
    %30 = vector.load %arg5[%c1_35, %c1_36, %c0_37] : memref<18x18x32xf32, #tpu.memory_space<vmem>>, vector<16x16x32xf32>
    %31 = vector.shape_cast %30 : vector<16x16x32xf32> to vector<256x32xf32>
    %c4 = arith.constant 4 : index
    %c0_38 = arith.constant 0 : index
    %c0_39 = arith.constant 0 : index
    %32 = vector.load %arg2[%c4, %c0_38, %c0_39] : memref<9x32x32xf32, #tpu.memory_space<vmem>>, vector<1x32x32xf32>
    %33 = vector.shape_cast %32 : vector<1x32x32xf32> to vector<32x32xf32>
    %cst_40 = arith.constant dense<0.000000e+00> : vector<256x32xf32>
    %34 = tpu.matmul %31, %33, %cst_40 {dimension_numbers = #tpu.dot_dimension_numbers<[1], [0], [0], [1], [0, 0, 1, 1], [], []>} : vector<256x32xf32>, vector<32x32xf32>, vector<256x32xf32> -> vector<256x32xf32>
    %35 = arith.addf %29, %34 : vector<256x32xf32>
    %c1_41 = arith.constant 1 : index
    %c2_42 = arith.constant 2 : index
    %c0_43 = arith.constant 0 : index
    %36 = vector.load %arg5[%c1_41, %c2_42, %c0_43] : memref<18x18x32xf32, #tpu.memory_space<vmem>>, vector<16x16x32xf32>
    %37 = vector.shape_cast %36 : vector<16x16x32xf32> to vector<256x32xf32>
    %c5 = arith.constant 5 : index
    %c0_44 = arith.constant 0 : index
    %c0_45 = arith.constant 0 : index
    %38 = vector.load %arg2[%c5, %c0_44, %c0_45] : memref<9x32x32xf32, #tpu.memory_space<vmem>>, vector<1x32x32xf32>
    %39 = vector.shape_cast %38 : vector<1x32x32xf32> to vector<32x32xf32>
    %cst_46 = arith.constant dense<0.000000e+00> : vector<256x32xf32>
    %40 = tpu.matmul %37, %39, %cst_46 {dimension_numbers = #tpu.dot_dimension_numbers<[1], [0], [0], [1], [0, 0, 1, 1], [], []>} : vector<256x32xf32>, vector<32x32xf32>, vector<256x32xf32> -> vector<256x32xf32>
    %41 = arith.addf %35, %40 : vector<256x32xf32>
    %c2_47 = arith.constant 2 : index
    %c0_48 = arith.constant 0 : index
    %c0_49 = arith.constant 0 : index
    %42 = vector.load %arg5[%c2_47, %c0_48, %c0_49] : memref<18x18x32xf32, #tpu.memory_space<vmem>>, vector<16x16x32xf32>
    %43 = vector.shape_cast %42 : vector<16x16x32xf32> to vector<256x32xf32>
    %c6 = arith.constant 6 : index
    %c0_50 = arith.constant 0 : index
    %c0_51 = arith.constant 0 : index
    %44 = vector.load %arg2[%c6, %c0_50, %c0_51] : memref<9x32x32xf32, #tpu.memory_space<vmem>>, vector<1x32x32xf32>
    %45 = vector.shape_cast %44 : vector<1x32x32xf32> to vector<32x32xf32>
    %cst_52 = arith.constant dense<0.000000e+00> : vector<256x32xf32>
    %46 = tpu.matmul %43, %45, %cst_52 {dimension_numbers = #tpu.dot_dimension_numbers<[1], [0], [0], [1], [0, 0, 1, 1], [], []>} : vector<256x32xf32>, vector<32x32xf32>, vector<256x32xf32> -> vector<256x32xf32>
    %47 = arith.addf %41, %46 : vector<256x32xf32>
    %c2_53 = arith.constant 2 : index
    %c1_54 = arith.constant 1 : index
    %c0_55 = arith.constant 0 : index
    %48 = vector.load %arg5[%c2_53, %c1_54, %c0_55] : memref<18x18x32xf32, #tpu.memory_space<vmem>>, vector<16x16x32xf32>
    %49 = vector.shape_cast %48 : vector<16x16x32xf32> to vector<256x32xf32>
    %c7 = arith.constant 7 : index
    %c0_56 = arith.constant 0 : index
    %c0_57 = arith.constant 0 : index
    %50 = vector.load %arg2[%c7, %c0_56, %c0_57] : memref<9x32x32xf32, #tpu.memory_space<vmem>>, vector<1x32x32xf32>
    %51 = vector.shape_cast %50 : vector<1x32x32xf32> to vector<32x32xf32>
    %cst_58 = arith.constant dense<0.000000e+00> : vector<256x32xf32>
    %52 = tpu.matmul %49, %51, %cst_58 {dimension_numbers = #tpu.dot_dimension_numbers<[1], [0], [0], [1], [0, 0, 1, 1], [], []>} : vector<256x32xf32>, vector<32x32xf32>, vector<256x32xf32> -> vector<256x32xf32>
    %53 = arith.addf %47, %52 : vector<256x32xf32>
    %c2_59 = arith.constant 2 : index
    %c2_60 = arith.constant 2 : index
    %c0_61 = arith.constant 0 : index
    %54 = vector.load %arg5[%c2_59, %c2_60, %c0_61] : memref<18x18x32xf32, #tpu.memory_space<vmem>>, vector<16x16x32xf32>
    %55 = vector.shape_cast %54 : vector<16x16x32xf32> to vector<256x32xf32>
    %c8 = arith.constant 8 : index
    %c0_62 = arith.constant 0 : index
    %c0_63 = arith.constant 0 : index
    %56 = vector.load %arg2[%c8, %c0_62, %c0_63] : memref<9x32x32xf32, #tpu.memory_space<vmem>>, vector<1x32x32xf32>
    %57 = vector.shape_cast %56 : vector<1x32x32xf32> to vector<32x32xf32>
    %cst_64 = arith.constant dense<0.000000e+00> : vector<256x32xf32>
    %58 = tpu.matmul %55, %57, %cst_64 {dimension_numbers = #tpu.dot_dimension_numbers<[1], [0], [0], [1], [0, 0, 1, 1], [], []>} : vector<256x32xf32>, vector<32x32xf32>, vector<256x32xf32> -> vector<256x32xf32>
    %59 = arith.addf %53, %58 : vector<256x32xf32>
    %c0_65 = arith.constant 0 : index
    %c0_66 = arith.constant 0 : index
    %60 = vector.load %arg3[%c0_65, %c0_66] : memref<1x32xf32, #tpu.memory_space<vmem>>, vector<1x32xf32>
    %61 = vector.broadcast %60 : vector<1x32xf32> to vector<256x32xf32>
    %62 = arith.addf %59, %61 : vector<256x32xf32>
    %63 = vector.shape_cast %62 : vector<256x32xf32> to vector<16x16x32xf32>
    %c0_67 = arith.constant 0 : index
    %c0_68 = arith.constant 0 : index
    %c0_69 = arith.constant 0 : index
    %c0_70 = arith.constant 0 : index
    %64 = vector.load %arg4[%c0_67, %c0_68, %c0_69, %c0_70] : memref<1x16x16x32xf32, #tpu.memory_space<vmem>>, vector<1x16x16x32xf32>
    %65 = vector.shape_cast %64 : vector<1x16x16x32xf32> to vector<16x16x32xf32>
    %66 = vector.shape_cast %63 : vector<16x16x32xf32> to vector<1x16x16x32xf32>
    tpu.vector_store %arg4[%c0_67, %c0_68, %c0_69, %c0_70], %66 {strides = array<i32>} : memref<1x16x16x32xf32, #tpu.memory_space<vmem>>, vector<1x16x16x32xf32>,
    return
  }
  func.func @transform_0(%arg0: i32) -> (i32, i32, i32, i32) {
    %c0_i32 = arith.constant 0 : i32
    %c0_i32_0 = arith.constant 0 : i32
    %c0_i32_1 = arith.constant 0 : i32
    %c0_i32_2 = arith.constant 0 : i32
    return %arg0, %c0_i32, %c0_i32_0, %c0_i32_1 : i32, i32, i32, i32
  }
  func.func @transform_1(%arg0: i32) -> (i32, i32, i32) {
    %c0_i32 = arith.constant 0 : i32
    %c0_i32_0 = arith.constant 0 : i32
    %c0_i32_1 = arith.constant 0 : i32
    %c0_i32_2 = arith.constant 0 : i32
    return %c0_i32, %c0_i32_0, %c0_i32_1 : i32, i32, i32
  }
  func.func @transform_2(%arg0: i32) -> (i32, i32) {
    %c0_i32 = arith.constant 0 : i32
    %c0_i32_0 = arith.constant 0 : i32
    %c0_i32_1 = arith.constant 0 : i32
    return %c0_i32, %c0_i32_0 : i32, i32
  }
  func.func @transform_3(%arg0: i32) -> (i32, i32, i32, i32) {
    %c0_i32 = arith.constant 0 : i32
    %c0_i32_0 = arith.constant 0 : i32
    %c0_i32_1 = arith.constant 0 : i32
    %c0_i32_2 = arith.constant 0 : i32
    return %arg0, %c0_i32, %c0_i32_0, %c0_i32_1 : i32, i32, i32, i32
  }
}

</mosaic_0001>

<llo_original>
// kernel: tpu_custom_call.1
$region0: #{tpu_custom_call.1}
  #allocation0 [shape = 'u32[]', space=smem, size = 0x4, offset = 0x4, fixed_abs, tag = 'smem constant byte address 0x4 - core index']
  #allocation1 [shape = 'u32[144,128]{1,0:T(1,128)}', space=vmem, size = 0x12000, scoped, tag = 'internal scratch']
  #allocation2 [shape = 'f32[18,18,32]{2,1,0:T(8,128)}', space=vmem, size = 0x36000, scoped, tag = 'scratch operand']
  %s0 = inlined_call_operand.hbm [shape: f32[2,16,16,32], index: 0, kind: input, shape index: {}]
  %s1 = inlined_call_operand.hbm [shape: f32[9,32,32], index: 1, kind: input, shape index: {}]
  %s2 = inlined_call_operand.vmem [shape: f32[1,32], index: 2, kind: input, shape index: {}]
  %s3 = inlined_call_operand.hbm [shape: f32[2,16,16,32], index: 3, kind: output, shape index: {}]
  %s4 = sld [smem:[#allocation0]]
  $region53: #{tpu_custom_call.1} parent=0
    _
  %s6 = ssub.s32 1, %s4
  %s7 = scalar_select 0, %s6, %s4
  $region1: #{tpu_custom_call.1} parent=0
    #allocation3 [shape = 'u8[262144]{0}', space=vmem, size = 0x40000, scoped, tag = 'input window, operand 0']
    #allocation4 [shape = 's32[2]{0}', space=sflag, size = 0x8, scoped, tag = 'scoped memory for tpu_custom_call.1']
    #allocation5 [shape = 's32[2]{0}', space=sflag, size = 0x8, scoped, tag = 'scoped memory for tpu_custom_call.1']
    #allocation6 [shape = 'u8[147456]{0}', space=vmem, size = 0x24000, scoped, tag = 'input window, operand 1, single buffered']
    #allocation7 [shape = 's32[1]{0}', space=sflag, size = 0x4, scoped, tag = 'scoped memory for tpu_custom_call.1']
    #allocation8 [shape = 'u8[262144]{0}', space=vmem, size = 0x40000, scoped, tag = 'output window, operand 0']
    %8 = vsyncpa [#allocation4], 0
    %s9 = scalar_lea.sflag [#allocation4], 1
    %10 = vsyncpa %s9, 0
    %11 = vsyncpa [#allocation7], 0
    %12 = vsyncpa [#allocation5], 0
    %s13 = scalar_lea.sflag [#allocation5], 1
    %14 = vsyncpa %s13, 0
    loop: start=0, step=1, limit=4
    $region2: #{tpu_custom_call.1} parent=1 // loop_pre_header
      _
    $region3: #{tpu_custom_call.1} parent=1 // loop_header
      %s16 = sphi 0, %s20
      %p17 = scmp.ge.s32.totalorder %s16, 4
      %s26 = sphi 0, %s28
      %s29 = sphi 0, %s26
      %s30 = sphi 0, %s29
      %s46 = sphi 0, %s30
      %s50 = sphi 0, %s50
      %s52 = sphi 0, %s50
      %s53 = sphi 0, %s52
      %s67 = sphi 0, %s53
      %s71 = sphi 0, %s71
      %s73 = sphi 0, %s71
      %s74 = sphi 0, %s73
      %s88 = sphi 0, %s74
      %s94 = sphi 0, %s96
      %s97 = sphi 0, %s94
      %s98 = sphi 0, %s97
      %s114 = sphi 0, %s98
    $region4: #{tpu_custom_call.1} parent=1 // loop_header_branch
      %19 = sbr.rel (%p17) target = $region8
    $region5: #{tpu_custom_call.1} parent=1 // loop_body
      %s21 = ssub.s32 %s16, 1
      %s22 = ssub.s32 %s16, 2
      %s23 = sadd.s32 %s16, 1
      %s24 = ssub.s32 %s16, %s23
      %p25 = scmp.eq.s32.totalorder %s24, 0
      %s27 = sadd.s32 %s26, 1
      %s28 = scalar_select %p25, %s26, %s27
      %p31 = pneg %p25
      %p32 = scmp.eq.s32.totalorder %s16, 1
      %p33 = por %p31, %p32
      %p34 = scmp.ne.s32.totalorder %s26, %s29
      %p35 = scmp.eq.s32.totalorder %s16, 0
      %p36 = por %p34, %p35
      %p37 = scmp.ne.s32.totalorder %s26, %s29
      %p38 = scmp.eq.s32.totalorder %s21, 1
      %p39 = por %p37, %p38
      %p40 = scmp.ne.s32.totalorder %s29, %s30
      %p41 = scmp.eq.s32.totalorder %s21, 0
      %p42 = por %p40, %p41
      %p43 = scmp.ne.s32.totalorder %s29, %s30
      %p44 = scmp.eq.s32.totalorder %s22, 1
      %p45 = por %p43, %p44
      %p47 = scmp.ne.s32.totalorder %s30, %s46
      %p48 = scmp.eq.s32.totalorder %s22, 0
      %p49 = por %p47, %p48
      %s51 = sadd.s32 %s50, 1
      %p54 = scmp.eq.s32.totalorder %s16, 1
      %p55 = scmp.ne.s32.totalorder %s50, %s52
      %p56 = scmp.eq.s32.totalorder %s16, 0
      %p57 = por %p55, %p56
      %p58 = scmp.ne.s32.totalorder %s50, %s52
      %p59 = scmp.eq.s32.totalorder %s21, 1
      %p60 = por %p58, %p59
      %p61 = scmp.ne.s32.totalorder %s52, %s53
      %p62 = scmp.eq.s32.totalorder %s21, 0
      %p63 = por %p61, %p62
      %p64 = scmp.ne.s32.totalorder %s52, %s53
      %p65 = scmp.eq.s32.totalorder %s22, 1
      %p66 = por %p64, %p65
      %p68 = scmp.ne.s32.totalorder %s53, %s67
      %p69 = scmp.eq.s32.totalorder %s22, 0
      %p70 = por %p68, %p69
      %s72 = sadd.s32 %s71, 1
      %p75 = scmp.eq.s32.totalorder %s16, 1
      %p76 = scmp.ne.s32.totalorder %s71, %s73
      %p77 = scmp.eq.s32.totalorder %s16, 0
      %p78 = por %p76, %p77
      %p79 = scmp.ne.s32.totalorder %s71, %s73
      %p80 = scmp.eq.s32.totalorder %s21, 1
      %p81 = por %p79, %p80
      %p82 = scmp.ne.s32.totalorder %s73, %s74
      %p83 = scmp.eq.s32.totalorder %s21, 0
      %p84 = por %p82, %p83
      %p85 = scmp.ne.s32.totalorder %s73, %s74
      %p86 = scmp.eq.s32.totalorder %s22, 1
      %p87 = por %p85, %p86
      %p89 = scmp.ne.s32.totalorder %s74, %s88
      %p90 = scmp.eq.s32.totalorder %s22, 0
      %p91 = por %p89, %p90
      %s92 = ssub.s32 %s16, %s23
      %p93 = scmp.eq.s32.totalorder %s92, 0
      %s95 = sadd.s32 %s94, 1
      %s96 = scalar_select %p93, %s94, %s95
      %p99 = pneg %p93
      %p100 = scmp.eq.s32.totalorder %s16, 1
      %p101 = por %p99, %p100
      %p102 = scmp.ne.s32.totalorder %s94, %s97
      %p103 = scmp.eq.s32.totalorder %s16, 0
      %p104 = por %p102, %p103
      %p105 = scmp.ne.s32.totalorder %s94, %s97
      %p106 = scmp.eq.s32.totalorder %s21, 1
      %p107 = por %p105, %p106
      %p108 = scmp.ne.s32.totalorder %s97, %s98
      %p109 = scmp.eq.s32.totalorder %s21, 0
      %p110 = por %p108, %p109
      %p111 = scmp.ne.s32.totalorder %s97, %s98
      %p112 = scmp.eq.s32.totalorder %s22, 1
      %p113 = por %p111, %p112
      %p115 = scmp.ne.s32.totalorder %s98, %s114
      %p116 = scmp.eq.s32.totalorder %s22, 0
      %p117 = por %p115, %p116
      %p118 = scmp.le.s32.totalorder 1, %s16
      %p119 = scmp.lt.s32.totalorder %s16, 3
      %p120 = pnand %p118, %p119
      %p121 = pneg %p120
      // Predicated region
      $region9: #{tpu_custom_call.1} parent=5 // pred_check
        _
      $region10: #{tpu_custom_call.1} parent=5 // pred_check_branch
        %123 = sbr.rel (%p120) target = $region12
      $region11: #{tpu_custom_call.1} parent=5 // pred_region
        %s124 = ssub.s32 %s16, 1
        // Predicated region
        $region13: #{tpu_custom_call.1} parent=11 // pred_check
          %p125 = pneg %p63
        $region14: #{tpu_custom_call.1} parent=11 // pred_check_branch
          %127 = sbr.rel (%p125) target = $region16
        $region15: #{tpu_custom_call.1} parent=11 // pred_region
          %s129 = ssub.s32 4608, 4608
          %130 = vsyncadd [#allocation7], %s129
          %s131 = sshll.u32 [#allocation6], 4
          %s132 = int_to_ptr.vmem [resolvable:$true] %s131
          %137 = dma.hbm_to_vmem [thread:$0]  %s1, 4608, %s132, [#allocation7], 128, 128, 8
        $region16: #{tpu_custom_call.1} parent=11 // pred_fallthru
          _
        // Predicated region
        $region17: #{tpu_custom_call.1} parent=11 // pred_check
          %p138 = pneg %p84
        $region18: #{tpu_custom_call.1} parent=11 // pred_check_branch
          %140 = sbr.rel (%p138) target = $region20
        $region19: #{tpu_custom_call.1} parent=11 // pred_region
          _
        $region20: #{tpu_custom_call.1} parent=11 // pred_fallthru
          _
      $region12: #{tpu_custom_call.1} parent=5 // pred_fallthru
        _
      %p141 = scmp.lt.s32.totalorder %s16, 2
      // Predicated region
      $region21: #{tpu_custom_call.1} parent=5 // pred_check
        %p142 = pneg %p141
      $region22: #{tpu_custom_call.1} parent=5 // pred_check_branch
        %144 = sbr.rel (%p142) target = $region24
      $region23: #{tpu_custom_call.1} parent=5 // pred_region
        // Predicated region
        $region25: #{tpu_custom_call.1} parent=23 // pred_check
          %p145 = pneg %p36
        $region26: #{tpu_custom_call.1} parent=23 // pred_check_branch
          %147 = sbr.rel (%p145) target = $region28
        $region27: #{tpu_custom_call.1} parent=23 // pred_region
          %s148 = sand.u32 %s26, 1
          %s149 = scalar_lea.sflag [#allocation4], %s148
          %s150 = sand.u32 %s26, 1
          %s151 = smul.addr %s150, 256
          %s152 = scalar_lea.vmem [#allocation3], %s151
          %s154 = ssub.s32 4096, 4096
          %155 = vsyncadd %s149, %s154
          %s156 = smul.addr %s16, 32
          %s157 = smul.addr %s156, 128
          %s158 = scalar_lea.hbm %s0, %s157
          %s159 = sshll.u32 %s152, 4
          %s160 = int_to_ptr.vmem [resolvable:$true] %s159
          %165 = dma.hbm_to_vmem [thread:$0]  %s158, 4096, %s160, %s149, 128, 128, 8
        $region28: #{tpu_custom_call.1} parent=23 // pred_fallthru
          _
      $region24: #{tpu_custom_call.1} parent=5 // pred_fallthru
        _
      %p166 = scmp.le.s32.totalorder 1, %s16
      %p167 = scmp.lt.s32.totalorder %s16, 3
      %p168 = pnand %p166, %p167
      %p169 = pneg %p168
      // Predicated region
      $region29: #{tpu_custom_call.1} parent=5 // pred_check
        _
      $region30: #{tpu_custom_call.1} parent=5 // pred_check_branch
        %171 = sbr.rel (%p168) target = $region32
      $region31: #{tpu_custom_call.1} parent=5 // pred_region
        %s172 = ssub.s32 %s16, 1
        %s173 = sand.u32 %s29, 1
        %s174 = scalar_lea.sflag [#allocation4], %s173
        %s175 = sand.u32 %s29, 1
        %s176 = smul.addr %s175, 256
        %s177 = scalar_lea.vmem [#allocation3], %s176
        // Predicated region
        $region33: #{tpu_custom_call.1} parent=31 // pred_check
          %p178 = pneg %p42
        $region34: #{tpu_custom_call.1} parent=31 // pred_check_branch
          %180 = sbr.rel (%p178) target = $region36
        $region35: #{tpu_custom_call.1} parent=31 // pred_region
          %181 = dma.done %s174, 4096
        $region36: #{tpu_custom_call.1} parent=31 // pred_fallthru
          _
        // Predicated region
        $region37: #{tpu_custom_call.1} parent=31 // pred_check
          %p182 = pneg %p63
        $region38: #{tpu_custom_call.1} parent=31 // pred_check_branch
          %184 = sbr.rel (%p182) target = $region40
        $region39: #{tpu_custom_call.1} parent=31 // pred_region
          %185 = dma.done [#allocation7], 4608
        $region40: #{tpu_custom_call.1} parent=31 // pred_fallthru
          _
        %s186 = sand.u32 %s29, 1
        %s187 = scalar_lea.sflag [#allocation4], %s186
        %s188 = sand.u32 %s29, 1
        %s189 = smul.addr %s188, 256
        %s190 = scalar_lea.vmem [#allocation3], %s189
        %p191 = pneg %p42
        %p192 = pneg %p39
        %p193 = pneg %p63
        %p194 = pneg %p60
        %p195 = pneg %p84
        %p196 = pneg %p81
        %p197 = pneg %p110
        %p198 = pneg %p107
        %s199 = sand.u32 %s97, 1
        %s200 = scalar_lea.sflag [#allocation5], %s199
        %s201 = sand.u32 %s97, 1
        %s202 = smul.addr %s201, 256
        %s203 = scalar_lea.vmem [#allocation8], %s202
        %v204 = vld [vmem:[%s177] sm:$0xff]
        %v205 = vld [vmem:[%s177 + $0x8] sm:$0xff]
        %v206 = vld [vmem:[%s177 + $0x10] sm:$0xff]
        %v207 = vld [vmem:[%s177 + $0x18] sm:$0xff]
        %v208 = vld [vmem:[%s177 + $0x20] sm:$0xff]
        %v209 = vld [vmem:[%s177 + $0x28] sm:$0xff]
        %v210 = vld [vmem:[%s177 + $0x30] sm:$0xff]
        %v211 = vld [vmem:[%s177 + $0x38] sm:$0xff]
        %v212 = vld [vmem:[%s177 + $0x40] sm:$0xff]
        %v213 = vld [vmem:[%s177 + $0x48] sm:$0xff]
        %v214 = vld [vmem:[%s177 + $0x50] sm:$0xff]
        %v215 = vld [vmem:[%s177 + $0x58] sm:$0xff]
        %v216 = vld [vmem:[%s177 + $0x60] sm:$0xff]
        %v217 = vld [vmem:[%s177 + $0x68] sm:$0xff]
        %v218 = vld [vmem:[%s177 + $0x70] sm:$0xff]
        %v219 = vld [vmem:[%s177 + $0x78] sm:$0xff]
        %v220 = vld [vmem:[%s177 + $0x80] sm:$0xff]
        %v221 = vld [vmem:[%s177 + $0x88] sm:$0xff]
        %v222 = vld [vmem:[%s177 + $0x90] sm:$0xff]
        %v223 = vld [vmem:[%s177 + $0x98] sm:$0xff]
        %v224 = vld [vmem:[%s177 + $0xa0] sm:$0xff]
        %v225 = vld [vmem:[%s177 + $0xa8] sm:$0xff]
        %v226 = vld [vmem:[%s177 + $0xb0] sm:$0xff]
        %v227 = vld [vmem:[%s177 + $0xb8] sm:$0xff]
        %v228 = vld [vmem:[%s177 + $0xc0] sm:$0xff]
        %v229 = vld [vmem:[%s177 + $0xc8] sm:$0xff]
        %v230 = vld [vmem:[%s177 + $0xd0] sm:$0xff]
        %v231 = vld [vmem:[%s177 + $0xd8] sm:$0xff]
        %v232 = vld [vmem:[%s177 + $0xe0] sm:$0xff]
        %v233 = vld [vmem:[%s177 + $0xe8] sm:$0xff]
        %v234 = vld [vmem:[%s177 + $0xf0] sm:$0xff]
        %v235 = vld [vmem:[%s177 + $0xf8] sm:$0xff]
        %vm236 = vcmask 261120
        %237 = vst.msk [vmem:[#allocation2] sm:$0xff] %vm236, 0.0
        %238 = vst.msk [vmem:[#allocation2 + $0x8] sm:$0xff] %vm236, 0.0
        %vm239 = vcmask 254976
        %240 = vst.msk [vmem:[#allocation2 + $0x10] sm:$0x3] %vm239, 0.0
        %241 = vst.msk [vmem:[#allocation2 + $0x18] sm:$0xff] %vm236, 0.0
        %242 = vst.msk [vmem:[#allocation2 + $0x20] sm:$0xff] %vm236, 0.0
        %243 = vst.msk [vmem:[#allocation2 + $0x28] sm:$0x3] %vm239, 0.0
        %244 = vst.msk [vmem:[#allocation2 + $0x30] sm:$0xff] %vm236, 0.0
        %245 = vst.msk [vmem:[#allocation2 + $0x38] sm:$0xff] %vm236, 0.0
        %246 = vst.msk [vmem:[#allocation2 + $0x40] sm:$0x3] %vm239, 0.0
        %247 = vst.msk [vmem:[#allocation2 + $0x48] sm:$0xff] %vm236, 0.0
        %248 = vst.msk [vmem:[#allocation2 + $0x50] sm:$0xff] %vm236, 0.0
        %249 = vst.msk [vmem:[#allocation2 + $0x58] sm:$0x3] %vm239, 0.0
        %250 = vst.msk [vmem:[#allocation2 + $0x60] sm:$0xff] %vm236, 0.0
        %251 = vst.msk [vmem:[#allocation2 + $0x68] sm:$0xff] %vm236, 0.0
        %252 = vst.msk [vmem:[#allocation2 + $0x70] sm:$0x3] %vm239, 0.0
        %253 = vst.msk [vmem:[#allocation2 + $0x78] sm:$0xff] %vm236, 0.0
        %254 = vst.msk [vmem:[#allocation2 + $0x80] sm:$0xff] %vm236, 0.0
        %255 = vst.msk [vmem:[#allocation2 + $0x88] sm:$0x3] %vm239, 0.0
        %256 = vst.msk [vmem:[#allocation2 + $0x90] sm:$0xff] %vm236, 0.0
        %257 = vst.msk [vmem:[#allocation2 + $0x98] sm:$0xff] %vm236, 0.0
        %258 = vst.msk [vmem:[#allocation2 + $0xa0] sm:$0x3] %vm239, 0.0
        %259 = vst.msk [vmem:[#allocation2 + $0xa8] sm:$0xff] %vm236, 0.0
        %260 = vst.msk [vmem:[#allocation2 + $0xb0] sm:$0xff] %vm236, 0.0
        %261 = vst.msk [vmem:[#allocation2 + $0xb8] sm:$0x3] %vm239, 0.0
        %262 = vst.msk [vmem:[#allocation2 + $0xc0] sm:$0xff] %vm236, 0.0
        %263 = vst.msk [vmem:[#allocation2 + $0xc8] sm:$0xff] %vm236, 0.0
        %264 = vst.msk [vmem:[#allocation2 + $0xd0] sm:$0x3] %vm239, 0.0
        %265 = vst.msk [vmem:[#allocation2 + $0xd8] sm:$0xff] %vm236, 0.0
        %266 = vst.msk [vmem:[#allocation2 + $0xe0] sm:$0xff] %vm236, 0.0
        %267 = vst.msk [vmem:[#allocation2 + $0xe8] sm:$0x3] %vm239, 0.0
        %268 = vst.msk [vmem:[#allocation2 + $0xf0] sm:$0xff] %vm236, 0.0
        %269 = vst.msk [vmem:[#allocation2 + $0xf8] sm:$0xff] %vm236, 0.0
        %270 = vst.msk [vmem:[#allocation2 + $0x100] sm:$0x3] %vm239, 0.0
        %271 = vst.msk [vmem:[#allocation2 + $0x108] sm:$0xff] %vm236, 0.0
        %272 = vst.msk [vmem:[#allocation2 + $0x110] sm:$0xff] %vm236, 0.0
        %273 = vst.msk [vmem:[#allocation2 + $0x118] sm:$0x3] %vm239, 0.0
        %274 = vst.msk [vmem:[#allocation2 + $0x120] sm:$0xff] %vm236, 0.0
        %275 = vst.msk [vmem:[#allocation2 + $0x128] sm:$0xff] %vm236, 0.0
        %276 = vst.msk [vmem:[#allocation2 + $0x130] sm:$0x3] %vm239, 0.0
        %277 = vst.msk [vmem:[#allocation2 + $0x138] sm:$0xff] %vm236, 0.0
        %278 = vst.msk [vmem:[#allocation2 + $0x140] sm:$0xff] %vm236, 0.0
        %279 = vst.msk [vmem:[#allocation2 + $0x148] sm:$0x3] %vm239, 0.0
        %280 = vst.msk [vmem:[#allocation2 + $0x150] sm:$0xff] %vm236, 0.0
        %281 = vst.msk [vmem:[#allocation2 + $0x158] sm:$0xff] %vm236, 0.0
        %282 = vst.msk [vmem:[#allocation2 + $0x160] sm:$0x3] %vm239, 0.0
        %283 = vst.msk [vmem:[#allocation2 + $0x168] sm:$0xff] %vm236, 0.0
        %284 = vst.msk [vmem:[#allocation2 + $0x170] sm:$0xff] %vm236, 0.0
        %285 = vst.msk [vmem:[#allocation2 + $0x178] sm:$0x3] %vm239, 0.0
        %286 = vst.msk [vmem:[#allocation2 + $0x180] sm:$0xff] %vm236, 0.0
        %287 = vst.msk [vmem:[#allocation2 + $0x188] sm:$0xff] %vm236, 0.0
        %288 = vst.msk [vmem:[#allocation2 + $0x190] sm:$0x3] %vm239, 0.0
        %289 = vst.msk [vmem:[#allocation2 + $0x198] sm:$0xff] %vm236, 0.0
        %290 = vst.msk [vmem:[#allocation2 + $0x1a0] sm:$0xff] %vm236, 0.0
        %291 = vst.msk [vmem:[#allocation2 + $0x1a8] sm:$0x3] %vm239, 0.0
        %s292 = scalar_lea.vmem [#allocation2], 24
        %293 = vst.msk [vmem:[%s292 + $0x1] sm:$0xff] %vm236, %v204
        %294 = vst.msk [vmem:[%s292 + $0x9] sm:$0xff] %vm236, %v205
        %295 = vst.msk [vmem:[%s292 + $0x19] sm:$0xff] %vm236, %v206
        %296 = vst.msk [vmem:[%s292 + $0x21] sm:$0xff] %vm236, %v207
        %297 = vst.msk [vmem:[%s292 + $0x31] sm:$0xff] %vm236, %v208
        %298 = vst.msk [vmem:[%s292 + $0x39] sm:$0xff] %vm236, %v209
        %299 = vst.msk [vmem:[%s292 + $0x49] sm:$0xff] %vm236, %v210
        %300 = vst.msk [vmem:[%s292 + $0x51] sm:$0xff] %vm236, %v211
        %301 = vst.msk [vmem:[%s292 + $0x61] sm:$0xff] %vm236, %v212
        %302 = vst.msk [vmem:[%s292 + $0x69] sm:$0xff] %vm236, %v213
        %303 = vst.msk [vmem:[%s292 + $0x79] sm:$0xff] %vm236, %v214
        %304 = vst.msk [vmem:[%s292 + $0x81] sm:$0xff] %vm236, %v215
        %305 = vst.msk [vmem:[%s292 + $0x91] sm:$0xff] %vm236, %v216
        %306 = vst.msk [vmem:[%s292 + $0x99] sm:$0xff] %vm236, %v217
        %307 = vst.msk [vmem:[%s292 + $0xa9] sm:$0xff] %vm236, %v218
        %308 = vst.msk [vmem:[%s292 + $0xb1] sm:$0xff] %vm236, %v219
        %309 = vst.msk [vmem:[%s292 + $0xc1] sm:$0xff] %vm236, %v220
        %310 = vst.msk [vmem:[%s292 + $0xc9] sm:$0xff] %vm236, %v221
        %311 = vst.msk [vmem:[%s292 + $0xd9] sm:$0xff] %vm236, %v222
        %312 = vst.msk [vmem:[%s292 + $0xe1] sm:$0xff] %vm236, %v223
        %313 = vst.msk [vmem:[%s292 + $0xf1] sm:$0xff] %vm236, %v224
        %314 = vst.msk [vmem:[%s292 + $0xf9] sm:$0xff] %vm236, %v225
        %315 = vst.msk [vmem:[%s292 + $0x109] sm:$0xff] %vm236, %v226
        %316 = vst.msk [vmem:[%s292 + $0x111] sm:$0xff] %vm236, %v227
        %317 = vst.msk [vmem:[%s292 + $0x121] sm:$0xff] %vm236, %v228
        %318 = vst.msk [vmem:[%s292 + $0x129] sm:$0xff] %vm236, %v229
        %319 = vst.msk [vmem:[%s292 + $0x139] sm:$0xff] %vm236, %v230
        %320 = vst.msk [vmem:[%s292 + $0x141] sm:$0xff] %vm236, %v231
        %321 = vst.msk [vmem:[%s292 + $0x151] sm:$0xff] %vm236, %v232
        %322 = vst.msk [vmem:[%s292 + $0x159] sm:$0xff] %vm236, %v233
        %323 = vst.msk [vmem:[%s292 + $0x169] sm:$0xff] %vm236, %v234
        %324 = vst.msk [vmem:[%s292 + $0x171] sm:$0xff] %vm236, %v235
        %v325 = vld [vmem:[#allocation2] sm:$0xff]
        %v326 = vld [vmem:[#allocation2 + $0x8] sm:$0xff]
        %v327 = vld [vmem:[#allocation2 + $0x18] sm:$0xff]
        %v328 = vld [vmem:[#allocation2 + $0x20] sm:$0xff]
        %v329 = vld [vmem:[#allocation2 + $0x30] sm:$0xff]
        %v330 = vld [vmem:[#allocation2 + $0x38] sm:$0xff]
        %v331 = vld [vmem:[#allocation2 + $0x48] sm:$0xff]
        %v332 = vld [vmem:[#allocation2 + $0x50] sm:$0xff]
        %v333 = vld [vmem:[#allocation2 + $0x60] sm:$0xff]
        %v334 = vld [vmem:[#allocation2 + $0x68] sm:$0xff]
        %v335 = vld [vmem:[#allocation2 + $0x78] sm:$0xff]
        %v336 = vld [vmem:[#allocation2 + $0x80] sm:$0xff]
        %v337 = vld [vmem:[#allocation2 + $0x90] sm:$0xff]
        %v338 = vld [vmem:[#allocation2 + $0x98] sm:$0xff]
        %v339 = vld [vmem:[#allocation2 + $0xa8] sm:$0xff]
        %v340 = vld [vmem:[#allocation2 + $0xb0] sm:$0xff]
        %v341 = vld [vmem:[#allocation2 + $0xc0] sm:$0xff]
        %v342 = vld [vmem:[#allocation2 + $0xc8] sm:$0xff]
        %v343 = vld [vmem:[#allocation2 + $0xd8] sm:$0xff]
        %v344 = vld [vmem:[#allocation2 + $0xe0] sm:$0xff]
        %v345 = vld [vmem:[#allocation2 + $0xf0] sm:$0xff]
        %v346 = vld [vmem:[#allocation2 + $0xf8] sm:$0xff]
        %v347 = vld [vmem:[#allocation2 + $0x108] sm:$0xff]
        %v348 = vld [vmem:[#allocation2 + $0x110] sm:$0xff]
        %v349 = vld [vmem:[#allocation2 + $0x120] sm:$0xff]
        %v350 = vld [vmem:[#allocation2 + $0x128] sm:$0xff]
        %v351 = vld [vmem:[#allocation2 + $0x138] sm:$0xff]
        %v352 = vld [vmem:[#allocation2 + $0x140] sm:$0xff]
        %v353 = vld [vmem:[#allocation2 + $0x150] sm:$0xff]
        %v354 = vld [vmem:[#allocation2 + $0x158] sm:$0xff]
        %v355 = vld [vmem:[#allocation2 + $0x168] sm:$0xff]
        %v356 = vld [vmem:[#allocation2 + $0x170] sm:$0xff]
        %v357 = vld [vmem:[#allocation6] sm:$0xff]
        %v358 = vld [vmem:[#allocation6 + $0x8] sm:$0xff]
        %v359 = vld [vmem:[#allocation6 + $0x10] sm:$0xff]
        %v360 = vld [vmem:[#allocation6 + $0x18] sm:$0xff]
        %v361 = vld [vmem:[#allocation2 + $0x1] sm:$0xff]
        %v362 = vld [vmem:[#allocation2 + $0x9] sm:$0xff]
        %v363 = vld [vmem:[#allocation2 + $0x19] sm:$0xff]
        %v364 = vld [vmem:[#allocation2 + $0x21] sm:$0xff]
        %v365 = vld [vmem:[#allocation2 + $0x31] sm:$0xff]
        %v366 = vld [vmem:[#allocation2 + $0x39] sm:$0xff]
        %v367 = vld [vmem:[#allocation2 + $0x49] sm:$0xff]
        %v368 = vld [vmem:[#allocation2 + $0x51] sm:$0xff]
        %v369 = vld [vmem:[#allocation2 + $0x61] sm:$0xff]
        %v370 = vld [vmem:[#allocation2 + $0x69] sm:$0xff]
        %v371 = vld [vmem:[#allocation2 + $0x79] sm:$0xff]
        %v372 = vld [vmem:[#allocation2 + $0x81] sm:$0xff]
        %v373 = vld [vmem:[#allocation2 + $0x91] sm:$0xff]
        %v374 = vld [vmem:[#allocation2 + $0x99] sm:$0xff]
        %v375 = vld [vmem:[#allocation2 + $0xa9] sm:$0xff]
        %v376 = vld [vmem:[#allocation2 + $0xb1] sm:$0xff]
        %v377 = vld [vmem:[#allocation2 + $0xc1] sm:$0xff]
        %v378 = vld [vmem:[#allocation2 + $0xc9] sm:$0xff]
        %v379 = vld [vmem:[#allocation2 + $0xd9] sm:$0xff]
        %v380 = vld [vmem:[#allocation2 + $0xe1] sm:$0xff]
        %v381 = vld [vmem:[#allocation2 + $0xf1] sm:$0xff]
        %v382 = vld [vmem:[#allocation2 + $0xf9] sm:$0xff]
        %v383 = vld [vmem:[#allocation2 + $0x109] sm:$0xff]
        %v384 = vld [vmem:[#allocation2 + $0x111] sm:$0xff]
        %v385 = vld [vmem:[#allocation2 + $0x121] sm:$0xff]
        %v386 = vld [vmem:[#allocation2 + $0x129] sm:$0xff]
        %v387 = vld [vmem:[#allocation2 + $0x139] sm:$0xff]
        %v388 = vld [vmem:[#allocation2 + $0x141] sm:$0xff]
        %v389 = vld [vmem:[#allocation2 + $0x151] sm:$0xff]
        %v390 = vld [vmem:[#allocation2 + $0x159] sm:$0xff]
        %v391 = vld [vmem:[#allocation2 + $0x169] sm:$0xff]
        %v392 = vld [vmem:[#allocation2 + $0x171] sm:$0xff]
        %s393 = scalar_lea.vmem [#allocation6], 32
        %v394 = vld [vmem:[%s393] sm:$0xff]
        %v395 = vld [vmem:[%s393 + $0x8] sm:$0xff]
        %v396 = vld [vmem:[%s393 + $0x10] sm:$0xff]
        %v397 = vld [vmem:[%s393 + $0x18] sm:$0xff]
        %v399 = vsel %vm236, %v361, 0
        %v402 = vsel %vm236, %v362, 0
        %v405 = vsel %vm236, %v363, 0
        %v408 = vsel %vm236, %v364, 0
        %v411 = vsel %vm236, %v365, 0
        %v414 = vsel %vm236, %v366, 0
        %v417 = vsel %vm236, %v367, 0
        %v420 = vsel %vm236, %v368, 0
        %v423 = vsel %vm236, %v369, 0
        %v426 = vsel %vm236, %v370, 0
        %v429 = vsel %vm236, %v371, 0
        %v432 = vsel %vm236, %v372, 0
        %v435 = vsel %vm236, %v373, 0
        %v438 = vsel %vm236, %v374, 0
        %v441 = vsel %vm236, %v375, 0
        %v444 = vsel %vm236, %v376, 0
        %v447 = vsel %vm236, %v377, 0
        %v450 = vsel %vm236, %v378, 0
        %v453 = vsel %vm236, %v379, 0
        %v456 = vsel %vm236, %v380, 0
        %v459 = vsel %vm236, %v381, 0
        %v462 = vsel %vm236, %v382, 0
        %v465 = vsel %vm236, %v383, 0
        %v468 = vsel %vm236, %v384, 0
        %v471 = vsel %vm236, %v385, 0
        %v474 = vsel %vm236, %v386, 0
        %v477 = vsel %vm236, %v387, 0
        %v480 = vsel %vm236, %v388, 0
        %v483 = vsel %vm236, %v389, 0
        %v486 = vsel %vm236, %v390, 0
        %v489 = vsel %vm236, %v391, 0
        %v492 = vsel %vm236, %v392, 0
        %494 = vmatprep.subr.mxu0 0.0
        %495 = vmatpush1.msra.mxu0 %v394
        %496 = vmatprep.subr.mxu0 0.0
        %497 = vmatpush1.msra.mxu0 %v395
        %498 = vmatprep.subr.mxu0 0.0
        %499 = vmatpush1.msra.mxu0 %v396
        %500 = vmatprep.subr.mxu0 0.0
        %501 = vmatpush1.msra.mxu0 %v397
        %502 = vmatprep.subr.mxu0 0.0
        %503 = vmatpush1.msra.mxu0 0.0
        %504 = vmatprep.subr.mxu0 0.0
        %505 = vmatpush1.msra.mxu0 0.0
        %506 = vmatprep.subr.mxu0 0.0
        %507 = vmatpush1.msra.mxu0 0.0
        %508 = vmatprep.subr.mxu0 0.0
        %509 = vmatpush1.msra.mxu0 0.0
        %510 = vmatprep.subr.mxu0 0.0
        %511 = vmatpush1.msra.mxu0 0.0
        %512 = vmatprep.subr.mxu0 0.0
        %513 = vmatpush1.msra.mxu0 0.0
        %514 = vmatprep.subr.mxu0 0.0
        %515 = vmatpush1.msra.mxu0 0.0
        %516 = vmatprep.subr.mxu0 0.0
        %517 = vmatpush1.msra.mxu0 0.0
        %518 = vmatprep.subr.mxu0 0.0
        %519 = vmatpush1.msra.mxu0 0.0
        %520 = vmatprep.subr.mxu0 0.0
        %521 = vmatpush1.msra.mxu0 0.0
        %522 = vmatprep.subr.mxu0 0.0
        %523 = vmatpush1.msra.mxu0 0.0
        %524 = vmatprep.subr.mxu0 0.0
        %525 = vmatpush1.msra.mxu0 0.0
        %526 = vmatprep.subr.mxu0 0.0
        %527 = vmatpush1.msra.mxu0 0.0
        %528 = vmatprep.subr.mxu0 0.0
        %529 = vmatpush1.msra.mxu0 0.0
        %530 = vmatprep.subr.mxu0 0.0
        %531 = vmatpush1.msra.mxu0 0.0
        %532 = vmatprep.subr.mxu0 0.0
        %533 = vmatpush1.msra.mxu0 0.0
        %534 = vmatprep.subr.mxu0 0.0
        %535 = vmatpush1.msra.mxu0 0.0
        %536 = vmatprep.subr.mxu0 0.0
        %537 = vmatpush1.msra.mxu0 0.0
        %538 = vmatprep.subr.mxu0 0.0
        %539 = vmatpush1.msra.mxu0 0.0
        %540 = vmatprep.subr.mxu0 0.0
        %541 = vmatpush1.msra.mxu0 0.0
        %542 = vmatprep.subr.mxu0 0.0
        %543 = vmatpush1.msra.mxu0 0.0
        %544 = vmatprep.subr.mxu0 0.0
        %545 = vmatpush1.msra.mxu0 0.0
        %546 = vmatprep.subr.mxu0 0.0
        %547 = vmatpush1.msra.mxu0 0.0
        %548 = vmatprep.subr.mxu0 0.0
        %549 = vmatpush1.msra.mxu0 0.0
        %550 = vmatprep.subr.mxu0 0.0
        %551 = vmatpush1.msra.mxu0 0.0
        %552 = vmatprep.subr.mxu0 0.0
        %553 = vmatpush1.msra.mxu0 0.0
        %554 = vmatprep.subr.mxu0 0.0
        %555 = vmatpush1.msra.mxu0 0.0
        %556 = vmatprep.subr.mxu0 0.0
        %557 = vmatpush1.msra.mxu0 0.0
        %558 = vmatprep.mubr.f32.mxu0 0.0
        %559 = vmatmul.mubr.f32.gmra.mrb[0].mxu0 %v399
        %v560 = vpop.f32.mrb[0].mxu0
        %v561 = vadd.f32 0.0, %v560
        %v562 = vpop.f32.mrb[0].mxu0
        %563 = vmatprep.mubr.f32.mxu0 0.0
        %564 = vmatmul.mubr.f32.gmra.mrb[0].mxu0 %v402
        %v565 = vpop.f32.mrb[0].mxu0
        %v566 = vadd.f32 0.0, %v565
        %v567 = vpop.f32.mrb[0].mxu0
        %568 = vmatprep.mubr.f32.mxu0 0.0
        %569 = vmatmul.mubr.f32.gmra.mrb[0].mxu0 %v405
        %v570 = vpop.f32.mrb[0].mxu0
        %v571 = vadd.f32 0.0, %v570
        %v572 = vpop.f32.mrb[0].mxu0
        %573 = vmatprep.mubr.f32.mxu0 0.0
        %574 = vmatmul.mubr.f32.gmra.mrb[0].mxu0 %v408
        %v575 = vpop.f32.mrb[0].mxu0
        %v576 = vadd.f32 0.0, %v575
        %v577 = vpop.f32.mrb[0].mxu0
        %578 = vmatprep.mubr.f32.mxu0 0.0
        %579 = vmatmul.mubr.f32.gmra.mrb[0].mxu0 %v411
        %v580 = vpop.f32.mrb[0].mxu0
        %v581 = vadd.f32 0.0, %v580
        %v582 = vpop.f32.mrb[0].mxu0
        %583 = vmatprep.mubr.f32.mxu0 0.0
        %584 = vmatmul.mubr.f32.gmra.mrb[0].mxu0 %v414
        %v585 = vpop.f32.mrb[0].mxu0
        %v586 = vadd.f32 0.0, %v585
        %v587 = vpop.f32.mrb[0].mxu0
        %588 = vmatprep.mubr.f32.mxu0 0.0
        %589 = vmatmul.mubr.f32.gmra.mrb[0].mxu0 %v417
        %v590 = vpop.f32.mrb[0].mxu0
        %v591 = vadd.f32 0.0, %v590
        %v592 = vpop.f32.mrb[0].mxu0
        %593 = vmatprep.mubr.f32.mxu0 0.0
        %594 = vmatmul.mubr.f32.gmra.mrb[0].mxu0 %v420
        %v595 = vpop.f32.mrb[0].mxu0
        %v596 = vadd.f32 0.0, %v595
        %v597 = vpop.f32.mrb[0].mxu0
        %598 = vmatprep.mubr.f32.mxu0 0.0
        %599 = vmatmul.mubr.f32.gmra.mrb[0].mxu0 %v423
        %v600 = vpop.f32.mrb[0].mxu0
        %v601 = vadd.f32 0.0, %v600
        %v602 = vpop.f32.mrb[0].mxu0
        %603 = vmatprep.mubr.f32.mxu0 0.0
        %604 = vmatmul.mubr.f32.gmra.mrb[0].mxu0 %v426
        %v605 = vpop.f32.mrb[0].mxu0
        %v606 = vadd.f32 0.0, %v605
        %v607 = vpop.f32.mrb[0].mxu0
        %608 = vmatprep.mubr.f32.mxu0 0.0
        %609 = vmatmul.mubr.f32.gmra.mrb[0].mxu0 %v429
        %v610 = vpop.f32.mrb[0].mxu0
        %v611 = vadd.f32 0.0, %v610
        %v612 = vpop.f32.mrb[0].mxu0
        %613 = vmatprep.mubr.f32.mxu0 0.0
        %614 = vmatmul.mubr.f32.gmra.mrb[0].mxu0 %v432
        %v615 = vpop.f32.mrb[0].mxu0
        %v616 = vadd.f32 0.0, %v615
        %v617 = vpop.f32.mrb[0].mxu0
        %618 = vmatprep.mubr.f32.mxu0 0.0
        %619 = vmatmul.mubr.f32.gmra.mrb[0].mxu0 %v435
        %v620 = vpop.f32.mrb[0].mxu0
        %v621 = vadd.f32 0.0, %v620
        %v622 = vpop.f32.mrb[0].mxu0
        %623 = vmatprep.mubr.f32.mxu0 0.0
        %624 = vmatmul.mubr.f32.gmra.mrb[0].mxu0 %v438
        %v625 = vpop.f32.mrb[0].mxu0
        %v626 = vadd.f32 0.0, %v625
        %v627 = vpop.f32.mrb[0].mxu0
        %628 = vmatprep.mubr.f32.mxu0 0.0
        %629 = vmatmul.mubr.f32.gmra.mrb[0].mxu0 %v441
        %v630 = vpop.f32.mrb[0].mxu0
        %v631 = vadd.f32 0.0, %v630
        %v632 = vpop.f32.mrb[0].mxu0
        %633 = vmatprep.mubr.f32.mxu0 0.0
        %634 = vmatmul.mubr.f32.gmra.mrb[0].mxu0 %v444
        %v635 = vpop.f32.mrb[0].mxu0
        %v636 = vadd.f32 0.0, %v635
        %v637 = vpop.f32.mrb[0].mxu0
        %638 = vmatprep.mubr.f32.mxu0 0.0
        %639 = vmatmul.mubr.f32.gmra.mrb[0].mxu0 %v447
        %v640 = vpop.f32.mrb[0].mxu0
        %v641 = vadd.f32 0.0, %v640
        %v642 = vpop.f32.mrb[0].mxu0
        %643 = vmatprep.mubr.f32.mxu0 0.0
        %644 = vmatmul.mubr.f32.gmra.mrb[0].mxu0 %v450
        %v645 = vpop.f32.mrb[0].mxu0
        %v646 = vadd.f32 0.0, %v645
        %v647 = vpop.f32.mrb[0].mxu0
        %648 = vmatprep.mubr.f32.mxu0 0.0
        %649 = vmatmul.mubr.f32.gmra.mrb[0].mxu0 %v453
        %v650 = vpop.f32.mrb[0].mxu0
        %v651 = vadd.f32 0.0, %v650
        %v652 = vpop.f32.mrb[0].mxu0
        %653 = vmatprep.mubr.f32.mxu0 0.0
        %654 = vmatmul.mubr.f32.gmra.mrb[0].mxu0 %v456
        %v655 = vpop.f32.mrb[0].mxu0
        %v656 = vadd.f32 0.0, %v655
        %v657 = vpop.f32.mrb[0].mxu0
        %658 = vmatprep.mubr.f32.mxu0 0.0
        %659 = vmatmul.mubr.f32.gmra.mrb[0].mxu0 %v459
        %v660 = vpop.f32.mrb[0].mxu0
        %v661 = vadd.f32 0.0, %v660
        %v662 = vpop.f32.mrb[0].mxu0
        %663 = vmatprep.mubr.f32.mxu0 0.0
        %664 = vmatmul.mubr.f32.gmra.mrb[0].mxu0 %v462
        %v665 = vpop.f32.mrb[0].mxu0
        %v666 = vadd.f32 0.0, %v665
        %v667 = vpop.f32.mrb[0].mxu0
        %668 = vmatprep.mubr.f32.mxu0 0.0
        %669 = vmatmul.mubr.f32.gmra.mrb[0].mxu0 %v465
        %v670 = vpop.f32.mrb[0].mxu0
        %v671 = vadd.f32 0.0, %v670
        %v672 = vpop.f32.mrb[0].mxu0
        %673 = vmatprep.mubr.f32.mxu0 0.0
        %674 = vmatmul.mubr.f32.gmra.mrb[0].mxu0 %v468
        %v675 = vpop.f32.mrb[0].mxu0
        %v676 = vadd.f32 0.0, %v675
        %v677 = vpop.f32.mrb[0].mxu0
        %678 = vmatprep.mubr.f32.mxu0 0.0
        %679 = vmatmul.mubr.f32.gmra.mrb[0].mxu0 %v471
        %v680 = vpop.f32.mrb[0].mxu0
        %v681 = vadd.f32 0.0, %v680
        %v682 = vpop.f32.mrb[0].mxu0
        %683 = vmatprep.mubr.f32.mxu0 0.0
        %684 = vmatmul.mubr.f32.gmra.mrb[0].mxu0 %v474
        %v685 = vpop.f32.mrb[0].mxu0
        %v686 = vadd.f32 0.0, %v685
        %v687 = vpop.f32.mrb[0].mxu0
        %688 = vmatprep.mubr.f32.mxu0 0.0
        %689 = vmatmul.mubr.f32.gmra.mrb[0].mxu0 %v477
        %v690 = vpop.f32.mrb[0].mxu0
        %v691 = vadd.f32 0.0, %v690
        %v692 = vpop.f32.mrb[0].mxu0
        %693 = vmatprep.mubr.f32.mxu0 0.0
        %694 = vmatmul.mubr.f32.gmra.mrb[0].mxu0 %v480
        %v695 = vpop.f32.mrb[0].mxu0
        %v696 = vadd.f32 0.0, %v695
        %v697 = vpop.f32.mrb[0].mxu0
        %698 = vmatprep.mubr.f32.mxu0 0.0
        %699 = vmatmul.mubr.f32.gmra.mrb[0].mxu0 %v483
        %v700 = vpop.f32.mrb[0].mxu0
        %v701 = vadd.f32 0.0, %v700
        %v702 = vpop.f32.mrb[0].mxu0
        %703 = vmatprep.mubr.f32.mxu0 0.0
        %704 = vmatmul.mubr.f32.gmra.mrb[0].mxu0 %v486
        %v705 = vpop.f32.mrb[0].mxu0
        %v706 = vadd.f32 0.0, %v705
        %v707 = vpop.f32.mrb[0].mxu0
        %708 = vmatprep.mubr.f32.mxu0 0.0
        %709 = vmatmul.mubr.f32.gmra.mrb[0].mxu0 %v489
        %v710 = vpop.f32.mrb[0].mxu0
        %v711 = vadd.f32 0.0, %v710
        %v712 = vpop.f32.mrb[0].mxu0
        %713 = vmatprep.mubr.f32.mxu0 0.0
        %714 = vmatmul.mubr.f32.gmra.mrb[0].mxu0 %v492
        %v715 = vpop.f32.mrb[0].mxu0
        %v716 = vadd.f32 0.0, %v715
        %v717 = vpop.f32.mrb[0].mxu0
        %718 = vdwg.mxu0
        %v720 = vsel %vm236, %v325, 0
        %v723 = vsel %vm236, %v326, 0
        %v726 = vsel %vm236, %v327, 0
        %v729 = vsel %vm236, %v328, 0
        %v732 = vsel %vm236, %v329, 0
        %v735 = vsel %vm236, %v330, 0
        %v738 = vsel %vm236, %v331, 0
        %v741 = vsel %vm236, %v332, 0
        %v744 = vsel %vm236, %v333, 0
        %v747 = vsel %vm236, %v334, 0
        %v750 = vsel %vm236, %v335, 0
        %v753 = vsel %vm236, %v336, 0
        %v756 = vsel %vm236, %v337, 0
        %v759 = vsel %vm236, %v338, 0
        %v762 = vsel %vm236, %v339, 0
        %v765 = vsel %vm236, %v340, 0
        %v768 = vsel %vm236, %v341, 0
        %v771 = vsel %vm236, %v342, 0
        %v774 = vsel %vm236, %v343, 0
        %v777 = vsel %vm236, %v344, 0
        %v780 = vsel %vm236, %v345, 0
        %v783 = vsel %vm236, %v346, 0
        %v786 = vsel %vm236, %v347, 0
        %v789 = vsel %vm236, %v348, 0
        %v792 = vsel %vm236, %v349, 0
        %v795 = vsel %vm236, %v350, 0
        %v798 = vsel %vm236, %v351, 0
        %v801 = vsel %vm236, %v352, 0
        %v804 = vsel %vm236, %v353, 0
        %v807 = vsel %vm236, %v354, 0
        %v810 = vsel %vm236, %v355, 0
        %v813 = vsel %vm236, %v356, 0
        %815 = vmatprep.subr.mxu0 0.0
        %816 = vmatpush1.msra.mxu0 %v357
        %817 = vmatprep.subr.mxu0 0.0
        %818 = vmatpush1.msra.mxu0 %v358
        %819 = vmatprep.subr.mxu0 0.0
        %820 = vmatpush1.msra.mxu0 %v359
        %821 = vmatprep.subr.mxu0 0.0
        %822 = vmatpush1.msra.mxu0 %v360
        %823 = vmatprep.subr.mxu0 0.0
        %824 = vmatpush1.msra.mxu0 0.0
        %825 = vmatprep.subr.mxu0 0.0
        %826 = vmatpush1.msra.mxu0 0.0
        %827 = vmatprep.subr.mxu0 0.0
        %828 = vmatpush1.msra.mxu0 0.0
        %829 = vmatprep.subr.mxu0 0.0
        %830 = vmatpush1.msra.mxu0 0.0
        %831 = vmatprep.subr.mxu0 0.0
        %832 = vmatpush1.msra.mxu0 0.0
        %833 = vmatprep.subr.mxu0 0.0
        %834 = vmatpush1.msra.mxu0 0.0
        %835 = vmatprep.subr.mxu0 0.0
        %836 = vmatpush1.msra.mxu0 0.0
        %837 = vmatprep.subr.mxu0 0.0
        %838 = vmatpush1.msra.mxu0 0.0
        %839 = vmatprep.subr.mxu0 0.0
        %840 = vmatpush1.msra.mxu0 0.0
        %841 = vmatprep.subr.mxu0 0.0
        %842 = vmatpush1.msra.mxu0 0.0
        %843 = vmatprep.subr.mxu0 0.0
        %844 = vmatpush1.msra.mxu0 0.0
        %845 = vmatprep.subr.mxu0 0.0
        %846 = vmatpush1.msra.mxu0 0.0
        %847 = vmatprep.subr.mxu0 0.0
        %848 = vmatpush1.msra.mxu0 0.0
        %849 = vmatprep.subr.mxu0 0.0
        %850 = vmatpush1.msra.mxu0 0.0
        %851 = vmatprep.subr.mxu0 0.0
        %852 = vmatpush1.msra.mxu0 0.0
        %853 = vmatprep.subr.mxu0 0.0
        %854 = vmatpush1.msra.mxu0 0.0
        %855 = vmatprep.subr.mxu0 0.0
        %856 = vmatpush1.msra.mxu0 0.0
        %857 = vmatprep.subr.mxu0 0.0
        %858 = vmatpush1.msra.mxu0 0.0
        %859 = vmatprep.subr.mxu0 0.0
        %860 = vmatpush1.msra.mxu0 0.0
        %861 = vmatprep.subr.mxu0 0.0
        %862 = vmatpush1.msra.mxu0 0.0
        %863 = vmatprep.subr.mxu0 0.0
        %864 = vmatpush1.msra.mxu0 0.0
        %865 = vmatprep.subr.mxu0 0.0
        %866 = vmatpush1.msra.mxu0 0.0
        %867 = vmatprep.subr.mxu0 0.0
        %868 = vmatpush1.msra.mxu0 0.0
        %869 = vmatprep.subr.mxu0 0.0
        %870 = vmatpush1.msra.mxu0 0.0
        %871 = vmatprep.subr.mxu0 0.0
        %872 = vmatpush1.msra.mxu0 0.0
        %873 = vmatprep.subr.mxu0 0.0
        %874 = vmatpush1.msra.mxu0 0.0
        %875 = vmatprep.subr.mxu0 0.0
        %876 = vmatpush1.msra.mxu0 0.0
        %877 = vmatprep.subr.mxu0 0.0
        %878 = vmatpush1.msra.mxu0 0.0
        %879 = vmatprep.mubr.f32.mxu0 0.0
        %880 = vmatmul.mubr.f32.gmra.mrb[0].mxu0 %v720
        %v881 = vpop.f32.mrb[0].mxu0
        %v882 = vadd.f32 %v561, %v881
        %v883 = vpop.f32.mrb[0].mxu0
        %884 = vmatprep.mubr.f32.mxu0 0.0
        %885 = vmatmul.mubr.f32.gmra.mrb[0].mxu0 %v723
        %v886 = vpop.f32.mrb[0].mxu0
        %v887 = vadd.f32 %v566, %v886
        %v888 = vpop.f32.mrb[0].mxu0
        %889 = vmatprep.mubr.f32.mxu0 0.0
        %890 = vmatmul.mubr.f32.gmra.mrb[0].mxu0 %v726
        %v891 = vpop.f32.mrb[0].mxu0
        %v892 = vadd.f32 %v571, %v891
        %v893 = vpop.f32.mrb[0].mxu0
        %894 = vmatprep.mubr.f32.mxu0 0.0
        %895 = vmatmul.mubr.f32.gmra.mrb[0].mxu0 %v729
        %v896 = vpop.f32.mrb[0].mxu0
        %v897 = vadd.f32 %v576, %v896
        %v898 = vpop.f32.mrb[0].mxu0
        %899 = vmatprep.mubr.f32.mxu0 0.0
        %900 = vmatmul.mubr.f32.gmra.mrb[0].mxu0 %v732
        %v901 = vpop.f32.mrb[0].mxu0
        %v902 = vadd.f32 %v581, %v901
        %v903 = vpop.f32.mrb[0].mxu0
        %904 = vmatprep.mubr.f32.mxu0 0.0
        %905 = vmatmul.mubr.f32.gmra.mrb[0].mxu0 %v735
        %v906 = vpop.f32.mrb[0].mxu0
        %v907 = vadd.f32 %v586, %v906
        %v908 = vpop.f32.mrb[0].mxu0
        %909 = vmatprep.mubr.f32.mxu0 0.0
        %910 = vmatmul.mubr.f32.gmra.mrb[0].mxu0 %v738
        %v911 = vpop.f32.mrb[0].mxu0
        %v912 = vadd.f32 %v591, %v911
        %v913 = vpop.f32.mrb[0].mxu0
        %914 = vmatprep.mubr.f32.mxu0 0.0
        %915 = vmatmul.mubr.f32.gmra.mrb[0].mxu0 %v741
        %v916 = vpop.f32.mrb[0].mxu0
        %v917 = vadd.f32 %v596, %v916
        %v918 = vpop.f32.mrb[0].mxu0
        %919 = vmatprep.mubr.f32.mxu0 0.0
        %920 = vmatmul.mubr.f32.gmra.mrb[0].mxu0 %v744
        %v921 = vpop.f32.mrb[0].mxu0
        %v922 = vadd.f32 %v601, %v921
        %v923 = vpop.f32.mrb[0].mxu0
        %924 = vmatprep.mubr.f32.mxu0 0.0
        %925 = vmatmul.mubr.f32.gmra.mrb[0].mxu0 %v747
        %v926 = vpop.f32.mrb[0].mxu0
        %v927 = vadd.f32 %v606, %v926
        %v928 = vpop.f32.mrb[0].mxu0
        %929 = vmatprep.mubr.f32.mxu0 0.0
        %930 = vmatmul.mubr.f32.gmra.mrb[0].mxu0 %v750
        %v931 = vpop.f32.mrb[0].mxu0
        %v932 = vadd.f32 %v611, %v931
        %v933 = vpop.f32.mrb[0].mxu0
        %934 = vmatprep.mubr.f32.mxu0 0.0
        %935 = vmatmul.mubr.f32.gmra.mrb[0].mxu0 %v753
        %v936 = vpop.f32.mrb[0].mxu0
        %v937 = vadd.f32 %v616, %v936
        %v938 = vpop.f32.mrb[0].mxu0
        %939 = vmatprep.mubr.f32.mxu0 0.0
        %940 = vmatmul.mubr.f32.gmra.mrb[0].mxu0 %v756
        %v941 = vpop.f32.mrb[0].mxu0
        %v942 = vadd.f32 %v621, %v941
        %v943 = vpop.f32.mrb[0].mxu0
        %944 = vmatprep.mubr.f32.mxu0 0.0
        %945 = vmatmul.mubr.f32.gmra.mrb[0].mxu0 %v759
        %v946 = vpop.f32.mrb[0].mxu0
        %v947 = vadd.f32 %v626, %v946
        %v948 = vpop.f32.mrb[0].mxu0
        %949 = vmatprep.mubr.f32.mxu0 0.0
        %950 = vmatmul.mubr.f32.gmra.mrb[0].mxu0 %v762
        %v951 = vpop.f32.mrb[0].mxu0
        %v952 = vadd.f32 %v631, %v951
        %v953 = vpop.f32.mrb[0].mxu0
        %954 = vmatprep.mubr.f32.mxu0 0.0
        %955 = vmatmul.mubr.f32.gmra.mrb[0].mxu0 %v765
        %v956 = vpop.f32.mrb[0].mxu0
        %v957 = vadd.f32 %v636, %v956
        %v958 = vpop.f32.mrb[0].mxu0
        %959 = vmatprep.mubr.f32.mxu0 0.0
        %960 = vmatmul.mubr.f32.gmra.mrb[0].mxu0 %v768
        %v961 = vpop.f32.mrb[0].mxu0
        %v962 = vadd.f32 %v641, %v961
        %v963 = vpop.f32.mrb[0].mxu0
        %964 = vmatprep.mubr.f32.mxu0 0.0
        %965 = vmatmul.mubr.f32.gmra.mrb[0].mxu0 %v771
        %v966 = vpop.f32.mrb[0].mxu0
        %v967 = vadd.f32 %v646, %v966
        %v968 = vpop.f32.mrb[0].mxu0
        %969 = vmatprep.mubr.f32.mxu0 0.0
        %970 = vmatmul.mubr.f32.gmra.mrb[0].mxu0 %v774
        %v971 = vpop.f32.mrb[0].mxu0
        %v972 = vadd.f32 %v651, %v971
        %v973 = vpop.f32.mrb[0].mxu0
        %974 = vmatprep.mubr.f32.mxu0 0.0
        %975 = vmatmul.mubr.f32.gmra.mrb[0].mxu0 %v777
        %v976 = vpop.f32.mrb[0].mxu0
        %v977 = vadd.f32 %v656, %v976
        %v978 = vpop.f32.mrb[0].mxu0
        %979 = vmatprep.mubr.f32.mxu0 0.0
        %980 = vmatmul.mubr.f32.gmra.mrb[0].mxu0 %v780
        %v981 = vpop.f32.mrb[0].mxu0
        %v982 = vadd.f32 %v661, %v981
        %v983 = vpop.f32.mrb[0].mxu0
        %984 = vmatprep.mubr.f32.mxu0 0.0
        %985 = vmatmul.mubr.f32.gmra.mrb[0].mxu0 %v783
        %v986 = vpop.f32.mrb[0].mxu0
        %v987 = vadd.f32 %v666, %v986
        %v988 = vpop.f32.mrb[0].mxu0
        %989 = vmatprep.mubr.f32.mxu0 0.0
        %990 = vmatmul.mubr.f32.gmra.mrb[0].mxu0 %v786
        %v991 = vpop.f32.mrb[0].mxu0
        %v992 = vadd.f32 %v671, %v991
        %v993 = vpop.f32.mrb[0].mxu0
        %994 = vmatprep.mubr.f32.mxu0 0.0
        %995 = vmatmul.mubr.f32.gmra.mrb[0].mxu0 %v789
        %v996 = vpop.f32.mrb[0].mxu0
        %v997 = vadd.f32 %v676, %v996
        %v998 = vpop.f32.mrb[0].mxu0
        %999 = vmatprep.mubr.f32.mxu0 0.0
        %1000 = vmatmul.mubr.f32.gmra.mrb[0].mxu0 %v792
        %v1001 = vpop.f32.mrb[0].mxu0
        %v1002 = vadd.f32 %v681, %v1001
        %v1003 = vpop.f32.mrb[0].mxu0
        %1004 = vmatprep.mubr.f32.mxu0 0.0
        %1005 = vmatmul.mubr.f32.gmra.mrb[0].mxu0 %v795
        %v1006 = vpop.f32.mrb[0].mxu0
        %v1007 = vadd.f32 %v686, %v1006
        %v1008 = vpop.f32.mrb[0].mxu0
        %1009 = vmatprep.mubr.f32.mxu0 0.0
        %1010 = vmatmul.mubr.f32.gmra.mrb[0].mxu0 %v798
        %v1011 = vpop.f32.mrb[0].mxu0
        %v1012 = vadd.f32 %v691, %v1011
        %v1013 = vpop.f32.mrb[0].mxu0
        %1014 = vmatprep.mubr.f32.mxu0 0.0
        %1015 = vmatmul.mubr.f32.gmra.mrb[0].mxu0 %v801
        %v1016 = vpop.f32.mrb[0].mxu0
        %v1017 = vadd.f32 %v696, %v1016
        %v1018 = vpop.f32.mrb[0].mxu0
        %1019 = vmatprep.mubr.f32.mxu0 0.0
        %1020 = vmatmul.mubr.f32.gmra.mrb[0].mxu0 %v804
        %v1021 = vpop.f32.mrb[0].mxu0
        %v1022 = vadd.f32 %v701, %v1021
        %v1023 = vpop.f32.mrb[0].mxu0
        %1024 = vmatprep.mubr.f32.mxu0 0.0
        %1025 = vmatmul.mubr.f32.gmra.mrb[0].mxu0 %v807
        %v1026 = vpop.f32.mrb[0].mxu0
        %v1027 = vadd.f32 %v706, %v1026
        %v1028 = vpop.f32.mrb[0].mxu0
        %1029 = vmatprep.mubr.f32.mxu0 0.0
        %1030 = vmatmul.mubr.f32.gmra.mrb[0].mxu0 %v810
        %v1031 = vpop.f32.mrb[0].mxu0
        %v1032 = vadd.f32 %v711, %v1031
        %v1033 = vpop.f32.mrb[0].mxu0
        %1034 = vmatprep.mubr.f32.mxu0 0.0
        %1035 = vmatmul.mubr.f32.gmra.mrb[0].mxu0 %v813
        %v1036 = vpop.f32.mrb[0].mxu0
        %v1037 = vadd.f32 %v716, %v1036
        %v1038 = vpop.f32.mrb[0].mxu0
        %1039 = vdwg.mxu0
        %v1040 = vld [vmem:[#allocation2 + $0x2] sm:$0xff]
        %v1041 = vld [vmem:[#allocation2 + $0xa] sm:$0xff]
        %v1042 = vld [vmem:[#allocation2 + $0x1a] sm:$0xff]
        %v1043 = vld [vmem:[#allocation2 + $0x22] sm:$0xff]
        %v1044 = vld [vmem:[#allocation2 + $0x32] sm:$0xff]
        %v1045 = vld [vmem:[#allocation2 + $0x3a] sm:$0xff]
        %v1046 = vld [vmem:[#allocation2 + $0x4a] sm:$0xff]
        %v1047 = vld [vmem:[#allocation2 + $0x52] sm:$0xff]
        %v1048 = vld [vmem:[#allocation2 + $0x62] sm:$0xff]
        %v1049 = vld [vmem:[#allocation2 + $0x6a] sm:$0xff]
        %v1050 = vld [vmem:[#allocation2 + $0x7a] sm:$0xff]
        %v1051 = vld [vmem:[#allocation2 + $0x82] sm:$0xff]
        %v1052 = vld [vmem:[#allocation2 + $0x92] sm:$0xff]
        %v1053 = vld [vmem:[#allocation2 + $0x9a] sm:$0xff]
        %v1054 = vld [vmem:[#allocation2 + $0xaa] sm:$0xff]
        %v1055 = vld [vmem:[#allocation2 + $0xb2] sm:$0xff]
        %v1056 = vld [vmem:[#allocation2 + $0xc2] sm:$0xff]
        %v1057 = vld [vmem:[#allocation2 + $0xca] sm:$0xff]
        %v1058 = vld [vmem:[#allocation2 + $0xda] sm:$0xff]
        %v1059 = vld [vmem:[#allocation2 + $0xe2] sm:$0xff]
        %v1060 = vld [vmem:[#allocation2 + $0xf2] sm:$0xff]
        %v1061 = vld [vmem:[#allocation2 + $0xfa] sm:$0xff]
        %v1062 = vld [vmem:[#allocation2 + $0x10a] sm:$0xff]
        %v1063 = vld [vmem:[#allocation2 + $0x112] sm:$0xff]
        %v1064 = vld [vmem:[#allocation2 + $0x122] sm:$0xff]
        %v1065 = vld [vmem:[#allocation2 + $0x12a] sm:$0xff]
        %v1066 = vld [vmem:[#allocation2 + $0x13a] sm:$0xff]
        %v1067 = vld [vmem:[#allocation2 + $0x142] sm:$0xff]
        %v1068 = vld [vmem:[#allocation2 + $0x152] sm:$0xff]
        %v1069 = vld [vmem:[#allocation2 + $0x15a] sm:$0xff]
        %v1070 = vld [vmem:[#allocation2 + $0x16a] sm:$0xff]
        %v1071 = vld [vmem:[#allocation2 + $0x172] sm:$0xff]
        %s1072 = scalar_lea.vmem [#allocation6], 64
        %v1073 = vld [vmem:[%s1072] sm:$0xff]
        %v1074 = vld [vmem:[%s1072 + $0x8] sm:$0xff]
        %v1075 = vld [vmem:[%s1072 + $0x10] sm:$0xff]
        %v1076 = vld [vmem:[%s1072 + $0x18] sm:$0xff]
        %v1078 = vsel %vm236, %v1040, 0
        %v1081 = vsel %vm236, %v1041, 0
        %v1084 = vsel %vm236, %v1042, 0
        %v1087 = vsel %vm236, %v1043, 0
        %v1090 = vsel %vm236, %v1044, 0
        %v1093 = vsel %vm236, %v1045, 0
        %v1096 = vsel %vm236, %v1046, 0
        %v1099 = vsel %vm236, %v1047, 0
        %v1102 = vsel %vm236, %v1048, 0
        %v1105 = vsel %vm236, %v1049, 0
        %v1108 = vsel %vm236, %v1050, 0
        %v1111 = vsel %vm236, %v1051, 0
        %v1114 = vsel %vm236, %v1052, 0
        %v1117 = vsel %vm236, %v1053, 0
        %v1120 = vsel %vm236, %v1054, 0
        %v1123 = vsel %vm236, %v1055, 0
        %v1126 = vsel %vm236, %v1056, 0
        %v1129 = vsel %vm236, %v1057, 0
        %v1132 = vsel %vm236, %v1058, 0
        %v1135 = vsel %vm236, %v1059, 0
        %v1138 = vsel %vm236, %v1060, 0
        %v1141 = vsel %vm236, %v1061, 0
        %v1144 = vsel %vm236, %v1062, 0
        %v1147 = vsel %vm236, %v1063, 0
        %v1150 = vsel %vm236, %v1064, 0
        %v1153 = vsel %vm236, %v1065, 0
        %v1156 = vsel %vm236, %v1066, 0
        %v1159 = vsel %vm236, %v1067, 0
        %v1162 = vsel %vm236, %v1068, 0
        %v1165 = vsel %vm236, %v1069, 0
        %v1168 = vsel %vm236, %v1070, 0
        %v1171 = vsel %vm236, %v1071, 0
        %1173 = vmatprep.subr.mxu0 0.0
        %1174 = vmatpush1.msra.mxu0 %v1073
        %1175 = vmatprep.subr.mxu0 0.0
        %1176 = vmatpush1.msra.mxu0 %v1074
        %1177 = vmatprep.subr.mxu0 0.0
        %1178 = vmatpush1.msra.mxu0 %v1075
        %1179 = vmatprep.subr.mxu0 0.0
        %1180 = vmatpush1.msra.mxu0 %v1076
        %1181 = vmatprep.subr.mxu0 0.0
        %1182 = vmatpush1.msra.mxu0 0.0
        %1183 = vmatprep.subr.mxu0 0.0
        %1184 = vmatpush1.msra.mxu0 0.0
        %1185 = vmatprep.subr.mxu0 0.0
        %1186 = vmatpush1.msra.mxu0 0.0
        %1187 = vmatprep.subr.mxu0 0.0
        %1188 = vmatpush1.msra.mxu0 0.0
        %1189 = vmatprep.subr.mxu0 0.0
        %1190 = vmatpush1.msra.mxu0 0.0
        %1191 = vmatprep.subr.mxu0 0.0
        %1192 = vmatpush1.msra.mxu0 0.0
        %1193 = vmatprep.subr.mxu0 0.0
        %1194 = vmatpush1.msra.mxu0 0.0
        %1195 = vmatprep.subr.mxu0 0.0
        %1196 = vmatpush1.msra.mxu0 0.0
        %1197 = vmatprep.subr.mxu0 0.0
        %1198 = vmatpush1.msra.mxu0 0.0
        %1199 = vmatprep.subr.mxu0 0.0
        %1200 = vmatpush1.msra.mxu0 0.0
        %1201 = vmatprep.subr.mxu0 0.0
        %1202 = vmatpush1.msra.mxu0 0.0
        %1203 = vmatprep.subr.mxu0 0.0
        %1204 = vmatpush1.msra.mxu0 0.0
        %1205 = vmatprep.subr.mxu0 0.0
        %1206 = vmatpush1.msra.mxu0 0.0
        %1207 = vmatprep.subr.mxu0 0.0
        %1208 = vmatpush1.msra.mxu0 0.0
        %1209 = vmatprep.subr.mxu0 0.0
        %1210 = vmatpush1.msra.mxu0 0.0
        %1211 = vmatprep.subr.mxu0 0.0
        %1212 = vmatpush1.msra.mxu0 0.0
        %1213 = vmatprep.subr.mxu0 0.0
        %1214 = vmatpush1.msra.mxu0 0.0
        %1215 = vmatprep.subr.mxu0 0.0
        %1216 = vmatpush1.msra.mxu0 0.0
        %1217 = vmatprep.subr.mxu0 0.0
        %1218 = vmatpush1.msra.mxu0 0.0
        %1219 = vmatprep.subr.mxu0 0.0
        %1220 = vmatpush1.msra.mxu0 0.0
        %1221 = vmatprep.subr.mxu0 0.0
        %1222 = vmatpush1.msra.mxu0 0.0
        %1223 = vmatprep.subr.mxu0 0.0
        %1224 = vmatpush1.msra.mxu0 0.0
        %1225 = vmatprep.subr.mxu0 0.0
        %1226 = vmatpush1.msra.mxu0 0.0
        %1227 = vmatprep.subr.mxu0 0.0
        %1228 = vmatpush1.msra.mxu0 0.0
        %1229 = vmatprep.subr.mxu0 0.0
        %1230 = vmatpush1.msra.mxu0 0.0
        %1231 = vmatprep.subr.mxu0 0.0
        %1232 = vmatpush1.msra.mxu0 0.0
        %1233 = vmatprep.subr.mxu0 0.0
        %1234 = vmatpush1.msra.mxu0 0.0
        %1235 = vmatprep.subr.mxu0 0.0
        %1236 = vmatpush1.msra.mxu0 0.0
        %1237 = vmatprep.mubr.f32.mxu0 0.0
        %1238 = vmatmul.mubr.f32.gmra.mrb[0].mxu0 %v1078
        %v1239 = vpop.f32.mrb[0].mxu0
        %v1240 = vadd.f32 0.0, %v1239
        %v1241 = vpop.f32.mrb[0].mxu0
        %1242 = vmatprep.mubr.f32.mxu0 0.0
        %1243 = vmatmul.mubr.f32.gmra.mrb[0].mxu0 %v1081
        %v1244 = vpop.f32.mrb[0].mxu0
        %v1245 = vadd.f32 0.0, %v1244
        %v1246 = vpop.f32.mrb[0].mxu0
        %1247 = vmatprep.mubr.f32.mxu0 0.0
        %1248 = vmatmul.mubr.f32.gmra.mrb[0].mxu0 %v1084
        %v1249 = vpop.f32.mrb[0].mxu0
        %v1250 = vadd.f32 0.0, %v1249
        %v1251 = vpop.f32.mrb[0].mxu0
        %1252 = vmatprep.mubr.f32.mxu0 0.0
        %1253 = vmatmul.mubr.f32.gmra.mrb[0].mxu0 %v1087
        %v1254 = vpop.f32.mrb[0].mxu0
        %v1255 = vadd.f32 0.0, %v1254
        %v1256 = vpop.f32.mrb[0].mxu0
        %1257 = vmatprep.mubr.f32.mxu0 0.0
        %1258 = vmatmul.mubr.f32.gmra.mrb[0].mxu0 %v1090
        %v1259 = vpop.f32.mrb[0].mxu0
        %v1260 = vadd.f32 0.0, %v1259
        %v1261 = vpop.f32.mrb[0].mxu0
        %1262 = vmatprep.mubr.f32.mxu0 0.0
        %1263 = vmatmul.mubr.f32.gmra.mrb[0].mxu0 %v1093
        %v1264 = vpop.f32.mrb[0].mxu0
        %v1265 = vadd.f32 0.0, %v1264
        %v1266 = vpop.f32.mrb[0].mxu0
        %1267 = vmatprep.mubr.f32.mxu0 0.0
        %1268 = vmatmul.mubr.f32.gmra.mrb[0].mxu0 %v1096
        %v1269 = vpop.f32.mrb[0].mxu0
        %v1270 = vadd.f32 0.0, %v1269
        %v1271 = vpop.f32.mrb[0].mxu0
        %1272 = vmatprep.mubr.f32.mxu0 0.0
        %1273 = vmatmul.mubr.f32.gmra.mrb[0].mxu0 %v1099
        %v1274 = vpop.f32.mrb[0].mxu0
        %v1275 = vadd.f32 0.0, %v1274
        %v1276 = vpop.f32.mrb[0].mxu0
        %1277 = vmatprep.mubr.f32.mxu0 0.0
        %1278 = vmatmul.mubr.f32.gmra.mrb[0].mxu0 %v1102
        %v1279 = vpop.f32.mrb[0].mxu0
        %v1280 = vadd.f32 0.0, %v1279
        %v1281 = vpop.f32.mrb[0].mxu0
        %1282 = vmatprep.mubr.f32.mxu0 0.0
        %1283 = vmatmul.mubr.f32.gmra.mrb[0].mxu0 %v1105
        %v1284 = vpop.f32.mrb[0].mxu0
        %v1285 = vadd.f32 0.0, %v1284
        %v1286 = vpop.f32.mrb[0].mxu0
        %1287 = vmatprep.mubr.f32.mxu0 0.0
        %1288 = vmatmul.mubr.f32.gmra.mrb[0].mxu0 %v1108
        %v1289 = vpop.f32.mrb[0].mxu0
        %v1290 = vadd.f32 0.0, %v1289
        %v1291 = vpop.f32.mrb[0].mxu0
        %1292 = vmatprep.mubr.f32.mxu0 0.0
        %1293 = vmatmul.mubr.f32.gmra.mrb[0].mxu0 %v1111
        %v1294 = vpop.f32.mrb[0].mxu0
        %v1295 = vadd.f32 0.0, %v1294
        %v1296 = vpop.f32.mrb[0].mxu0
        %1297 = vmatprep.mubr.f32.mxu0 0.0
        %1298 = vmatmul.mubr.f32.gmra.mrb[0].mxu0 %v1114
        %v1299 = vpop.f32.mrb[0].mxu0
        %v1300 = vadd.f32 0.0, %v1299
        %v1301 = vpop.f32.mrb[0].mxu0
        %1302 = vmatprep.mubr.f32.mxu0 0.0
        %1303 = vmatmul.mubr.f32.gmra.mrb[0].mxu0 %v1117
        %v1304 = vpop.f32.mrb[0].mxu0
        %v1305 = vadd.f32 0.0, %v1304
        %v1306 = vpop.f32.mrb[0].mxu0
        %1307 = vmatprep.mubr.f32.mxu0 0.0
        %1308 = vmatmul.mubr.f32.gmra.mrb[0].mxu0 %v1120
        %v1309 = vpop.f32.mrb[0].mxu0
        %v1310 = vadd.f32 0.0, %v1309
        %v1311 = vpop.f32.mrb[0].mxu0
        %1312 = vmatprep.mubr.f32.mxu0 0.0
        %1313 = vmatmul.mubr.f32.gmra.mrb[0].mxu0 %v1123
        %v1314 = vpop.f32.mrb[0].mxu0
        %v1315 = vadd.f32 0.0, %v1314
        %v1316 = vpop.f32.mrb[0].mxu0
        %1317 = vmatprep.mubr.f32.mxu0 0.0
        %1318 = vmatmul.mubr.f32.gmra.mrb[0].mxu0 %v1126
        %v1319 = vpop.f32.mrb[0].mxu0
        %v1320 = vadd.f32 0.0, %v1319
        %v1321 = vpop.f32.mrb[0].mxu0
        %1322 = vmatprep.mubr.f32.mxu0 0.0
        %1323 = vmatmul.mubr.f32.gmra.mrb[0].mxu0 %v1129
        %v1324 = vpop.f32.mrb[0].mxu0
        %v1325 = vadd.f32 0.0, %v1324
        %v1326 = vpop.f32.mrb[0].mxu0
        %1327 = vmatprep.mubr.f32.mxu0 0.0
        %1328 = vmatmul.mubr.f32.gmra.mrb[0].mxu0 %v1132
        %v1329 = vpop.f32.mrb[0].mxu0
        %v1330 = vadd.f32 0.0, %v1329
        %v1331 = vpop.f32.mrb[0].mxu0
        %1332 = vmatprep.mubr.f32.mxu0 0.0
        %1333 = vmatmul.mubr.f32.gmra.mrb[0].mxu0 %v1135
        %v1334 = vpop.f32.mrb[0].mxu0
        %v1335 = vadd.f32 0.0, %v1334
        %v1336 = vpop.f32.mrb[0].mxu0
        %1337 = vmatprep.mubr.f32.mxu0 0.0
        %1338 = vmatmul.mubr.f32.gmra.mrb[0].mxu0 %v1138
        %v1339 = vpop.f32.mrb[0].mxu0
        %v1340 = vadd.f32 0.0, %v1339
        %v1341 = vpop.f32.mrb[0].mxu0
        %1342 = vmatprep.mubr.f32.mxu0 0.0
        %1343 = vmatmul.mubr.f32.gmra.mrb[0].mxu0 %v1141
        %v1344 = vpop.f32.mrb[0].mxu0
        %v1345 = vadd.f32 0.0, %v1344
        %v1346 = vpop.f32.mrb[0].mxu0
        %1347 = vmatprep.mubr.f32.mxu0 0.0
        %1348 = vmatmul.mubr.f32.gmra.mrb[0].mxu0 %v1144
        %v1349 = vpop.f32.mrb[0].mxu0
        %v1350 = vadd.f32 0.0, %v1349
        %v1351 = vpop.f32.mrb[0].mxu0
        %1352 = vmatprep.mubr.f32.mxu0 0.0
        %1353 = vmatmul.mubr.f32.gmra.mrb[0].mxu0 %v1147
        %v1354 = vpop.f32.mrb[0].mxu0
        %v1355 = vadd.f32 0.0, %v1354
        %v1356 = vpop.f32.mrb[0].mxu0
        %1357 = vmatprep.mubr.f32.mxu0 0.0
        %1358 = vmatmul.mubr.f32.gmra.mrb[0].mxu0 %v1150
        %v1359 = vpop.f32.mrb[0].mxu0
        %v1360 = vadd.f32 0.0, %v1359
        %v1361 = vpop.f32.mrb[0].mxu0
        %1362 = vmatprep.mubr.f32.mxu0 0.0
        %1363 = vmatmul.mubr.f32.gmra.mrb[0].mxu0 %v1153
        %v1364 = vpop.f32.mrb[0].mxu0
        %v1365 = vadd.f32 0.0, %v1364
        %v1366 = vpop.f32.mrb[0].mxu0
        %1367 = vmatprep.mubr.f32.mxu0 0.0
        %1368 = vmatmul.mubr.f32.gmra.mrb[0].mxu0 %v1156
        %v1369 = vpop.f32.mrb[0].mxu0
        %v1370 = vadd.f32 0.0, %v1369
        %v1371 = vpop.f32.mrb[0].mxu0
        %1372 = vmatprep.mubr.f32.mxu0 0.0
        %1373 = vmatmul.mubr.f32.gmra.mrb[0].mxu0 %v1159
        %v1374 = vpop.f32.mrb[0].mxu0
        %v1375 = vadd.f32 0.0, %v1374
        %v1376 = vpop.f32.mrb[0].mxu0
        %1377 = vmatprep.mubr.f32.mxu0 0.0
        %1378 = vmatmul.mubr.f32.gmra.mrb[0].mxu0 %v1162
        %v1379 = vpop.f32.mrb[0].mxu0
        %v1380 = vadd.f32 0.0, %v1379
        %v1381 = vpop.f32.mrb[0].mxu0
        %1382 = vmatprep.mubr.f32.mxu0 0.0
        %1383 = vmatmul.mubr.f32.gmra.mrb[0].mxu0 %v1165
        %v1384 = vpop.f32.mrb[0].mxu0
        %v1385 = vadd.f32 0.0, %v1384
        %v1386 = vpop.f32.mrb[0].mxu0
        %1387 = vmatprep.mubr.f32.mxu0 0.0
        %1388 = vmatmul.mubr.f32.gmra.mrb[0].mxu0 %v1168
        %v1389 = vpop.f32.mrb[0].mxu0
        %v1390 = vadd.f32 0.0, %v1389
        %v1391 = vpop.f32.mrb[0].mxu0
        %1392 = vmatprep.mubr.f32.mxu0 0.0
        %1393 = vmatmul.mubr.f32.gmra.mrb[0].mxu0 %v1171
        %v1394 = vpop.f32.mrb[0].mxu0
        %v1395 = vadd.f32 0.0, %v1394
        %v1396 = vpop.f32.mrb[0].mxu0
        %1397 = vdwg.mxu0
        %v1398 = vadd.f32 %v882, %v1240
        %v1399 = vadd.f32 %v887, %v1245
        %v1400 = vadd.f32 %v892, %v1250
        %v1401 = vadd.f32 %v897, %v1255
        %v1402 = vadd.f32 %v902, %v1260
        %v1403 = vadd.f32 %v907, %v1265
        %v1404 = vadd.f32 %v912, %v1270
        %v1405 = vadd.f32 %v917, %v1275
        %v1406 = vadd.f32 %v922, %v1280
        %v1407 = vadd.f32 %v927, %v1285
        %v1408 = vadd.f32 %v932, %v1290
        %v1409 = vadd.f32 %v937, %v1295
        %v1410 = vadd.f32 %v942, %v1300
        %v1411 = vadd.f32 %v947, %v1305
        %v1412 = vadd.f32 %v952, %v1310
        %v1413 = vadd.f32 %v957, %v1315
        %v1414 = vadd.f32 %v962, %v1320
        %v1415 = vadd.f32 %v967, %v1325
        %v1416 = vadd.f32 %v972, %v1330
        %v1417 = vadd.f32 %v977, %v1335
        %v1418 = vadd.f32 %v982, %v1340
        %v1419 = vadd.f32 %v987, %v1345
        %v1420 = vadd.f32 %v992, %v1350
        %v1421 = vadd.f32 %v997, %v1355
        %v1422 = vadd.f32 %v1002, %v1360
        %v1423 = vadd.f32 %v1007, %v1365
        %v1424 = vadd.f32 %v1012, %v1370
        %v1425 = vadd.f32 %v1017, %v1375
        %v1426 = vadd.f32 %v1022, %v1380
        %v1427 = vadd.f32 %v1027, %v1385
        %v1428 = vadd.f32 %v1032, %v1390
        %v1429 = vadd.f32 %v1037, %v1395
        %v1430 = vld [vmem:[%s292] sm:$0xff]
        %v1431 = vld [vmem:[%s292 + $0x8] sm:$0xff]
        %v1432 = vld [vmem:[%s292 + $0x18] sm:$0xff]
        %v1433 = vld [vmem:[%s292 + $0x20] sm:$0xff]
        %v1434 = vld [vmem:[%s292 + $0x30] sm:$0xff]
        %v1435 = vld [vmem:[%s292 + $0x38] sm:$0xff]
        %v1436 = vld [vmem:[%s292 + $0x48] sm:$0xff]
        %v1437 = vld [vmem:[%s292 + $0x50] sm:$0xff]
        %v1438 = vld [vmem:[%s292 + $0x60] sm:$0xff]
        %v1439 = vld [vmem:[%s292 + $0x68] sm:$0xff]
        %v1440 = vld [vmem:[%s292 + $0x78] sm:$0xff]
        %v1441 = vld [vmem:[%s292 + $0x80] sm:$0xff]
        %v1442 = vld [vmem:[%s292 + $0x90] sm:$0xff]
        %v1443 = vld [vmem:[%s292 + $0x98] sm:$0xff]
        %v1444 = vld [vmem:[%s292 + $0xa8] sm:$0xff]
        %v1445 = vld [vmem:[%s292 + $0xb0] sm:$0xff]
        %v1446 = vld [vmem:[%s292 + $0xc0] sm:$0xff]
        %v1447 = vld [vmem:[%s292 + $0xc8] sm:$0xff]
        %v1448 = vld [vmem:[%s292 + $0xd8] sm:$0xff]
        %v1449 = vld [vmem:[%s292 + $0xe0] sm:$0xff]
        %v1450 = vld [vmem:[%s292 + $0xf0] sm:$0xff]
        %v1451 = vld [vmem:[%s292 + $0xf8] sm:$0xff]
        %v1452 = vld [vmem:[%s292 + $0x108] sm:$0xff]
        %v1453 = vld [vmem:[%s292 + $0x110] sm:$0xff]
        %v1454 = vld [vmem:[%s292 + $0x120] sm:$0xff]
        %v1455 = vld [vmem:[%s292 + $0x128] sm:$0xff]
        %v1456 = vld [vmem:[%s292 + $0x138] sm:$0xff]
        %v1457 = vld [vmem:[%s292 + $0x140] sm:$0xff]
        %v1458 = vld [vmem:[%s292 + $0x150] sm:$0xff]
        %v1459 = vld [vmem:[%s292 + $0x158] sm:$0xff]
        %v1460 = vld [vmem:[%s292 + $0x168] sm:$0xff]
        %v1461 = vld [vmem:[%s292 + $0x170] sm:$0xff]
        %s1462 = scalar_lea.vmem [#allocation6], 96
        %v1463 = vld [vmem:[%s1462] sm:$0xff]
        %v1464 = vld [vmem:[%s1462 + $0x8] sm:$0xff]
        %v1465 = vld [vmem:[%s1462 + $0x10] sm:$0xff]
        %v1466 = vld [vmem:[%s1462 + $0x18] sm:$0xff]
        %v1468 = vsel %vm236, %v1430, 0
        %v1471 = vsel %vm236, %v1431, 0
        %v1474 = vsel %vm236, %v1432, 0
        %v1477 = vsel %vm236, %v1433, 0
        %v1480 = vsel %vm236, %v1434, 0
        %v1483 = vsel %vm236, %v1435, 0
        %v1486 = vsel %vm236, %v1436, 0
        %v1489 = vsel %vm236, %v1437, 0
        %v1492 = vsel %vm236, %v1438, 0
        %v1495 = vsel %vm236, %v1439, 0
        %v1498 = vsel %vm236, %v1440, 0
        %v1501 = vsel %vm236, %v1441, 0
        %v1504 = vsel %vm236, %v1442, 0
        %v1507 = vsel %vm236, %v1443, 0
        %v1510 = vsel %vm236, %v1444, 0
        %v1513 = vsel %vm236, %v1445, 0
        %v1516 = vsel %vm236, %v1446, 0
        %v1519 = vsel %vm236, %v1447, 0
        %v1522 = vsel %vm236, %v1448, 0
        %v1525 = vsel %vm236, %v1449, 0
        %v1528 = vsel %vm236, %v1450, 0
        %v1531 = vsel %vm236, %v1451, 0
        %v1534 = vsel %vm236, %v1452, 0
        %v1537 = vsel %vm236, %v1453, 0
        %v1540 = vsel %vm236, %v1454, 0
        %v1543 = vsel %vm236, %v1455, 0
        %v1546 = vsel %vm236, %v1456, 0
        %v1549 = vsel %vm236, %v1457, 0
        %v1552 = vsel %vm236, %v1458, 0
        %v1555 = vsel %vm236, %v1459, 0
        %v1558 = vsel %vm236, %v1460, 0
        %v1561 = vsel %vm236, %v1461, 0
        %1563 = vmatprep.subr.mxu0 0.0
        %1564 = vmatpush1.msra.mxu0 %v1463
        %1565 = vmatprep.subr.mxu0 0.0
        %1566 = vmatpush1.msra.mxu0 %v1464
        %1567 = vmatprep.subr.mxu0 0.0
        %1568 = vmatpush1.msra.mxu0 %v1465
        %1569 = vmatprep.subr.mxu0 0.0
        %1570 = vmatpush1.msra.mxu0 %v1466
        %1571 = vmatprep.subr.mxu0 0.0
        %1572 = vmatpush1.msra.mxu0 0.0
        %1573 = vmatprep.subr.mxu0 0.0
        %1574 = vmatpush1.msra.mxu0 0.0
        %1575 = vmatprep.subr.mxu0 0.0
        %1576 = vmatpush1.msra.mxu0 0.0
        %1577 = vmatprep.subr.mxu0 0.0
        %1578 = vmatpush1.msra.mxu0 0.0
        %1579 = vmatprep.subr.mxu0 0.0
        %1580 = vmatpush1.msra.mxu0 0.0
        %1581 = vmatprep.subr.mxu0 0.0
        %1582 = vmatpush1.msra.mxu0 0.0
        %1583 = vmatprep.subr.mxu0 0.0
        %1584 = vmatpush1.msra.mxu0 0.0
        %1585 = vmatprep.subr.mxu0 0.0
        %1586 = vmatpush1.msra.mxu0 0.0
        %1587 = vmatprep.subr.mxu0 0.0
        %1588 = vmatpush1.msra.mxu0 0.0
        %1589 = vmatprep.subr.mxu0 0.0
        %1590 = vmatpush1.msra.mxu0 0.0
        %1591 = vmatprep.subr.mxu0 0.0
        %1592 = vmatpush1.msra.mxu0 0.0
        %1593 = vmatprep.subr.mxu0 0.0
        %1594 = vmatpush1.msra.mxu0 0.0
        %1595 = vmatprep.subr.mxu0 0.0
        %1596 = vmatpush1.msra.mxu0 0.0
        %1597 = vmatprep.subr.mxu0 0.0
        %1598 = vmatpush1.msra.mxu0 0.0
        %1599 = vmatprep.subr.mxu0 0.0
        %1600 = vmatpush1.msra.mxu0 0.0
        %1601 = vmatprep.subr.mxu0 0.0
        %1602 = vmatpush1.msra.mxu0 0.0
        %1603 = vmatprep.subr.mxu0 0.0
        %1604 = vmatpush1.msra.mxu0 0.0
        %1605 = vmatprep.subr.mxu0 0.0
        %1606 = vmatpush1.msra.mxu0 0.0
        %1607 = vmatprep.subr.mxu0 0.0
        %1608 = vmatpush1.msra.mxu0 0.0
        %1609 = vmatprep.subr.mxu0 0.0
        %1610 = vmatpush1.msra.mxu0 0.0
        %1611 = vmatprep.subr.mxu0 0.0
        %1612 = vmatpush1.msra.mxu0 0.0
        %1613 = vmatprep.subr.mxu0 0.0
        %1614 = vmatpush1.msra.mxu0 0.0
        %1615 = vmatprep.subr.mxu0 0.0
        %1616 = vmatpush1.msra.mxu0 0.0
        %1617 = vmatprep.subr.mxu0 0.0
        %1618 = vmatpush1.msra.mxu0 0.0
        %1619 = vmatprep.subr.mxu0 0.0
        %1620 = vmatpush1.msra.mxu0 0.0
        %1621 = vmatprep.subr.mxu0 0.0
        %1622 = vmatpush1.msra.mxu0 0.0
        %1623 = vmatprep.subr.mxu0 0.0
        %1624 = vmatpush1.msra.mxu0 0.0
        %1625 = vmatprep.subr.mxu0 0.0
        %1626 = vmatpush1.msra.mxu0 0.0
        %1627 = vmatprep.mubr.f32.mxu0 0.0
        %1628 = vmatmul.mubr.f32.gmra.mrb[0].mxu0 %v1468
        %v1629 = vpop.f32.mrb[0].mxu0
        %v1630 = vadd.f32 0.0, %v1629
        %v1631 = vpop.f32.mrb[0].mxu0
        %1632 = vmatprep.mubr.f32.mxu0 0.0
        %1633 = vmatmul.mubr.f32.gmra.mrb[0].mxu0 %v1471
        %v1634 = vpop.f32.mrb[0].mxu0
        %v1635 = vadd.f32 0.0, %v1634
        %v1636 = vpop.f32.mrb[0].mxu0
        %1637 = vmatprep.mubr.f32.mxu0 0.0
        %1638 = vmatmul.mubr.f32.gmra.mrb[0].mxu0 %v1474
        %v1639 = vpop.f32.mrb[0].mxu0
        %v1640 = vadd.f32 0.0, %v1639
        %v1641 = vpop.f32.mrb[0].mxu0
        %1642 = vmatprep.mubr.f32.mxu0 0.0
        %1643 = vmatmul.mubr.f32.gmra.mrb[0].mxu0 %v1477
        %v1644 = vpop.f32.mrb[0].mxu0
        %v1645 = vadd.f32 0.0, %v1644
        %v1646 = vpop.f32.mrb[0].mxu0
        %1647 = vmatprep.mubr.f32.mxu0 0.0
        %1648 = vmatmul.mubr.f32.gmra.mrb[0].mxu0 %v1480
        %v1649 = vpop.f32.mrb[0].mxu0
        %v1650 = vadd.f32 0.0, %v1649
        %v1651 = vpop.f32.mrb[0].mxu0
        %1652 = vmatprep.mubr.f32.mxu0 0.0
        %1653 = vmatmul.mubr.f32.gmra.mrb[0].mxu0 %v1483
        %v1654 = vpop.f32.mrb[0].mxu0
        %v1655 = vadd.f32 0.0, %v1654
        %v1656 = vpop.f32.mrb[0].mxu0
        %1657 = vmatprep.mubr.f32.mxu0 0.0
        %1658 = vmatmul.mubr.f32.gmra.mrb[0].mxu0 %v1486
        %v1659 = vpop.f32.mrb[0].mxu0
        %v1660 = vadd.f32 0.0, %v1659
        %v1661 = vpop.f32.mrb[0].mxu0
        %1662 = vmatprep.mubr.f32.mxu0 0.0
        %1663 = vmatmul.mubr.f32.gmra.mrb[0].mxu0 %v1489
        %v1664 = vpop.f32.mrb[0].mxu0
        %v1665 = vadd.f32 0.0, %v1664
        %v1666 = vpop.f32.mrb[0].mxu0
        %1667 = vmatprep.mubr.f32.mxu0 0.0
        %1668 = vmatmul.mubr.f32.gmra.mrb[0].mxu0 %v1492
        %v1669 = vpop.f32.mrb[0].mxu0
        %v1670 = vadd.f32 0.0, %v1669
        %v1671 = vpop.f32.mrb[0].mxu0
        %1672 = vmatprep.mubr.f32.mxu0 0.0
        %1673 = vmatmul.mubr.f32.gmra.mrb[0].mxu0 %v1495
        %v1674 = vpop.f32.mrb[0].mxu0
        %v1675 = vadd.f32 0.0, %v1674
        %v1676 = vpop.f32.mrb[0].mxu0
        %1677 = vmatprep.mubr.f32.mxu0 0.0
        %1678 = vmatmul.mubr.f32.gmra.mrb[0].mxu0 %v1498
        %v1679 = vpop.f32.mrb[0].mxu0
        %v1680 = vadd.f32 0.0, %v1679
        %v1681 = vpop.f32.mrb[0].mxu0
        %1682 = vmatprep.mubr.f32.mxu0 0.0
        %1683 = vmatmul.mubr.f32.gmra.mrb[0].mxu0 %v1501
        %v1684 = vpop.f32.mrb[0].mxu0
        %v1685 = vadd.f32 0.0, %v1684
        %v1686 = vpop.f32.mrb[0].mxu0
        %1687 = vmatprep.mubr.f32.mxu0 0.0
        %1688 = vmatmul.mubr.f32.gmra.mrb[0].mxu0 %v1504
        %v1689 = vpop.f32.mrb[0].mxu0
        %v1690 = vadd.f32 0.0, %v1689
        %v1691 = vpop.f32.mrb[0].mxu0
        %1692 = vmatprep.mubr.f32.mxu0 0.0
        %1693 = vmatmul.mubr.f32.gmra.mrb[0].mxu0 %v1507
        %v1694 = vpop.f32.mrb[0].mxu0
        %v1695 = vadd.f32 0.0, %v1694
        %v1696 = vpop.f32.mrb[0].mxu0
        %1697 = vmatprep.mubr.f32.mxu0 0.0
        %1698 = vmatmul.mubr.f32.gmra.mrb[0].mxu0 %v1510
        %v1699 = vpop.f32.mrb[0].mxu0
        %v1700 = vadd.f32 0.0, %v1699
        %v1701 = vpop.f32.mrb[0].mxu0
        %1702 = vmatprep.mubr.f32.mxu0 0.0
        %1703 = vmatmul.mubr.f32.gmra.mrb[0].mxu0 %v1513
        %v1704 = vpop.f32.mrb[0].mxu0
        %v1705 = vadd.f32 0.0, %v1704
        %v1706 = vpop.f32.mrb[0].mxu0
        %1707 = vmatprep.mubr.f32.mxu0 0.0
        %1708 = vmatmul.mubr.f32.gmra.mrb[0].mxu0 %v1516
        %v1709 = vpop.f32.mrb[0].mxu0
        %v1710 = vadd.f32 0.0, %v1709
        %v1711 = vpop.f32.mrb[0].mxu0
        %1712 = vmatprep.mubr.f32.mxu0 0.0
        %1713 = vmatmul.mubr.f32.gmra.mrb[0].mxu0 %v1519
        %v1714 = vpop.f32.mrb[0].mxu0
        %v1715 = vadd.f32 0.0, %v1714
        %v1716 = vpop.f32.mrb[0].mxu0
        %1717 = vmatprep.mubr.f32.mxu0 0.0
        %1718 = vmatmul.mubr.f32.gmra.mrb[0].mxu0 %v1522
        %v1719 = vpop.f32.mrb[0].mxu0
        %v1720 = vadd.f32 0.0, %v1719
        %v1721 = vpop.f32.mrb[0].mxu0
        %1722 = vmatprep.mubr.f32.mxu0 0.0
        %1723 = vmatmul.mubr.f32.gmra.mrb[0].mxu0 %v1525
        %v1724 = vpop.f32.mrb[0].mxu0
        %v1725 = vadd.f32 0.0, %v1724
        %v1726 = vpop.f32.mrb[0].mxu0
        %1727 = vmatprep.mubr.f32.mxu0 0.0
        %1728 = vmatmul.mubr.f32.gmra.mrb[0].mxu0 %v1528
        %v1729 = vpop.f32.mrb[0].mxu0
        %v1730 = vadd.f32 0.0, %v1729
        %v1731 = vpop.f32.mrb[0].mxu0
        %1732 = vmatprep.mubr.f32.mxu0 0.0
        %1733 = vmatmul.mubr.f32.gmra.mrb[0].mxu0 %v1531
        %v1734 = vpop.f32.mrb[0].mxu0
        %v1735 = vadd.f32 0.0, %v1734
        %v1736 = vpop.f32.mrb[0].mxu0
        %1737 = vmatprep.mubr.f32.mxu0 0.0
        %1738 = vmatmul.mubr.f32.gmra.mrb[0].mxu0 %v1534
        %v1739 = vpop.f32.mrb[0].mxu0
        %v1740 = vadd.f32 0.0, %v1739
        %v1741 = vpop.f32.mrb[0].mxu0
        %1742 = vmatprep.mubr.f32.mxu0 0.0
        %1743 = vmatmul.mubr.f32.gmra.mrb[0].mxu0 %v1537
        %v1744 = vpop.f32.mrb[0].mxu0
        %v1745 = vadd.f32 0.0, %v1744
        %v1746 = vpop.f32.mrb[0].mxu0
        %1747 = vmatprep.mubr.f32.mxu0 0.0
        %1748 = vmatmul.mubr.f32.gmra.mrb[0].mxu0 %v1540
        %v1749 = vpop.f32.mrb[0].mxu0
        %v1750 = vadd.f32 0.0, %v1749
        %v1751 = vpop.f32.mrb[0].mxu0
        %1752 = vmatprep.mubr.f32.mxu0 0.0
        %1753 = vmatmul.mubr.f32.gmra.mrb[0].mxu0 %v1543
        %v1754 = vpop.f32.mrb[0].mxu0
        %v1755 = vadd.f32 0.0, %v1754
        %v1756 = vpop.f32.mrb[0].mxu0
        %1757 = vmatprep.mubr.f32.mxu0 0.0
        %1758 = vmatmul.mubr.f32.gmra.mrb[0].mxu0 %v1546
        %v1759 = vpop.f32.mrb[0].mxu0
        %v1760 = vadd.f32 0.0, %v1759
        %v1761 = vpop.f32.mrb[0].mxu0
        %1762 = vmatprep.mubr.f32.mxu0 0.0
        %1763 = vmatmul.mubr.f32.gmra.mrb[0].mxu0 %v1549
        %v1764 = vpop.f32.mrb[0].mxu0
        %v1765 = vadd.f32 0.0, %v1764
        %v1766 = vpop.f32.mrb[0].mxu0
        %1767 = vmatprep.mubr.f32.mxu0 0.0
        %1768 = vmatmul.mubr.f32.gmra.mrb[0].mxu0 %v1552
        %v1769 = vpop.f32.mrb[0].mxu0
        %v1770 = vadd.f32 0.0, %v1769
        %v1771 = vpop.f32.mrb[0].mxu0
        %1772 = vmatprep.mubr.f32.mxu0 0.0
        %1773 = vmatmul.mubr.f32.gmra.mrb[0].mxu0 %v1555
        %v1774 = vpop.f32.mrb[0].mxu0
        %v1775 = vadd.f32 0.0, %v1774
        %v1776 = vpop.f32.mrb[0].mxu0
        %1777 = vmatprep.mubr.f32.mxu0 0.0
        %1778 = vmatmul.mubr.f32.gmra.mrb[0].mxu0 %v1558
        %v1779 = vpop.f32.mrb[0].mxu0
        %v1780 = vadd.f32 0.0, %v1779
        %v1781 = vpop.f32.mrb[0].mxu0
        %1782 = vmatprep.mubr.f32.mxu0 0.0
        %1783 = vmatmul.mubr.f32.gmra.mrb[0].mxu0 %v1561
        %v1784 = vpop.f32.mrb[0].mxu0
        %v1785 = vadd.f32 0.0, %v1784
        %v1786 = vpop.f32.mrb[0].mxu0
        %1787 = vdwg.mxu0
        %v1788 = vadd.f32 %v1398, %v1630
        %v1789 = vadd.f32 %v1399, %v1635
        %v1790 = vadd.f32 %v1400, %v1640
        %v1791 = vadd.f32 %v1401, %v1645
        %v1792 = vadd.f32 %v1402, %v1650
        %v1793 = vadd.f32 %v1403, %v1655
        %v1794 = vadd.f32 %v1404, %v1660
        %v1795 = vadd.f32 %v1405, %v1665
        %v1796 = vadd.f32 %v1406, %v1670
        %v1797 = vadd.f32 %v1407, %v1675
        %v1798 = vadd.f32 %v1408, %v1680
        %v1799 = vadd.f32 %v1409, %v1685
        %v1800 = vadd.f32 %v1410, %v1690
        %v1801 = vadd.f32 %v1411, %v1695
        %v1802 = vadd.f32 %v1412, %v1700
        %v1803 = vadd.f32 %v1413, %v1705
        %v1804 = vadd.f32 %v1414, %v1710
        %v1805 = vadd.f32 %v1415, %v1715
        %v1806 = vadd.f32 %v1416, %v1720
        %v1807 = vadd.f32 %v1417, %v1725
        %v1808 = vadd.f32 %v1418, %v1730
        %v1809 = vadd.f32 %v1419, %v1735
        %v1810 = vadd.f32 %v1420, %v1740
        %v1811 = vadd.f32 %v1421, %v1745
        %v1812 = vadd.f32 %v1422, %v1750
        %v1813 = vadd.f32 %v1423, %v1755
        %v1814 = vadd.f32 %v1424, %v1760
        %v1815 = vadd.f32 %v1425, %v1765
        %v1816 = vadd.f32 %v1426, %v1770
        %v1817 = vadd.f32 %v1427, %v1775
        %v1818 = vadd.f32 %v1428, %v1780
        %v1819 = vadd.f32 %v1429, %v1785
        %v1820 = vld [vmem:[%s292 + $0x1] sm:$0xff]
        %v1821 = vld [vmem:[%s292 + $0x9] sm:$0xff]
        %v1822 = vld [vmem:[%s292 + $0x19] sm:$0xff]
        %v1823 = vld [vmem:[%s292 + $0x21] sm:$0xff]
        %v1824 = vld [vmem:[%s292 + $0x31] sm:$0xff]
        %v1825 = vld [vmem:[%s292 + $0x39] sm:$0xff]
        %v1826 = vld [vmem:[%s292 + $0x49] sm:$0xff]
        %v1827 = vld [vmem:[%s292 + $0x51] sm:$0xff]
        %v1828 = vld [vmem:[%s292 + $0x61] sm:$0xff]
        %v1829 = vld [vmem:[%s292 + $0x69] sm:$0xff]
        %v1830 = vld [vmem:[%s292 + $0x79] sm:$0xff]
        %v1831 = vld [vmem:[%s292 + $0x81] sm:$0xff]
        %v1832 = vld [vmem:[%s292 + $0x91] sm:$0xff]
        %v1833 = vld [vmem:[%s292 + $0x99] sm:$0xff]
        %v1834 = vld [vmem:[%s292 + $0xa9] sm:$0xff]
        %v1835 = vld [vmem:[%s292 + $0xb1] sm:$0xff]
        %v1836 = vld [vmem:[%s292 + $0xc1] sm:$0xff]
        %v1837 = vld [vmem:[%s292 + $0xc9] sm:$0xff]
        %v1838 = vld [vmem:[%s292 + $0xd9] sm:$0xff]
        %v1839 = vld [vmem:[%s292 + $0xe1] sm:$0xff]
        %v1840 = vld [vmem:[%s292 + $0xf1] sm:$0xff]
        %v1841 = vld [vmem:[%s292 + $0xf9] sm:$0xff]
        %v1842 = vld [vmem:[%s292 + $0x109] sm:$0xff]
        %v1843 = vld [vmem:[%s292 + $0x111] sm:$0xff]
        %v1844 = vld [vmem:[%s292 + $0x121] sm:$0xff]
        %v1845 = vld [vmem:[%s292 + $0x129] sm:$0xff]
        %v1846 = vld [vmem:[%s292 + $0x139] sm:$0xff]
        %v1847 = vld [vmem:[%s292 + $0x141] sm:$0xff]
        %v1848 = vld [vmem:[%s292 + $0x151] sm:$0xff]
        %v1849 = vld [vmem:[%s292 + $0x159] sm:$0xff]
        %v1850 = vld [vmem:[%s292 + $0x169] sm:$0xff]
        %v1851 = vld [vmem:[%s292 + $0x171] sm:$0xff]
        %s1852 = scalar_lea.vmem [#allocation6], 128
        %v1853 = vld [vmem:[%s1852] sm:$0xff]
        %v1854 = vld [vmem:[%s1852 + $0x8] sm:$0xff]
        %v1855 = vld [vmem:[%s1852 + $0x10] sm:$0xff]
        %v1856 = vld [vmem:[%s1852 + $0x18] sm:$0xff]
        %v1858 = vsel %vm236, %v1820, 0
        %v1861 = vsel %vm236, %v1821, 0
        %v1864 = vsel %vm236, %v1822, 0
        %v1867 = vsel %vm236, %v1823, 0
        %v1870 = vsel %vm236, %v1824, 0
        %v1873 = vsel %vm236, %v1825, 0
        %v1876 = vsel %vm236, %v1826, 0
        %v1879 = vsel %vm236, %v1827, 0
        %v1882 = vsel %vm236, %v1828, 0
        %v1885 = vsel %vm236, %v1829, 0
        %v1888 = vsel %vm236, %v1830, 0
        %v1891 = vsel %vm236, %v1831, 0
        %v1894 = vsel %vm236, %v1832, 0
        %v1897 = vsel %vm236, %v1833, 0
        %v1900 = vsel %vm236, %v1834, 0
        %v1903 = vsel %vm236, %v1835, 0
        %v1906 = vsel %vm236, %v1836, 0
        %v1909 = vsel %vm236, %v1837, 0
        %v1912 = vsel %vm236, %v1838, 0
        %v1915 = vsel %vm236, %v1839, 0
        %v1918 = vsel %vm236, %v1840, 0
        %v1921 = vsel %vm236, %v1841, 0
        %v1924 = vsel %vm236, %v1842, 0
        %v1927 = vsel %vm236, %v1843, 0
        %v1930 = vsel %vm236, %v1844, 0
        %v1933 = vsel %vm236, %v1845, 0
        %v1936 = vsel %vm236, %v1846, 0
        %v1939 = vsel %vm236, %v1847, 0
        %v1942 = vsel %vm236, %v1848, 0
        %v1945 = vsel %vm236, %v1849, 0
        %v1948 = vsel %vm236, %v1850, 0
        %v1951 = vsel %vm236, %v1851, 0
        %1953 = vmatprep.subr.mxu0 0.0
        %1954 = vmatpush1.msra.mxu0 %v1853
        %1955 = vmatprep.subr.mxu0 0.0
        %1956 = vmatpush1.msra.mxu0 %v1854
        %1957 = vmatprep.subr.mxu0 0.0
        %1958 = vmatpush1.msra.mxu0 %v1855
        %1959 = vmatprep.subr.mxu0 0.0
        %1960 = vmatpush1.msra.mxu0 %v1856
        %1961 = vmatprep.subr.mxu0 0.0
        %1962 = vmatpush1.msra.mxu0 0.0
        %1963 = vmatprep.subr.mxu0 0.0
        %1964 = vmatpush1.msra.mxu0 0.0
        %1965 = vmatprep.subr.mxu0 0.0
        %1966 = vmatpush1.msra.mxu0 0.0
        %1967 = vmatprep.subr.mxu0 0.0
        %1968 = vmatpush1.msra.mxu0 0.0
        %1969 = vmatprep.subr.mxu0 0.0
        %1970 = vmatpush1.msra.mxu0 0.0
        %1971 = vmatprep.subr.mxu0 0.0
        %1972 = vmatpush1.msra.mxu0 0.0
        %1973 = vmatprep.subr.mxu0 0.0
        %1974 = vmatpush1.msra.mxu0 0.0
        %1975 = vmatprep.subr.mxu0 0.0
        %1976 = vmatpush1.msra.mxu0 0.0
        %1977 = vmatprep.subr.mxu0 0.0
        %1978 = vmatpush1.msra.mxu0 0.0
        %1979 = vmatprep.subr.mxu0 0.0
        %1980 = vmatpush1.msra.mxu0 0.0
        %1981 = vmatprep.subr.mxu0 0.0
        %1982 = vmatpush1.msra.mxu0 0.0
        %1983 = vmatprep.subr.mxu0 0.0
        %1984 = vmatpush1.msra.mxu0 0.0
        %1985 = vmatprep.subr.mxu0 0.0
        %1986 = vmatpush1.msra.mxu0 0.0
        %1987 = vmatprep.subr.mxu0 0.0
        %1988 = vmatpush1.msra.mxu0 0.0
        %1989 = vmatprep.subr.mxu0 0.0
        %1990 = vmatpush1.msra.mxu0 0.0
        %1991 = vmatprep.subr.mxu0 0.0
        %1992 = vmatpush1.msra.mxu0 0.0
        %1993 = vmatprep.subr.mxu0 0.0
        %1994 = vmatpush1.msra.mxu0 0.0
        %1995 = vmatprep.subr.mxu0 0.0
        %1996 = vmatpush1.msra.mxu0 0.0
        %1997 = vmatprep.subr.mxu0 0.0
        %1998 = vmatpush1.msra.mxu0 0.0
        %1999 = vmatprep.subr.mxu0 0.0
        %2000 = vmatpush1.msra.mxu0 0.0
        %2001 = vmatprep.subr.mxu0 0.0
        %2002 = vmatpush1.msra.mxu0 0.0
        %2003 = vmatprep.subr.mxu0 0.0
        %2004 = vmatpush1.msra.mxu0 0.0
        %2005 = vmatprep.subr.mxu0 0.0
        %2006 = vmatpush1.msra.mxu0 0.0
        %2007 = vmatprep.subr.mxu0 0.0
        %2008 = vmatpush1.msra.mxu0 0.0
        %2009 = vmatprep.subr.mxu0 0.0
        %2010 = vmatpush1.msra.mxu0 0.0
        %2011 = vmatprep.subr.mxu0 0.0
        %2012 = vmatpush1.msra.mxu0 0.0
        %2013 = vmatprep.subr.mxu0 0.0
        %2014 = vmatpush1.msra.mxu0 0.0
        %2015 = vmatprep.subr.mxu0 0.0
        %2016 = vmatpush1.msra.mxu0 0.0
        %2017 = vmatprep.mubr.f32.mxu0 0.0
        %2018 = vmatmul.mubr.f32.gmra.mrb[0].mxu0 %v1858
        %v2019 = vpop.f32.mrb[0].mxu0
        %v2020 = vadd.f32 0.0, %v2019
        %v2021 = vpop.f32.mrb[0].mxu0
        %2022 = vmatprep.mubr.f32.mxu0 0.0
        %2023 = vmatmul.mubr.f32.gmra.mrb[0].mxu0 %v1861
        %v2024 = vpop.f32.mrb[0].mxu0
        %v2025 = vadd.f32 0.0, %v2024
        %v2026 = vpop.f32.mrb[0].mxu0
        %2027 = vmatprep.mubr.f32.mxu0 0.0
        %2028 = vmatmul.mubr.f32.gmra.mrb[0].mxu0 %v1864
        %v2029 = vpop.f32.mrb[0].mxu0
        %v2030 = vadd.f32 0.0, %v2029
        %v2031 = vpop.f32.mrb[0].mxu0
        %2032 = vmatprep.mubr.f32.mxu0 0.0
        %2033 = vmatmul.mubr.f32.gmra.mrb[0].mxu0 %v1867
        %v2034 = vpop.f32.mrb[0].mxu0
        %v2035 = vadd.f32 0.0, %v2034
        %v2036 = vpop.f32.mrb[0].mxu0
        %2037 = vmatprep.mubr.f32.mxu0 0.0
        %2038 = vmatmul.mubr.f32.gmra.mrb[0].mxu0 %v1870
        %v2039 = vpop.f32.mrb[0].mxu0
        %v2040 = vadd.f32 0.0, %v2039
        %v2041 = vpop.f32.mrb[0].mxu0
        %2042 = vmatprep.mubr.f32.mxu0 0.0
        %2043 = vmatmul.mubr.f32.gmra.mrb[0].mxu0 %v1873
        %v2044 = vpop.f32.mrb[0].mxu0
        %v2045 = vadd.f32 0.0, %v2044
        %v2046 = vpop.f32.mrb[0].mxu0
        %2047 = vmatprep.mubr.f32.mxu0 0.0
        %2048 = vmatmul.mubr.f32.gmra.mrb[0].mxu0 %v1876
        %v2049 = vpop.f32.mrb[0].mxu0
        %v2050 = vadd.f32 0.0, %v2049
        %v2051 = vpop.f32.mrb[0].mxu0
        %2052 = vmatprep.mubr.f32.mxu0 0.0
        %2053 = vmatmul.mubr.f32.gmra.mrb[0].mxu0 %v1879
        %v2054 = vpop.f32.mrb[0].mxu0
        %v2055 = vadd.f32 0.0, %v2054
        %v2056 = vpop.f32.mrb[0].mxu0
        %2057 = vmatprep.mubr.f32.mxu0 0.0
        %2058 = vmatmul.mubr.f32.gmra.mrb[0].mxu0 %v1882
        %v2059 = vpop.f32.mrb[0].mxu0
        %v2060 = vadd.f32 0.0, %v2059
        %v2061 = vpop.f32.mrb[0].mxu0
        %2062 = vmatprep.mubr.f32.mxu0 0.0
        %2063 = vmatmul.mubr.f32.gmra.mrb[0].mxu0 %v1885
        %v2064 = vpop.f32.mrb[0].mxu0
        %v2065 = vadd.f32 0.0, %v2064
        %v2066 = vpop.f32.mrb[0].mxu0
        %2067 = vmatprep.mubr.f32.mxu0 0.0
        %2068 = vmatmul.mubr.f32.gmra.mrb[0].mxu0 %v1888
        %v2069 = vpop.f32.mrb[0].mxu0
        %v2070 = vadd.f32 0.0, %v2069
        %v2071 = vpop.f32.mrb[0].mxu0
        %2072 = vmatprep.mubr.f32.mxu0 0.0
        %2073 = vmatmul.mubr.f32.gmra.mrb[0].mxu0 %v1891
        %v2074 = vpop.f32.mrb[0].mxu0
        %v2075 = vadd.f32 0.0, %v2074
        %v2076 = vpop.f32.mrb[0].mxu0
        %2077 = vmatprep.mubr.f32.mxu0 0.0
        %2078 = vmatmul.mubr.f32.gmra.mrb[0].mxu0 %v1894
        %v2079 = vpop.f32.mrb[0].mxu0
        %v2080 = vadd.f32 0.0, %v2079
        %v2081 = vpop.f32.mrb[0].mxu0
        %2082 = vmatprep.mubr.f32.mxu0 0.0
        %2083 = vmatmul.mubr.f32.gmra.mrb[0].mxu0 %v1897
        %v2084 = vpop.f32.mrb[0].mxu0
        %v2085 = vadd.f32 0.0, %v2084
        %v2086 = vpop.f32.mrb[0].mxu0
        %2087 = vmatprep.mubr.f32.mxu0 0.0
        %2088 = vmatmul.mubr.f32.gmra.mrb[0].mxu0 %v1900
        %v2089 = vpop.f32.mrb[0].mxu0
        %v2090 = vadd.f32 0.0, %v2089
        %v2091 = vpop.f32.mrb[0].mxu0
        %2092 = vmatprep.mubr.f32.mxu0 0.0
        %2093 = vmatmul.mubr.f32.gmra.mrb[0].mxu0 %v1903
        %v2094 = vpop.f32.mrb[0].mxu0
        %v2095 = vadd.f32 0.0, %v2094
        %v2096 = vpop.f32.mrb[0].mxu0
        %2097 = vmatprep.mubr.f32.mxu0 0.0
        %2098 = vmatmul.mubr.f32.gmra.mrb[0].mxu0 %v1906
        %v2099 = vpop.f32.mrb[0].mxu0
        %v2100 = vadd.f32 0.0, %v2099
        %v2101 = vpop.f32.mrb[0].mxu0
        %2102 = vmatprep.mubr.f32.mxu0 0.0
        %2103 = vmatmul.mubr.f32.gmra.mrb[0].mxu0 %v1909
        %v2104 = vpop.f32.mrb[0].mxu0
        %v2105 = vadd.f32 0.0, %v2104
        %v2106 = vpop.f32.mrb[0].mxu0
        %2107 = vmatprep.mubr.f32.mxu0 0.0
        %2108 = vmatmul.mubr.f32.gmra.mrb[0].mxu0 %v1912
        %v2109 = vpop.f32.mrb[0].mxu0
        %v2110 = vadd.f32 0.0, %v2109
        %v2111 = vpop.f32.mrb[0].mxu0
        %2112 = vmatprep.mubr.f32.mxu0 0.0
        %2113 = vmatmul.mubr.f32.gmra.mrb[0].mxu0 %v1915
        %v2114 = vpop.f32.mrb[0].mxu0
        %v2115 = vadd.f32 0.0, %v2114
        %v2116 = vpop.f32.mrb[0].mxu0
        %2117 = vmatprep.mubr.f32.mxu0 0.0
        %2118 = vmatmul.mubr.f32.gmra.mrb[0].mxu0 %v1918
        %v2119 = vpop.f32.mrb[0].mxu0
        %v2120 = vadd.f32 0.0, %v2119
        %v2121 = vpop.f32.mrb[0].mxu0
        %2122 = vmatprep.mubr.f32.mxu0 0.0
        %2123 = vmatmul.mubr.f32.gmra.mrb[0].mxu0 %v1921
        %v2124 = vpop.f32.mrb[0].mxu0
        %v2125 = vadd.f32 0.0, %v2124
        %v2126 = vpop.f32.mrb[0].mxu0
        %2127 = vmatprep.mubr.f32.mxu0 0.0
        %2128 = vmatmul.mubr.f32.gmra.mrb[0].mxu0 %v1924
        %v2129 = vpop.f32.mrb[0].mxu0
        %v2130 = vadd.f32 0.0, %v2129
        %v2131 = vpop.f32.mrb[0].mxu0
        %2132 = vmatprep.mubr.f32.mxu0 0.0
        %2133 = vmatmul.mubr.f32.gmra.mrb[0].mxu0 %v1927
        %v2134 = vpop.f32.mrb[0].mxu0
        %v2135 = vadd.f32 0.0, %v2134
        %v2136 = vpop.f32.mrb[0].mxu0
        %2137 = vmatprep.mubr.f32.mxu0 0.0
        %2138 = vmatmul.mubr.f32.gmra.mrb[0].mxu0 %v1930
        %v2139 = vpop.f32.mrb[0].mxu0
        %v2140 = vadd.f32 0.0, %v2139
        %v2141 = vpop.f32.mrb[0].mxu0
        %2142 = vmatprep.mubr.f32.mxu0 0.0
        %2143 = vmatmul.mubr.f32.gmra.mrb[0].mxu0 %v1933
        %v2144 = vpop.f32.mrb[0].mxu0
        %v2145 = vadd.f32 0.0, %v2144
        %v2146 = vpop.f32.mrb[0].mxu0
        %2147 = vmatprep.mubr.f32.mxu0 0.0
        %2148 = vmatmul.mubr.f32.gmra.mrb[0].mxu0 %v1936
        %v2149 = vpop.f32.mrb[0].mxu0
        %v2150 = vadd.f32 0.0, %v2149
        %v2151 = vpop.f32.mrb[0].mxu0
        %2152 = vmatprep.mubr.f32.mxu0 0.0
        %2153 = vmatmul.mubr.f32.gmra.mrb[0].mxu0 %v1939
        %v2154 = vpop.f32.mrb[0].mxu0
        %v2155 = vadd.f32 0.0, %v2154
        %v2156 = vpop.f32.mrb[0].mxu0
        %2157 = vmatprep.mubr.f32.mxu0 0.0
        %2158 = vmatmul.mubr.f32.gmra.mrb[0].mxu0 %v1942
        %v2159 = vpop.f32.mrb[0].mxu0
        %v2160 = vadd.f32 0.0, %v2159
        %v2161 = vpop.f32.mrb[0].mxu0
        %2162 = vmatprep.mubr.f32.mxu0 0.0
        %2163 = vmatmul.mubr.f32.gmra.mrb[0].mxu0 %v1945
        %v2164 = vpop.f32.mrb[0].mxu0
        %v2165 = vadd.f32 0.0, %v2164
        %v2166 = vpop.f32.mrb[0].mxu0
        %2167 = vmatprep.mubr.f32.mxu0 0.0
        %2168 = vmatmul.mubr.f32.gmra.mrb[0].mxu0 %v1948
        %v2169 = vpop.f32.mrb[0].mxu0
        %v2170 = vadd.f32 0.0, %v2169
        %v2171 = vpop.f32.mrb[0].mxu0
        %2172 = vmatprep.mubr.f32.mxu0 0.0
        %2173 = vmatmul.mubr.f32.gmra.mrb[0].mxu0 %v1951
        %v2174 = vpop.f32.mrb[0].mxu0
        %v2175 = vadd.f32 0.0, %v2174
        %v2176 = vpop.f32.mrb[0].mxu0
        %2177 = vdwg.mxu0
        %v2178 = vadd.f32 %v1788, %v2020
        %v2179 = vadd.f32 %v1789, %v2025
        %v2180 = vadd.f32 %v1790, %v2030
        %v2181 = vadd.f32 %v1791, %v2035
        %v2182 = vadd.f32 %v1792, %v2040
        %v2183 = vadd.f32 %v1793, %v2045
        %v2184 = vadd.f32 %v1794, %v2050
        %v2185 = vadd.f32 %v1795, %v2055
        %v2186 = vadd.f32 %v1796, %v2060
        %v2187 = vadd.f32 %v1797, %v2065
        %v2188 = vadd.f32 %v1798, %v2070
        %v2189 = vadd.f32 %v1799, %v2075
        %v2190 = vadd.f32 %v1800, %v2080
        %v2191 = vadd.f32 %v1801, %v2085
        %v2192 = vadd.f32 %v1802, %v2090
        %v2193 = vadd.f32 %v1803, %v2095
        %v2194 = vadd.f32 %v1804, %v2100
        %v2195 = vadd.f32 %v1805, %v2105
        %v2196 = vadd.f32 %v1806, %v2110
        %v2197 = vadd.f32 %v1807, %v2115
        %v2198 = vadd.f32 %v1808, %v2120
        %v2199 = vadd.f32 %v1809, %v2125
        %v2200 = vadd.f32 %v1810, %v2130
        %v2201 = vadd.f32 %v1811, %v2135
        %v2202 = vadd.f32 %v1812, %v2140
        %v2203 = vadd.f32 %v1813, %v2145
        %v2204 = vadd.f32 %v1814, %v2150
        %v2205 = vadd.f32 %v1815, %v2155
        %v2206 = vadd.f32 %v1816, %v2160
        %v2207 = vadd.f32 %v1817, %v2165
        %v2208 = vadd.f32 %v1818, %v2170
        %v2209 = vadd.f32 %v1819, %v2175
        %v2210 = vld [vmem:[%s292 + $0x2] sm:$0xff]
        %v2211 = vld [vmem:[%s292 + $0xa] sm:$0xff]
        %v2212 = vld [vmem:[%s292 + $0x1a] sm:$0xff]
        %v2213 = vld [vmem:[%s292 + $0x22] sm:$0xff]
        %v2214 = vld [vmem:[%s292 + $0x32] sm:$0xff]
        %v2215 = vld [vmem:[%s292 + $0x3a] sm:$0xff]
        %v2216 = vld [vmem:[%s292 + $0x4a] sm:$0xff]
        %v2217 = vld [vmem:[%s292 + $0x52] sm:$0xff]
        %v2218 = vld [vmem:[%s292 + $0x62] sm:$0xff]
        %v2219 = vld [vmem:[%s292 + $0x6a] sm:$0xff]
        %v2220 = vld [vmem:[%s292 + $0x7a] sm:$0xff]
        %v2221 = vld [vmem:[%s292 + $0x82] sm:$0xff]
        %v2222 = vld [vmem:[%s292 + $0x92] sm:$0xff]
        %v2223 = vld [vmem:[%s292 + $0x9a] sm:$0xff]
        %v2224 = vld [vmem:[%s292 + $0xaa] sm:$0xff]
        %v2225 = vld [vmem:[%s292 + $0xb2] sm:$0xff]
        %v2226 = vld [vmem:[%s292 + $0xc2] sm:$0xff]
        %v2227 = vld [vmem:[%s292 + $0xca] sm:$0xff]
        %v2228 = vld [vmem:[%s292 + $0xda] sm:$0xff]
        %v2229 = vld [vmem:[%s292 + $0xe2] sm:$0xff]
        %v2230 = vld [vmem:[%s292 + $0xf2] sm:$0xff]
        %v2231 = vld [vmem:[%s292 + $0xfa] sm:$0xff]
        %v2232 = vld [vmem:[%s292 + $0x10a] sm:$0xff]
        %v2233 = vld [vmem:[%s292 + $0x112] sm:$0xff]
        %v2234 = vld [vmem:[%s292 + $0x122] sm:$0xff]
        %v2235 = vld [vmem:[%s292 + $0x12a] sm:$0xff]
        %v2236 = vld [vmem:[%s292 + $0x13a] sm:$0xff]
        %v2237 = vld [vmem:[%s292 + $0x142] sm:$0xff]
        %v2238 = vld [vmem:[%s292 + $0x152] sm:$0xff]
        %v2239 = vld [vmem:[%s292 + $0x15a] sm:$0xff]
        %v2240 = vld [vmem:[%s292 + $0x16a] sm:$0xff]
        %v2241 = vld [vmem:[%s292 + $0x172] sm:$0xff]
        %s2242 = scalar_lea.vmem [#allocation6], 160
        %v2243 = vld [vmem:[%s2242] sm:$0xff]
        %v2244 = vld [vmem:[%s2242 + $0x8] sm:$0xff]
        %v2245 = vld [vmem:[%s2242 + $0x10] sm:$0xff]
        %v2246 = vld [vmem:[%s2242 + $0x18] sm:$0xff]
        %v2248 = vsel %vm236, %v2210, 0
        %v2251 = vsel %vm236, %v2211, 0
        %v2254 = vsel %vm236, %v2212, 0
        %v2257 = vsel %vm236, %v2213, 0
        %v2260 = vsel %vm236, %v2214, 0
        %v2263 = vsel %vm236, %v2215, 0
        %v2266 = vsel %vm236, %v2216, 0
        %v2269 = vsel %vm236, %v2217, 0
        %v2272 = vsel %vm236, %v2218, 0
        %v2275 = vsel %vm236, %v2219, 0
        %v2278 = vsel %vm236, %v2220, 0
        %v2281 = vsel %vm236, %v2221, 0
        %v2284 = vsel %vm236, %v2222, 0
        %v2287 = vsel %vm236, %v2223, 0
        %v2290 = vsel %vm236, %v2224, 0
        %v2293 = vsel %vm236, %v2225, 0
        %v2296 = vsel %vm236, %v2226, 0
        %v2299 = vsel %vm236, %v2227, 0
        %v2302 = vsel %vm236, %v2228, 0
        %v2305 = vsel %vm236, %v2229, 0
        %v2308 = vsel %vm236, %v2230, 0
        %v2311 = vsel %vm236, %v2231, 0
        %v2314 = vsel %vm236, %v2232, 0
        %v2317 = vsel %vm236, %v2233, 0
        %v2320 = vsel %vm236, %v2234, 0
        %v2323 = vsel %vm236, %v2235, 0
        %v2326 = vsel %vm236, %v2236, 0
        %v2329 = vsel %vm236, %v2237, 0
        %v2332 = vsel %vm236, %v2238, 0
        %v2335 = vsel %vm236, %v2239, 0
        %v2338 = vsel %vm236, %v2240, 0
        %v2341 = vsel %vm236, %v2241, 0
        %2343 = vmatprep.subr.mxu0 0.0
        %2344 = vmatpush1.msra.mxu0 %v2243
        %2345 = vmatprep.subr.mxu0 0.0
        %2346 = vmatpush1.msra.mxu0 %v2244
        %2347 = vmatprep.subr.mxu0 0.0
        %2348 = vmatpush1.msra.mxu0 %v2245
        %2349 = vmatprep.subr.mxu0 0.0
        %2350 = vmatpush1.msra.mxu0 %v2246
        %2351 = vmatprep.subr.mxu0 0.0
        %2352 = vmatpush1.msra.mxu0 0.0
        %2353 = vmatprep.subr.mxu0 0.0
        %2354 = vmatpush1.msra.mxu0 0.0
        %2355 = vmatprep.subr.mxu0 0.0
        %2356 = vmatpush1.msra.mxu0 0.0
        %2357 = vmatprep.subr.mxu0 0.0
        %2358 = vmatpush1.msra.mxu0 0.0
        %2359 = vmatprep.subr.mxu0 0.0
        %2360 = vmatpush1.msra.mxu0 0.0
        %2361 = vmatprep.subr.mxu0 0.0
        %2362 = vmatpush1.msra.mxu0 0.0
        %2363 = vmatprep.subr.mxu0 0.0
        %2364 = vmatpush1.msra.mxu0 0.0
        %2365 = vmatprep.subr.mxu0 0.0
        %2366 = vmatpush1.msra.mxu0 0.0
        %2367 = vmatprep.subr.mxu0 0.0
        %2368 = vmatpush1.msra.mxu0 0.0
        %2369 = vmatprep.subr.mxu0 0.0
        %2370 = vmatpush1.msra.mxu0 0.0
        %2371 = vmatprep.subr.mxu0 0.0
        %2372 = vmatpush1.msra.mxu0 0.0
        %2373 = vmatprep.subr.mxu0 0.0
        %2374 = vmatpush1.msra.mxu0 0.0
        %2375 = vmatprep.subr.mxu0 0.0
        %2376 = vmatpush1.msra.mxu0 0.0
        %2377 = vmatprep.subr.mxu0 0.0
        %2378 = vmatpush1.msra.mxu0 0.0
        %2379 = vmatprep.subr.mxu0 0.0
        %2380 = vmatpush1.msra.mxu0 0.0
        %2381 = vmatprep.subr.mxu0 0.0
        %2382 = vmatpush1.msra.mxu0 0.0
        %2383 = vmatprep.subr.mxu0 0.0
        %2384 = vmatpush1.msra.mxu0 0.0
        %2385 = vmatprep.subr.mxu0 0.0
        %2386 = vmatpush1.msra.mxu0 0.0
        %2387 = vmatprep.subr.mxu0 0.0
        %2388 = vmatpush1.msra.mxu0 0.0
        %2389 = vmatprep.subr.mxu0 0.0
        %2390 = vmatpush1.msra.mxu0 0.0
        %2391 = vmatprep.subr.mxu0 0.0
        %2392 = vmatpush1.msra.mxu0 0.0
        %2393 = vmatprep.subr.mxu0 0.0
        %2394 = vmatpush1.msra.mxu0 0.0
        %2395 = vmatprep.subr.mxu0 0.0
        %2396 = vmatpush1.msra.mxu0 0.0
        %2397 = vmatprep.subr.mxu0 0.0
        %2398 = vmatpush1.msra.mxu0 0.0
        %2399 = vmatprep.subr.mxu0 0.0
        %2400 = vmatpush1.msra.mxu0 0.0
        %2401 = vmatprep.subr.mxu0 0.0
        %2402 = vmatpush1.msra.mxu0 0.0
        %2403 = vmatprep.subr.mxu0 0.0
        %2404 = vmatpush1.msra.mxu0 0.0
        %2405 = vmatprep.subr.mxu0 0.0
        %2406 = vmatpush1.msra.mxu0 0.0
        %2407 = vmatprep.mubr.f32.mxu0 0.0
        %2408 = vmatmul.mubr.f32.gmra.mrb[0].mxu0 %v2248
        %v2409 = vpop.f32.mrb[0].mxu0
        %v2410 = vadd.f32 0.0, %v2409
        %v2411 = vpop.f32.mrb[0].mxu0
        %2412 = vmatprep.mubr.f32.mxu0 0.0
        %2413 = vmatmul.mubr.f32.gmra.mrb[0].mxu0 %v2251
        %v2414 = vpop.f32.mrb[0].mxu0
        %v2415 = vadd.f32 0.0, %v2414
        %v2416 = vpop.f32.mrb[0].mxu0
        %2417 = vmatprep.mubr.f32.mxu0 0.0
        %2418 = vmatmul.mubr.f32.gmra.mrb[0].mxu0 %v2254
        %v2419 = vpop.f32.mrb[0].mxu0
        %v2420 = vadd.f32 0.0, %v2419
        %v2421 = vpop.f32.mrb[0].mxu0
        %2422 = vmatprep.mubr.f32.mxu0 0.0
        %2423 = vmatmul.mubr.f32.gmra.mrb[0].mxu0 %v2257
        %v2424 = vpop.f32.mrb[0].mxu0
        %v2425 = vadd.f32 0.0, %v2424
        %v2426 = vpop.f32.mrb[0].mxu0
        %2427 = vmatprep.mubr.f32.mxu0 0.0
        %2428 = vmatmul.mubr.f32.gmra.mrb[0].mxu0 %v2260
        %v2429 = vpop.f32.mrb[0].mxu0
        %v2430 = vadd.f32 0.0, %v2429
        %v2431 = vpop.f32.mrb[0].mxu0
        %2432 = vmatprep.mubr.f32.mxu0 0.0
        %2433 = vmatmul.mubr.f32.gmra.mrb[0].mxu0 %v2263
        %v2434 = vpop.f32.mrb[0].mxu0
        %v2435 = vadd.f32 0.0, %v2434
        %v2436 = vpop.f32.mrb[0].mxu0
        %2437 = vmatprep.mubr.f32.mxu0 0.0
        %2438 = vmatmul.mubr.f32.gmra.mrb[0].mxu0 %v2266
        %v2439 = vpop.f32.mrb[0].mxu0
        %v2440 = vadd.f32 0.0, %v2439
        %v2441 = vpop.f32.mrb[0].mxu0
        %2442 = vmatprep.mubr.f32.mxu0 0.0
        %2443 = vmatmul.mubr.f32.gmra.mrb[0].mxu0 %v2269
        %v2444 = vpop.f32.mrb[0].mxu0
        %v2445 = vadd.f32 0.0, %v2444
        %v2446 = vpop.f32.mrb[0].mxu0
        %2447 = vmatprep.mubr.f32.mxu0 0.0
        %2448 = vmatmul.mubr.f32.gmra.mrb[0].mxu0 %v2272
        %v2449 = vpop.f32.mrb[0].mxu0
        %v2450 = vadd.f32 0.0, %v2449
        %v2451 = vpop.f32.mrb[0].mxu0
        %2452 = vmatprep.mubr.f32.mxu0 0.0
        %2453 = vmatmul.mubr.f32.gmra.mrb[0].mxu0 %v2275
        %v2454 = vpop.f32.mrb[0].mxu0
        %v2455 = vadd.f32 0.0, %v2454
        %v2456 = vpop.f32.mrb[0].mxu0
        %2457 = vmatprep.mubr.f32.mxu0 0.0
        %2458 = vmatmul.mubr.f32.gmra.mrb[0].mxu0 %v2278
        %v2459 = vpop.f32.mrb[0].mxu0
        %v2460 = vadd.f32 0.0, %v2459
        %v2461 = vpop.f32.mrb[0].mxu0
        %2462 = vmatprep.mubr.f32.mxu0 0.0
        %2463 = vmatmul.mubr.f32.gmra.mrb[0].mxu0 %v2281
        %v2464 = vpop.f32.mrb[0].mxu0
        %v2465 = vadd.f32 0.0, %v2464
        %v2466 = vpop.f32.mrb[0].mxu0
        %2467 = vmatprep.mubr.f32.mxu0 0.0
        %2468 = vmatmul.mubr.f32.gmra.mrb[0].mxu0 %v2284
        %v2469 = vpop.f32.mrb[0].mxu0
        %v2470 = vadd.f32 0.0, %v2469
        %v2471 = vpop.f32.mrb[0].mxu0
        %2472 = vmatprep.mubr.f32.mxu0 0.0
        %2473 = vmatmul.mubr.f32.gmra.mrb[0].mxu0 %v2287
        %v2474 = vpop.f32.mrb[0].mxu0
        %v2475 = vadd.f32 0.0, %v2474
        %v2476 = vpop.f32.mrb[0].mxu0
        %2477 = vmatprep.mubr.f32.mxu0 0.0
        %2478 = vmatmul.mubr.f32.gmra.mrb[0].mxu0 %v2290
        %v2479 = vpop.f32.mrb[0].mxu0
        %v2480 = vadd.f32 0.0, %v2479
        %v2481 = vpop.f32.mrb[0].mxu0
        %2482 = vmatprep.mubr.f32.mxu0 0.0
        %2483 = vmatmul.mubr.f32.gmra.mrb[0].mxu0 %v2293
        %v2484 = vpop.f32.mrb[0].mxu0
        %v2485 = vadd.f32 0.0, %v2484
        %v2486 = vpop.f32.mrb[0].mxu0
        %2487 = vmatprep.mubr.f32.mxu0 0.0
        %2488 = vmatmul.mubr.f32.gmra.mrb[0].mxu0 %v2296
        %v2489 = vpop.f32.mrb[0].mxu0
        %v2490 = vadd.f32 0.0, %v2489
        %v2491 = vpop.f32.mrb[0].mxu0
        %2492 = vmatprep.mubr.f32.mxu0 0.0
        %2493 = vmatmul.mubr.f32.gmra.mrb[0].mxu0 %v2299
        %v2494 = vpop.f32.mrb[0].mxu0
        %v2495 = vadd.f32 0.0, %v2494
        %v2496 = vpop.f32.mrb[0].mxu0
        %2497 = vmatprep.mubr.f32.mxu0 0.0
        %2498 = vmatmul.mubr.f32.gmra.mrb[0].mxu0 %v2302
        %v2499 = vpop.f32.mrb[0].mxu0
        %v2500 = vadd.f32 0.0, %v2499
        %v2501 = vpop.f32.mrb[0].mxu0
        %2502 = vmatprep.mubr.f32.mxu0 0.0
        %2503 = vmatmul.mubr.f32.gmra.mrb[0].mxu0 %v2305
        %v2504 = vpop.f32.mrb[0].mxu0
        %v2505 = vadd.f32 0.0, %v2504
        %v2506 = vpop.f32.mrb[0].mxu0
        %2507 = vmatprep.mubr.f32.mxu0 0.0
        %2508 = vmatmul.mubr.f32.gmra.mrb[0].mxu0 %v2308
        %v2509 = vpop.f32.mrb[0].mxu0
        %v2510 = vadd.f32 0.0, %v2509
        %v2511 = vpop.f32.mrb[0].mxu0
        %2512 = vmatprep.mubr.f32.mxu0 0.0
        %2513 = vmatmul.mubr.f32.gmra.mrb[0].mxu0 %v2311
        %v2514 = vpop.f32.mrb[0].mxu0
        %v2515 = vadd.f32 0.0, %v2514
        %v2516 = vpop.f32.mrb[0].mxu0
        %2517 = vmatprep.mubr.f32.mxu0 0.0
        %2518 = vmatmul.mubr.f32.gmra.mrb[0].mxu0 %v2314
        %v2519 = vpop.f32.mrb[0].mxu0
        %v2520 = vadd.f32 0.0, %v2519
        %v2521 = vpop.f32.mrb[0].mxu0
        %2522 = vmatprep.mubr.f32.mxu0 0.0
        %2523 = vmatmul.mubr.f32.gmra.mrb[0].mxu0 %v2317
        %v2524 = vpop.f32.mrb[0].mxu0
        %v2525 = vadd.f32 0.0, %v2524
        %v2526 = vpop.f32.mrb[0].mxu0
        %2527 = vmatprep.mubr.f32.mxu0 0.0
        %2528 = vmatmul.mubr.f32.gmra.mrb[0].mxu0 %v2320
        %v2529 = vpop.f32.mrb[0].mxu0
        %v2530 = vadd.f32 0.0, %v2529
        %v2531 = vpop.f32.mrb[0].mxu0
        %2532 = vmatprep.mubr.f32.mxu0 0.0
        %2533 = vmatmul.mubr.f32.gmra.mrb[0].mxu0 %v2323
        %v2534 = vpop.f32.mrb[0].mxu0
        %v2535 = vadd.f32 0.0, %v2534
        %v2536 = vpop.f32.mrb[0].mxu0
        %2537 = vmatprep.mubr.f32.mxu0 0.0
        %2538 = vmatmul.mubr.f32.gmra.mrb[0].mxu0 %v2326
        %v2539 = vpop.f32.mrb[0].mxu0
        %v2540 = vadd.f32 0.0, %v2539
        %v2541 = vpop.f32.mrb[0].mxu0
        %2542 = vmatprep.mubr.f32.mxu0 0.0
        %2543 = vmatmul.mubr.f32.gmra.mrb[0].mxu0 %v2329
        %v2544 = vpop.f32.mrb[0].mxu0
        %v2545 = vadd.f32 0.0, %v2544
        %v2546 = vpop.f32.mrb[0].mxu0
        %2547 = vmatprep.mubr.f32.mxu0 0.0
        %2548 = vmatmul.mubr.f32.gmra.mrb[0].mxu0 %v2332
        %v2549 = vpop.f32.mrb[0].mxu0
        %v2550 = vadd.f32 0.0, %v2549
        %v2551 = vpop.f32.mrb[0].mxu0
        %2552 = vmatprep.mubr.f32.mxu0 0.0
        %2553 = vmatmul.mubr.f32.gmra.mrb[0].mxu0 %v2335
        %v2554 = vpop.f32.mrb[0].mxu0
        %v2555 = vadd.f32 0.0, %v2554
        %v2556 = vpop.f32.mrb[0].mxu0
        %2557 = vmatprep.mubr.f32.mxu0 0.0
        %2558 = vmatmul.mubr.f32.gmra.mrb[0].mxu0 %v2338
        %v2559 = vpop.f32.mrb[0].mxu0
        %v2560 = vadd.f32 0.0, %v2559
        %v2561 = vpop.f32.mrb[0].mxu0
        %2562 = vmatprep.mubr.f32.mxu0 0.0
        %2563 = vmatmul.mubr.f32.gmra.mrb[0].mxu0 %v2341
        %v2564 = vpop.f32.mrb[0].mxu0
        %v2565 = vadd.f32 0.0, %v2564
        %v2566 = vpop.f32.mrb[0].mxu0
        %2567 = vdwg.mxu0
        %v2568 = vadd.f32 %v2178, %v2410
        %v2569 = vadd.f32 %v2179, %v2415
        %v2570 = vadd.f32 %v2180, %v2420
        %v2571 = vadd.f32 %v2181, %v2425
        %v2572 = vadd.f32 %v2182, %v2430
        %v2573 = vadd.f32 %v2183, %v2435
        %v2574 = vadd.f32 %v2184, %v2440
        %v2575 = vadd.f32 %v2185, %v2445
        %v2576 = vadd.f32 %v2186, %v2450
        %v2577 = vadd.f32 %v2187, %v2455
        %v2578 = vadd.f32 %v2188, %v2460
        %v2579 = vadd.f32 %v2189, %v2465
        %v2580 = vadd.f32 %v2190, %v2470
        %v2581 = vadd.f32 %v2191, %v2475
        %v2582 = vadd.f32 %v2192, %v2480
        %v2583 = vadd.f32 %v2193, %v2485
        %v2584 = vadd.f32 %v2194, %v2490
        %v2585 = vadd.f32 %v2195, %v2495
        %v2586 = vadd.f32 %v2196, %v2500
        %v2587 = vadd.f32 %v2197, %v2505
        %v2588 = vadd.f32 %v2198, %v2510
        %v2589 = vadd.f32 %v2199, %v2515
        %v2590 = vadd.f32 %v2200, %v2520
        %v2591 = vadd.f32 %v2201, %v2525
        %v2592 = vadd.f32 %v2202, %v2530
        %v2593 = vadd.f32 %v2203, %v2535
        %v2594 = vadd.f32 %v2204, %v2540
        %v2595 = vadd.f32 %v2205, %v2545
        %v2596 = vadd.f32 %v2206, %v2550
        %v2597 = vadd.f32 %v2207, %v2555
        %v2598 = vadd.f32 %v2208, %v2560
        %v2599 = vadd.f32 %v2209, %v2565
        %s2600 = scalar_lea.vmem [#allocation2], 48
        %v2601 = vld [vmem:[%s2600] sm:$0xff]
        %v2602 = vld [vmem:[%s2600 + $0x8] sm:$0xff]
        %v2603 = vld [vmem:[%s2600 + $0x18] sm:$0xff]
        %v2604 = vld [vmem:[%s2600 + $0x20] sm:$0xff]
        %v2605 = vld [vmem:[%s2600 + $0x30] sm:$0xff]
        %v2606 = vld [vmem:[%s2600 + $0x38] sm:$0xff]
        %v2607 = vld [vmem:[%s2600 + $0x48] sm:$0xff]
        %v2608 = vld [vmem:[%s2600 + $0x50] sm:$0xff]
        %v2609 = vld [vmem:[%s2600 + $0x60] sm:$0xff]
        %v2610 = vld [vmem:[%s2600 + $0x68] sm:$0xff]
        %v2611 = vld [vmem:[%s2600 + $0x78] sm:$0xff]
        %v2612 = vld [vmem:[%s2600 + $0x80] sm:$0xff]
        %v2613 = vld [vmem:[%s2600 + $0x90] sm:$0xff]
        %v2614 = vld [vmem:[%s2600 + $0x98] sm:$0xff]
        %v2615 = vld [vmem:[%s2600 + $0xa8] sm:$0xff]
        %v2616 = vld [vmem:[%s2600 + $0xb0] sm:$0xff]
        %v2617 = vld [vmem:[%s2600 + $0xc0] sm:$0xff]
        %v2618 = vld [vmem:[%s2600 + $0xc8] sm:$0xff]
        %v2619 = vld [vmem:[%s2600 + $0xd8] sm:$0xff]
        %v2620 = vld [vmem:[%s2600 + $0xe0] sm:$0xff]
        %v2621 = vld [vmem:[%s2600 + $0xf0] sm:$0xff]
        %v2622 = vld [vmem:[%s2600 + $0xf8] sm:$0xff]
        %v2623 = vld [vmem:[%s2600 + $0x108] sm:$0xff]
        %v2624 = vld [vmem:[%s2600 + $0x110] sm:$0xff]
        %v2625 = vld [vmem:[%s2600 + $0x120] sm:$0xff]
        %v2626 = vld [vmem:[%s2600 + $0x128] sm:$0xff]
        %v2627 = vld [vmem:[%s2600 + $0x138] sm:$0xff]
        %v2628 = vld [vmem:[%s2600 + $0x140] sm:$0xff]
        %v2629 = vld [vmem:[%s2600 + $0x150] sm:$0xff]
        %v2630 = vld [vmem:[%s2600 + $0x158] sm:$0xff]
        %v2631 = vld [vmem:[%s2600 + $0x168] sm:$0xff]
        %v2632 = vld [vmem:[%s2600 + $0x170] sm:$0xff]
        %s2633 = scalar_lea.vmem [#allocation6], 192
        %v2634 = vld [vmem:[%s2633] sm:$0xff]
        %v2635 = vld [vmem:[%s2633 + $0x8] sm:$0xff]
        %v2636 = vld [vmem:[%s2633 + $0x10] sm:$0xff]
        %v2637 = vld [vmem:[%s2633 + $0x18] sm:$0xff]
        %v2639 = vsel %vm236, %v2601, 0
        %v2642 = vsel %vm236, %v2602, 0
        %v2645 = vsel %vm236, %v2603, 0
        %v2648 = vsel %vm236, %v2604, 0
        %v2651 = vsel %vm236, %v2605, 0
        %v2654 = vsel %vm236, %v2606, 0
        %v2657 = vsel %vm236, %v2607, 0
        %v2660 = vsel %vm236, %v2608, 0
        %v2663 = vsel %vm236, %v2609, 0
        %v2666 = vsel %vm236, %v2610, 0
        %v2669 = vsel %vm236, %v2611, 0
        %v2672 = vsel %vm236, %v2612, 0
        %v2675 = vsel %vm236, %v2613, 0
        %v2678 = vsel %vm236, %v2614, 0
        %v2681 = vsel %vm236, %v2615, 0
        %v2684 = vsel %vm236, %v2616, 0
        %v2687 = vsel %vm236, %v2617, 0
        %v2690 = vsel %vm236, %v2618, 0
        %v2693 = vsel %vm236, %v2619, 0
        %v2696 = vsel %vm236, %v2620, 0
        %v2699 = vsel %vm236, %v2621, 0
        %v2702 = vsel %vm236, %v2622, 0
        %v2705 = vsel %vm236, %v2623, 0
        %v2708 = vsel %vm236, %v2624, 0
        %v2711 = vsel %vm236, %v2625, 0
        %v2714 = vsel %vm236, %v2626, 0
        %v2717 = vsel %vm236, %v2627, 0
        %v2720 = vsel %vm236, %v2628, 0
        %v2723 = vsel %vm236, %v2629, 0
        %v2726 = vsel %vm236, %v2630, 0
        %v2729 = vsel %vm236, %v2631, 0
        %v2732 = vsel %vm236, %v2632, 0
        %2734 = vmatprep.subr.mxu0 0.0
        %2735 = vmatpush1.msra.mxu0 %v2634
        %2736 = vmatprep.subr.mxu0 0.0
        %2737 = vmatpush1.msra.mxu0 %v2635
        %2738 = vmatprep.subr.mxu0 0.0
        %2739 = vmatpush1.msra.mxu0 %v2636
        %2740 = vmatprep.subr.mxu0 0.0
        %2741 = vmatpush1.msra.mxu0 %v2637
        %2742 = vmatprep.subr.mxu0 0.0
        %2743 = vmatpush1.msra.mxu0 0.0
        %2744 = vmatprep.subr.mxu0 0.0
        %2745 = vmatpush1.msra.mxu0 0.0
        %2746 = vmatprep.subr.mxu0 0.0
        %2747 = vmatpush1.msra.mxu0 0.0
        %2748 = vmatprep.subr.mxu0 0.0
        %2749 = vmatpush1.msra.mxu0 0.0
        %2750 = vmatprep.subr.mxu0 0.0
        %2751 = vmatpush1.msra.mxu0 0.0
        %2752 = vmatprep.subr.mxu0 0.0
        %2753 = vmatpush1.msra.mxu0 0.0
        %2754 = vmatprep.subr.mxu0 0.0
        %2755 = vmatpush1.msra.mxu0 0.0
        %2756 = vmatprep.subr.mxu0 0.0
        %2757 = vmatpush1.msra.mxu0 0.0
        %2758 = vmatprep.subr.mxu0 0.0
        %2759 = vmatpush1.msra.mxu0 0.0
        %2760 = vmatprep.subr.mxu0 0.0
        %2761 = vmatpush1.msra.mxu0 0.0
        %2762 = vmatprep.subr.mxu0 0.0
        %2763 = vmatpush1.msra.mxu0 0.0
        %2764 = vmatprep.subr.mxu0 0.0
        %2765 = vmatpush1.msra.mxu0 0.0
        %2766 = vmatprep.subr.mxu0 0.0
        %2767 = vmatpush1.msra.mxu0 0.0
        %2768 = vmatprep.subr.mxu0 0.0
        %2769 = vmatpush1.msra.mxu0 0.0
        %2770 = vmatprep.subr.mxu0 0.0
        %2771 = vmatpush1.msra.mxu0 0.0
        %2772 = vmatprep.subr.mxu0 0.0
        %2773 = vmatpush1.msra.mxu0 0.0
        %2774 = vmatprep.subr.mxu0 0.0
        %2775 = vmatpush1.msra.mxu0 0.0
        %2776 = vmatprep.subr.mxu0 0.0
        %2777 = vmatpush1.msra.mxu0 0.0
        %2778 = vmatprep.subr.mxu0 0.0
        %2779 = vmatpush1.msra.mxu0 0.0
        %2780 = vmatprep.subr.mxu0 0.0
        %2781 = vmatpush1.msra.mxu0 0.0
        %2782 = vmatprep.subr.mxu0 0.0
        %2783 = vmatpush1.msra.mxu0 0.0
        %2784 = vmatprep.subr.mxu0 0.0
        %2785 = vmatpush1.msra.mxu0 0.0
        %2786 = vmatprep.subr.mxu0 0.0
        %2787 = vmatpush1.msra.mxu0 0.0
        %2788 = vmatprep.subr.mxu0 0.0
        %2789 = vmatpush1.msra.mxu0 0.0
        %2790 = vmatprep.subr.mxu0 0.0
        %2791 = vmatpush1.msra.mxu0 0.0
        %2792 = vmatprep.subr.mxu0 0.0
        %2793 = vmatpush1.msra.mxu0 0.0
        %2794 = vmatprep.subr.mxu0 0.0
        %2795 = vmatpush1.msra.mxu0 0.0
        %2796 = vmatprep.subr.mxu0 0.0
        %2797 = vmatpush1.msra.mxu0 0.0
        %2798 = vmatprep.mubr.f32.mxu0 0.0
        %2799 = vmatmul.mubr.f32.gmra.mrb[0].mxu0 %v2639
        %v2800 = vpop.f32.mrb[0].mxu0
        %v2801 = vadd.f32 0.0, %v2800
        %v2802 = vpop.f32.mrb[0].mxu0
        %2803 = vmatprep.mubr.f32.mxu0 0.0
        %2804 = vmatmul.mubr.f32.gmra.mrb[0].mxu0 %v2642
        %v2805 = vpop.f32.mrb[0].mxu0
        %v2806 = vadd.f32 0.0, %v2805
        %v2807 = vpop.f32.mrb[0].mxu0
        %2808 = vmatprep.mubr.f32.mxu0 0.0
        %2809 = vmatmul.mubr.f32.gmra.mrb[0].mxu0 %v2645
        %v2810 = vpop.f32.mrb[0].mxu0
        %v2811 = vadd.f32 0.0, %v2810
        %v2812 = vpop.f32.mrb[0].mxu0
        %2813 = vmatprep.mubr.f32.mxu0 0.0
        %2814 = vmatmul.mubr.f32.gmra.mrb[0].mxu0 %v2648
        %v2815 = vpop.f32.mrb[0].mxu0
        %v2816 = vadd.f32 0.0, %v2815
        %v2817 = vpop.f32.mrb[0].mxu0
        %2818 = vmatprep.mubr.f32.mxu0 0.0
        %2819 = vmatmul.mubr.f32.gmra.mrb[0].mxu0 %v2651
        %v2820 = vpop.f32.mrb[0].mxu0
        %v2821 = vadd.f32 0.0, %v2820
        %v2822 = vpop.f32.mrb[0].mxu0
        %2823 = vmatprep.mubr.f32.mxu0 0.0
        %2824 = vmatmul.mubr.f32.gmra.mrb[0].mxu0 %v2654
        %v2825 = vpop.f32.mrb[0].mxu0
        %v2826 = vadd.f32 0.0, %v2825
        %v2827 = vpop.f32.mrb[0].mxu0
        %2828 = vmatprep.mubr.f32.mxu0 0.0
        %2829 = vmatmul.mubr.f32.gmra.mrb[0].mxu0 %v2657
        %v2830 = vpop.f32.mrb[0].mxu0
        %v2831 = vadd.f32 0.0, %v2830
        %v2832 = vpop.f32.mrb[0].mxu0
        %2833 = vmatprep.mubr.f32.mxu0 0.0
        %2834 = vmatmul.mubr.f32.gmra.mrb[0].mxu0 %v2660
        %v2835 = vpop.f32.mrb[0].mxu0
        %v2836 = vadd.f32 0.0, %v2835
        %v2837 = vpop.f32.mrb[0].mxu0
        %2838 = vmatprep.mubr.f32.mxu0 0.0
        %2839 = vmatmul.mubr.f32.gmra.mrb[0].mxu0 %v2663
        %v2840 = vpop.f32.mrb[0].mxu0
        %v2841 = vadd.f32 0.0, %v2840
        %v2842 = vpop.f32.mrb[0].mxu0
        %2843 = vmatprep.mubr.f32.mxu0 0.0
        %2844 = vmatmul.mubr.f32.gmra.mrb[0].mxu0 %v2666
        %v2845 = vpop.f32.mrb[0].mxu0
        %v2846 = vadd.f32 0.0, %v2845
        %v2847 = vpop.f32.mrb[0].mxu0
        %2848 = vmatprep.mubr.f32.mxu0 0.0
        %2849 = vmatmul.mubr.f32.gmra.mrb[0].mxu0 %v2669
        %v2850 = vpop.f32.mrb[0].mxu0
        %v2851 = vadd.f32 0.0, %v2850
        %v2852 = vpop.f32.mrb[0].mxu0
        %2853 = vmatprep.mubr.f32.mxu0 0.0
        %2854 = vmatmul.mubr.f32.gmra.mrb[0].mxu0 %v2672
        %v2855 = vpop.f32.mrb[0].mxu0
        %v2856 = vadd.f32 0.0, %v2855
        %v2857 = vpop.f32.mrb[0].mxu0
        %2858 = vmatprep.mubr.f32.mxu0 0.0
        %2859 = vmatmul.mubr.f32.gmra.mrb[0].mxu0 %v2675
        %v2860 = vpop.f32.mrb[0].mxu0
        %v2861 = vadd.f32 0.0, %v2860
        %v2862 = vpop.f32.mrb[0].mxu0
        %2863 = vmatprep.mubr.f32.mxu0 0.0
        %2864 = vmatmul.mubr.f32.gmra.mrb[0].mxu0 %v2678
        %v2865 = vpop.f32.mrb[0].mxu0
        %v2866 = vadd.f32 0.0, %v2865
        %v2867 = vpop.f32.mrb[0].mxu0
        %2868 = vmatprep.mubr.f32.mxu0 0.0
        %2869 = vmatmul.mubr.f32.gmra.mrb[0].mxu0 %v2681
        %v2870 = vpop.f32.mrb[0].mxu0
        %v2871 = vadd.f32 0.0, %v2870
        %v2872 = vpop.f32.mrb[0].mxu0
        %2873 = vmatprep.mubr.f32.mxu0 0.0
        %2874 = vmatmul.mubr.f32.gmra.mrb[0].mxu0 %v2684
        %v2875 = vpop.f32.mrb[0].mxu0
        %v2876 = vadd.f32 0.0, %v2875
        %v2877 = vpop.f32.mrb[0].mxu0
        %2878 = vmatprep.mubr.f32.mxu0 0.0
        %2879 = vmatmul.mubr.f32.gmra.mrb[0].mxu0 %v2687
        %v2880 = vpop.f32.mrb[0].mxu0
        %v2881 = vadd.f32 0.0, %v2880
        %v2882 = vpop.f32.mrb[0].mxu0
        %2883 = vmatprep.mubr.f32.mxu0 0.0
        %2884 = vmatmul.mubr.f32.gmra.mrb[0].mxu0 %v2690
        %v2885 = vpop.f32.mrb[0].mxu0
        %v2886 = vadd.f32 0.0, %v2885
        %v2887 = vpop.f32.mrb[0].mxu0
        %2888 = vmatprep.mubr.f32.mxu0 0.0
        %2889 = vmatmul.mubr.f32.gmra.mrb[0].mxu0 %v2693
        %v2890 = vpop.f32.mrb[0].mxu0
        %v2891 = vadd.f32 0.0, %v2890
        %v2892 = vpop.f32.mrb[0].mxu0
        %2893 = vmatprep.mubr.f32.mxu0 0.0
        %2894 = vmatmul.mubr.f32.gmra.mrb[0].mxu0 %v2696
        %v2895 = vpop.f32.mrb[0].mxu0
        %v2896 = vadd.f32 0.0, %v2895
        %v2897 = vpop.f32.mrb[0].mxu0
        %2898 = vmatprep.mubr.f32.mxu0 0.0
        %2899 = vmatmul.mubr.f32.gmra.mrb[0].mxu0 %v2699
        %v2900 = vpop.f32.mrb[0].mxu0
        %v2901 = vadd.f32 0.0, %v2900
        %v2902 = vpop.f32.mrb[0].mxu0
        %2903 = vmatprep.mubr.f32.mxu0 0.0
        %2904 = vmatmul.mubr.f32.gmra.mrb[0].mxu0 %v2702
        %v2905 = vpop.f32.mrb[0].mxu0
        %v2906 = vadd.f32 0.0, %v2905
        %v2907 = vpop.f32.mrb[0].mxu0
        %2908 = vmatprep.mubr.f32.mxu0 0.0
        %2909 = vmatmul.mubr.f32.gmra.mrb[0].mxu0 %v2705
        %v2910 = vpop.f32.mrb[0].mxu0
        %v2911 = vadd.f32 0.0, %v2910
        %v2912 = vpop.f32.mrb[0].mxu0
        %2913 = vmatprep.mubr.f32.mxu0 0.0
        %2914 = vmatmul.mubr.f32.gmra.mrb[0].mxu0 %v2708
        %v2915 = vpop.f32.mrb[0].mxu0
        %v2916 = vadd.f32 0.0, %v2915
        %v2917 = vpop.f32.mrb[0].mxu0
        %2918 = vmatprep.mubr.f32.mxu0 0.0
        %2919 = vmatmul.mubr.f32.gmra.mrb[0].mxu0 %v2711
        %v2920 = vpop.f32.mrb[0].mxu0
        %v2921 = vadd.f32 0.0, %v2920
        %v2922 = vpop.f32.mrb[0].mxu0
        %2923 = vmatprep.mubr.f32.mxu0 0.0
        %2924 = vmatmul.mubr.f32.gmra.mrb[0].mxu0 %v2714
        %v2925 = vpop.f32.mrb[0].mxu0
        %v2926 = vadd.f32 0.0, %v2925
        %v2927 = vpop.f32.mrb[0].mxu0
        %2928 = vmatprep.mubr.f32.mxu0 0.0
        %2929 = vmatmul.mubr.f32.gmra.mrb[0].mxu0 %v2717
        %v2930 = vpop.f32.mrb[0].mxu0
        %v2931 = vadd.f32 0.0, %v2930
        %v2932 = vpop.f32.mrb[0].mxu0
        %2933 = vmatprep.mubr.f32.mxu0 0.0
        %2934 = vmatmul.mubr.f32.gmra.mrb[0].mxu0 %v2720
        %v2935 = vpop.f32.mrb[0].mxu0
        %v2936 = vadd.f32 0.0, %v2935
        %v2937 = vpop.f32.mrb[0].mxu0
        %2938 = vmatprep.mubr.f32.mxu0 0.0
        %2939 = vmatmul.mubr.f32.gmra.mrb[0].mxu0 %v2723
        %v2940 = vpop.f32.mrb[0].mxu0
        %v2941 = vadd.f32 0.0, %v2940
        %v2942 = vpop.f32.mrb[0].mxu0
        %2943 = vmatprep.mubr.f32.mxu0 0.0
        %2944 = vmatmul.mubr.f32.gmra.mrb[0].mxu0 %v2726
        %v2945 = vpop.f32.mrb[0].mxu0
        %v2946 = vadd.f32 0.0, %v2945
        %v2947 = vpop.f32.mrb[0].mxu0
        %2948 = vmatprep.mubr.f32.mxu0 0.0
        %2949 = vmatmul.mubr.f32.gmra.mrb[0].mxu0 %v2729
        %v2950 = vpop.f32.mrb[0].mxu0
        %v2951 = vadd.f32 0.0, %v2950
        %v2952 = vpop.f32.mrb[0].mxu0
        %2953 = vmatprep.mubr.f32.mxu0 0.0
        %2954 = vmatmul.mubr.f32.gmra.mrb[0].mxu0 %v2732
        %v2955 = vpop.f32.mrb[0].mxu0
        %v2956 = vadd.f32 0.0, %v2955
        %v2957 = vpop.f32.mrb[0].mxu0
        %2958 = vdwg.mxu0
        %v2959 = vadd.f32 %v2568, %v2801
        %v2960 = vadd.f32 %v2569, %v2806
        %v2961 = vadd.f32 %v2570, %v2811
        %v2962 = vadd.f32 %v2571, %v2816
        %v2963 = vadd.f32 %v2572, %v2821
        %v2964 = vadd.f32 %v2573, %v2826
        %v2965 = vadd.f32 %v2574, %v2831
        %v2966 = vadd.f32 %v2575, %v2836
        %v2967 = vadd.f32 %v2576, %v2841
        %v2968 = vadd.f32 %v2577, %v2846
        %v2969 = vadd.f32 %v2578, %v2851
        %v2970 = vadd.f32 %v2579, %v2856
        %v2971 = vadd.f32 %v2580, %v2861
        %v2972 = vadd.f32 %v2581, %v2866
        %v2973 = vadd.f32 %v2582, %v2871
        %v2974 = vadd.f32 %v2583, %v2876
        %v2975 = vadd.f32 %v2584, %v2881
        %v2976 = vadd.f32 %v2585, %v2886
        %v2977 = vadd.f32 %v2586, %v2891
        %v2978 = vadd.f32 %v2587, %v2896
        %v2979 = vadd.f32 %v2588, %v2901
        %v2980 = vadd.f32 %v2589, %v2906
        %v2981 = vadd.f32 %v2590, %v2911
        %v2982 = vadd.f32 %v2591, %v2916
        %v2983 = vadd.f32 %v2592, %v2921
        %v2984 = vadd.f32 %v2593, %v2926
        %v2985 = vadd.f32 %v2594, %v2931
        %v2986 = vadd.f32 %v2595, %v2936
        %v2987 = vadd.f32 %v2596, %v2941
        %v2988 = vadd.f32 %v2597, %v2946
        %v2989 = vadd.f32 %v2598, %v2951
        %v2990 = vadd.f32 %v2599, %v2956
        %v2991 = vld [vmem:[%s2600 + $0x1] sm:$0xff]
        %v2992 = vld [vmem:[%s2600 + $0x9] sm:$0xff]
        %v2993 = vld [vmem:[%s2600 + $0x19] sm:$0xff]
        %v2994 = vld [vmem:[%s2600 + $0x21] sm:$0xff]
        %v2995 = vld [vmem:[%s2600 + $0x31] sm:$0xff]
        %v2996 = vld [vmem:[%s2600 + $0x39] sm:$0xff]
        %v2997 = vld [vmem:[%s2600 + $0x49] sm:$0xff]
        %v2998 = vld [vmem:[%s2600 + $0x51] sm:$0xff]
        %v2999 = vld [vmem:[%s2600 + $0x61] sm:$0xff]
        %v3000 = vld [vmem:[%s2600 + $0x69] sm:$0xff]
        %v3001 = vld [vmem:[%s2600 + $0x79] sm:$0xff]
        %v3002 = vld [vmem:[%s2600 + $0x81] sm:$0xff]
        %v3003 = vld [vmem:[%s2600 + $0x91] sm:$0xff]
        %v3004 = vld [vmem:[%s2600 + $0x99] sm:$0xff]
        %v3005 = vld [vmem:[%s2600 + $0xa9] sm:$0xff]
        %v3006 = vld [vmem:[%s2600 + $0xb1] sm:$0xff]
        %v3007 = vld [vmem:[%s2600 + $0xc1] sm:$0xff]
        %v3008 = vld [vmem:[%s2600 + $0xc9] sm:$0xff]
        %v3009 = vld [vmem:[%s2600 + $0xd9] sm:$0xff]
        %v3010 = vld [vmem:[%s2600 + $0xe1] sm:$0xff]
        %v3011 = vld [vmem:[%s2600 + $0xf1] sm:$0xff]
        %v3012 = vld [vmem:[%s2600 + $0xf9] sm:$0xff]
        %v3013 = vld [vmem:[%s2600 + $0x109] sm:$0xff]
        %v3014 = vld [vmem:[%s2600 + $0x111] sm:$0xff]
        %v3015 = vld [vmem:[%s2600 + $0x121] sm:$0xff]
        %v3016 = vld [vmem:[%s2600 + $0x129] sm:$0xff]
        %v3017 = vld [vmem:[%s2600 + $0x139] sm:$0xff]
        %v3018 = vld [vmem:[%s2600 + $0x141] sm:$0xff]
        %v3019 = vld [vmem:[%s2600 + $0x151] sm:$0xff]
        %v3020 = vld [vmem:[%s2600 + $0x159] sm:$0xff]
        %v3021 = vld [vmem:[%s2600 + $0x169] sm:$0xff]
        %v3022 = vld [vmem:[%s2600 + $0x171] sm:$0xff]
        %s3023 = scalar_lea.vmem [#allocation6], 224
        %v3024 = vld [vmem:[%s3023] sm:$0xff]
        %v3025 = vld [vmem:[%s3023 + $0x8] sm:$0xff]
        %v3026 = vld [vmem:[%s3023 + $0x10] sm:$0xff]
        %v3027 = vld [vmem:[%s3023 + $0x18] sm:$0xff]
        %v3029 = vsel %vm236, %v2991, 0
        %v3032 = vsel %vm236, %v2992, 0
        %v3035 = vsel %vm236, %v2993, 0
        %v3038 = vsel %vm236, %v2994, 0
        %v3041 = vsel %vm236, %v2995, 0
        %v3044 = vsel %vm236, %v2996, 0
        %v3047 = vsel %vm236, %v2997, 0
        %v3050 = vsel %vm236, %v2998, 0
        %v3053 = vsel %vm236, %v2999, 0
        %v3056 = vsel %vm236, %v3000, 0
        %v3059 = vsel %vm236, %v3001, 0
        %v3062 = vsel %vm236, %v3002, 0
        %v3065 = vsel %vm236, %v3003, 0
        %v3068 = vsel %vm236, %v3004, 0
        %v3071 = vsel %vm236, %v3005, 0
        %v3074 = vsel %vm236, %v3006, 0
        %v3077 = vsel %vm236, %v3007, 0
        %v3080 = vsel %vm236, %v3008, 0
        %v3083 = vsel %vm236, %v3009, 0
        %v3086 = vsel %vm236, %v3010, 0
        %v3089 = vsel %vm236, %v3011, 0
        %v3092 = vsel %vm236, %v3012, 0
        %v3095 = vsel %vm236, %v3013, 0
        %v3098 = vsel %vm236, %v3014, 0
        %v3101 = vsel %vm236, %v3015, 0
        %v3104 = vsel %vm236, %v3016, 0
        %v3107 = vsel %vm236, %v3017, 0
        %v3110 = vsel %vm236, %v3018, 0
        %v3113 = vsel %vm236, %v3019, 0
        %v3116 = vsel %vm236, %v3020, 0
        %v3119 = vsel %vm236, %v3021, 0
        %v3122 = vsel %vm236, %v3022, 0
        %3124 = vmatprep.subr.mxu0 0.0
        %3125 = vmatpush1.msra.mxu0 %v3024
        %3126 = vmatprep.subr.mxu0 0.0
        %3127 = vmatpush1.msra.mxu0 %v3025
        %3128 = vmatprep.subr.mxu0 0.0
        %3129 = vmatpush1.msra.mxu0 %v3026
        %3130 = vmatprep.subr.mxu0 0.0
        %3131 = vmatpush1.msra.mxu0 %v3027
        %3132 = vmatprep.subr.mxu0 0.0
        %3133 = vmatpush1.msra.mxu0 0.0
        %3134 = vmatprep.subr.mxu0 0.0
        %3135 = vmatpush1.msra.mxu0 0.0
        %3136 = vmatprep.subr.mxu0 0.0
        %3137 = vmatpush1.msra.mxu0 0.0
        %3138 = vmatprep.subr.mxu0 0.0
        %3139 = vmatpush1.msra.mxu0 0.0
        %3140 = vmatprep.subr.mxu0 0.0
        %3141 = vmatpush1.msra.mxu0 0.0
        %3142 = vmatprep.subr.mxu0 0.0
        %3143 = vmatpush1.msra.mxu0 0.0
        %3144 = vmatprep.subr.mxu0 0.0
        %3145 = vmatpush1.msra.mxu0 0.0
        %3146 = vmatprep.subr.mxu0 0.0
        %3147 = vmatpush1.msra.mxu0 0.0
        %3148 = vmatprep.subr.mxu0 0.0
        %3149 = vmatpush1.msra.mxu0 0.0
        %3150 = vmatprep.subr.mxu0 0.0
        %3151 = vmatpush1.msra.mxu0 0.0
        %3152 = vmatprep.subr.mxu0 0.0
        %3153 = vmatpush1.msra.mxu0 0.0
        %3154 = vmatprep.subr.mxu0 0.0
        %3155 = vmatpush1.msra.mxu0 0.0
        %3156 = vmatprep.subr.mxu0 0.0
        %3157 = vmatpush1.msra.mxu0 0.0
        %3158 = vmatprep.subr.mxu0 0.0
        %3159 = vmatpush1.msra.mxu0 0.0
        %3160 = vmatprep.subr.mxu0 0.0
        %3161 = vmatpush1.msra.mxu0 0.0
        %3162 = vmatprep.subr.mxu0 0.0
        %3163 = vmatpush1.msra.mxu0 0.0
        %3164 = vmatprep.subr.mxu0 0.0
        %3165 = vmatpush1.msra.mxu0 0.0
        %3166 = vmatprep.subr.mxu0 0.0
        %3167 = vmatpush1.msra.mxu0 0.0
        %3168 = vmatprep.subr.mxu0 0.0
        %3169 = vmatpush1.msra.mxu0 0.0
        %3170 = vmatprep.subr.mxu0 0.0
        %3171 = vmatpush1.msra.mxu0 0.0
        %3172 = vmatprep.subr.mxu0 0.0
        %3173 = vmatpush1.msra.mxu0 0.0
        %3174 = vmatprep.subr.mxu0 0.0
        %3175 = vmatpush1.msra.mxu0 0.0
        %3176 = vmatprep.subr.mxu0 0.0
        %3177 = vmatpush1.msra.mxu0 0.0
        %3178 = vmatprep.subr.mxu0 0.0
        %3179 = vmatpush1.msra.mxu0 0.0
        %3180 = vmatprep.subr.mxu0 0.0
        %3181 = vmatpush1.msra.mxu0 0.0
        %3182 = vmatprep.subr.mxu0 0.0
        %3183 = vmatpush1.msra.mxu0 0.0
        %3184 = vmatprep.subr.mxu0 0.0
        %3185 = vmatpush1.msra.mxu0 0.0
        %3186 = vmatprep.subr.mxu0 0.0
        %3187 = vmatpush1.msra.mxu0 0.0
        %3188 = vmatprep.mubr.f32.mxu0 0.0
        %3189 = vmatmul.mubr.f32.gmra.mrb[0].mxu0 %v3029
        %v3190 = vpop.f32.mrb[0].mxu0
        %v3191 = vadd.f32 0.0, %v3190
        %v3192 = vpop.f32.mrb[0].mxu0
        %3193 = vmatprep.mubr.f32.mxu0 0.0
        %3194 = vmatmul.mubr.f32.gmra.mrb[0].mxu0 %v3032
        %v3195 = vpop.f32.mrb[0].mxu0
        %v3196 = vadd.f32 0.0, %v3195
        %v3197 = vpop.f32.mrb[0].mxu0
        %3198 = vmatprep.mubr.f32.mxu0 0.0
        %3199 = vmatmul.mubr.f32.gmra.mrb[0].mxu0 %v3035
        %v3200 = vpop.f32.mrb[0].mxu0
        %v3201 = vadd.f32 0.0, %v3200
        %v3202 = vpop.f32.mrb[0].mxu0
        %3203 = vmatprep.mubr.f32.mxu0 0.0
        %3204 = vmatmul.mubr.f32.gmra.mrb[0].mxu0 %v3038
        %v3205 = vpop.f32.mrb[0].mxu0
        %v3206 = vadd.f32 0.0, %v3205
        %v3207 = vpop.f32.mrb[0].mxu0
        %3208 = vmatprep.mubr.f32.mxu0 0.0
        %3209 = vmatmul.mubr.f32.gmra.mrb[0].mxu0 %v3041
        %v3210 = vpop.f32.mrb[0].mxu0
        %v3211 = vadd.f32 0.0, %v3210
        %v3212 = vpop.f32.mrb[0].mxu0
        %3213 = vmatprep.mubr.f32.mxu0 0.0
        %3214 = vmatmul.mubr.f32.gmra.mrb[0].mxu0 %v3044
        %v3215 = vpop.f32.mrb[0].mxu0
        %v3216 = vadd.f32 0.0, %v3215
        %v3217 = vpop.f32.mrb[0].mxu0
        %3218 = vmatprep.mubr.f32.mxu0 0.0
        %3219 = vmatmul.mubr.f32.gmra.mrb[0].mxu0 %v3047
        %v3220 = vpop.f32.mrb[0].mxu0
        %v3221 = vadd.f32 0.0, %v3220
        %v3222 = vpop.f32.mrb[0].mxu0
        %3223 = vmatprep.mubr.f32.mxu0 0.0
        %3224 = vmatmul.mubr.f32.gmra.mrb[0].mxu0 %v3050
        %v3225 = vpop.f32.mrb[0].mxu0
        %v3226 = vadd.f32 0.0, %v3225
        %v3227 = vpop.f32.mrb[0].mxu0
        %3228 = vmatprep.mubr.f32.mxu0 0.0
        %3229 = vmatmul.mubr.f32.gmra.mrb[0].mxu0 %v3053
        %v3230 = vpop.f32.mrb[0].mxu0
        %v3231 = vadd.f32 0.0, %v3230
        %v3232 = vpop.f32.mrb[0].mxu0
        %3233 = vmatprep.mubr.f32.mxu0 0.0
        %3234 = vmatmul.mubr.f32.gmra.mrb[0].mxu0 %v3056
        %v3235 = vpop.f32.mrb[0].mxu0
        %v3236 = vadd.f32 0.0, %v3235
        %v3237 = vpop.f32.mrb[0].mxu0
        %3238 = vmatprep.mubr.f32.mxu0 0.0
        %3239 = vmatmul.mubr.f32.gmra.mrb[0].mxu0 %v3059
        %v3240 = vpop.f32.mrb[0].mxu0
        %v3241 = vadd.f32 0.0, %v3240
        %v3242 = vpop.f32.mrb[0].mxu0
        %3243 = vmatprep.mubr.f32.mxu0 0.0
        %3244 = vmatmul.mubr.f32.gmra.mrb[0].mxu0 %v3062
        %v3245 = vpop.f32.mrb[0].mxu0
        %v3246 = vadd.f32 0.0, %v3245
        %v3247 = vpop.f32.mrb[0].mxu0
        %3248 = vmatprep.mubr.f32.mxu0 0.0
        %3249 = vmatmul.mubr.f32.gmra.mrb[0].mxu0 %v3065
        %v3250 = vpop.f32.mrb[0].mxu0
        %v3251 = vadd.f32 0.0, %v3250
        %v3252 = vpop.f32.mrb[0].mxu0
        %3253 = vmatprep.mubr.f32.mxu0 0.0
        %3254 = vmatmul.mubr.f32.gmra.mrb[0].mxu0 %v3068
        %v3255 = vpop.f32.mrb[0].mxu0
        %v3256 = vadd.f32 0.0, %v3255
        %v3257 = vpop.f32.mrb[0].mxu0
        %3258 = vmatprep.mubr.f32.mxu0 0.0
        %3259 = vmatmul.mubr.f32.gmra.mrb[0].mxu0 %v3071
        %v3260 = vpop.f32.mrb[0].mxu0
        %v3261 = vadd.f32 0.0, %v3260
        %v3262 = vpop.f32.mrb[0].mxu0
        %3263 = vmatprep.mubr.f32.mxu0 0.0
        %3264 = vmatmul.mubr.f32.gmra.mrb[0].mxu0 %v3074
        %v3265 = vpop.f32.mrb[0].mxu0
        %v3266 = vadd.f32 0.0, %v3265
        %v3267 = vpop.f32.mrb[0].mxu0
        %3268 = vmatprep.mubr.f32.mxu0 0.0
        %3269 = vmatmul.mubr.f32.gmra.mrb[0].mxu0 %v3077
        %v3270 = vpop.f32.mrb[0].mxu0
        %v3271 = vadd.f32 0.0, %v3270
        %v3272 = vpop.f32.mrb[0].mxu0
        %3273 = vmatprep.mubr.f32.mxu0 0.0
        %3274 = vmatmul.mubr.f32.gmra.mrb[0].mxu0 %v3080
        %v3275 = vpop.f32.mrb[0].mxu0
        %v3276 = vadd.f32 0.0, %v3275
        %v3277 = vpop.f32.mrb[0].mxu0
        %3278 = vmatprep.mubr.f32.mxu0 0.0
        %3279 = vmatmul.mubr.f32.gmra.mrb[0].mxu0 %v3083
        %v3280 = vpop.f32.mrb[0].mxu0
        %v3281 = vadd.f32 0.0, %v3280
        %v3282 = vpop.f32.mrb[0].mxu0
        %3283 = vmatprep.mubr.f32.mxu0 0.0
        %3284 = vmatmul.mubr.f32.gmra.mrb[0].mxu0 %v3086
        %v3285 = vpop.f32.mrb[0].mxu0
        %v3286 = vadd.f32 0.0, %v3285
        %v3287 = vpop.f32.mrb[0].mxu0
        %3288 = vmatprep.mubr.f32.mxu0 0.0
        %3289 = vmatmul.mubr.f32.gmra.mrb[0].mxu0 %v3089
        %v3290 = vpop.f32.mrb[0].mxu0
        %v3291 = vadd.f32 0.0, %v3290
        %v3292 = vpop.f32.mrb[0].mxu0
        %3293 = vmatprep.mubr.f32.mxu0 0.0
        %3294 = vmatmul.mubr.f32.gmra.mrb[0].mxu0 %v3092
        %v3295 = vpop.f32.mrb[0].mxu0
        %v3296 = vadd.f32 0.0, %v3295
        %v3297 = vpop.f32.mrb[0].mxu0
        %3298 = vmatprep.mubr.f32.mxu0 0.0
        %3299 = vmatmul.mubr.f32.gmra.mrb[0].mxu0 %v3095
        %v3300 = vpop.f32.mrb[0].mxu0
        %v3301 = vadd.f32 0.0, %v3300
        %v3302 = vpop.f32.mrb[0].mxu0
        %3303 = vmatprep.mubr.f32.mxu0 0.0
        %3304 = vmatmul.mubr.f32.gmra.mrb[0].mxu0 %v3098
        %v3305 = vpop.f32.mrb[0].mxu0
        %v3306 = vadd.f32 0.0, %v3305
        %v3307 = vpop.f32.mrb[0].mxu0
        %3308 = vmatprep.mubr.f32.mxu0 0.0
        %3309 = vmatmul.mubr.f32.gmra.mrb[0].mxu0 %v3101
        %v3310 = vpop.f32.mrb[0].mxu0
        %v3311 = vadd.f32 0.0, %v3310
        %v3312 = vpop.f32.mrb[0].mxu0
        %3313 = vmatprep.mubr.f32.mxu0 0.0
        %3314 = vmatmul.mubr.f32.gmra.mrb[0].mxu0 %v3104
        %v3315 = vpop.f32.mrb[0].mxu0
        %v3316 = vadd.f32 0.0, %v3315
        %v3317 = vpop.f32.mrb[0].mxu0
        %3318 = vmatprep.mubr.f32.mxu0 0.0
        %3319 = vmatmul.mubr.f32.gmra.mrb[0].mxu0 %v3107
        %v3320 = vpop.f32.mrb[0].mxu0
        %v3321 = vadd.f32 0.0, %v3320
        %v3322 = vpop.f32.mrb[0].mxu0
        %3323 = vmatprep.mubr.f32.mxu0 0.0
        %3324 = vmatmul.mubr.f32.gmra.mrb[0].mxu0 %v3110
        %v3325 = vpop.f32.mrb[0].mxu0
        %v3326 = vadd.f32 0.0, %v3325
        %v3327 = vpop.f32.mrb[0].mxu0
        %3328 = vmatprep.mubr.f32.mxu0 0.0
        %3329 = vmatmul.mubr.f32.gmra.mrb[0].mxu0 %v3113
        %v3330 = vpop.f32.mrb[0].mxu0
        %v3331 = vadd.f32 0.0, %v3330
        %v3332 = vpop.f32.mrb[0].mxu0
        %3333 = vmatprep.mubr.f32.mxu0 0.0
        %3334 = vmatmul.mubr.f32.gmra.mrb[0].mxu0 %v3116
        %v3335 = vpop.f32.mrb[0].mxu0
        %v3336 = vadd.f32 0.0, %v3335
        %v3337 = vpop.f32.mrb[0].mxu0
        %3338 = vmatprep.mubr.f32.mxu0 0.0
        %3339 = vmatmul.mubr.f32.gmra.mrb[0].mxu0 %v3119
        %v3340 = vpop.f32.mrb[0].mxu0
        %v3341 = vadd.f32 0.0, %v3340
        %v3342 = vpop.f32.mrb[0].mxu0
        %3343 = vmatprep.mubr.f32.mxu0 0.0
        %3344 = vmatmul.mubr.f32.gmra.mrb[0].mxu0 %v3122
        %v3345 = vpop.f32.mrb[0].mxu0
        %v3346 = vadd.f32 0.0, %v3345
        %v3347 = vpop.f32.mrb[0].mxu0
        %3348 = vdwg.mxu0
        %v3349 = vadd.f32 %v2959, %v3191
        %v3350 = vadd.f32 %v2960, %v3196
        %v3351 = vadd.f32 %v2961, %v3201
        %v3352 = vadd.f32 %v2962, %v3206
        %v3353 = vadd.f32 %v2963, %v3211
        %v3354 = vadd.f32 %v2964, %v3216
        %v3355 = vadd.f32 %v2965, %v3221
        %v3356 = vadd.f32 %v2966, %v3226
        %v3357 = vadd.f32 %v2967, %v3231
        %v3358 = vadd.f32 %v2968, %v3236
        %v3359 = vadd.f32 %v2969, %v3241
        %v3360 = vadd.f32 %v2970, %v3246
        %v3361 = vadd.f32 %v2971, %v3251
        %v3362 = vadd.f32 %v2972, %v3256
        %v3363 = vadd.f32 %v2973, %v3261
        %v3364 = vadd.f32 %v2974, %v3266
        %v3365 = vadd.f32 %v2975, %v3271
        %v3366 = vadd.f32 %v2976, %v3276
        %v3367 = vadd.f32 %v2977, %v3281
        %v3368 = vadd.f32 %v2978, %v3286
        %v3369 = vadd.f32 %v2979, %v3291
        %v3370 = vadd.f32 %v2980, %v3296
        %v3371 = vadd.f32 %v2981, %v3301
        %v3372 = vadd.f32 %v2982, %v3306
        %v3373 = vadd.f32 %v2983, %v3311
        %v3374 = vadd.f32 %v2984, %v3316
        %v3375 = vadd.f32 %v2985, %v3321
        %v3376 = vadd.f32 %v2986, %v3326
        %v3377 = vadd.f32 %v2987, %v3331
        %v3378 = vadd.f32 %v2988, %v3336
        %v3379 = vadd.f32 %v2989, %v3341
        %v3380 = vadd.f32 %v2990, %v3346
        %v3381 = vld [vmem:[%s2600 + $0x2] sm:$0xff]
        %v3382 = vld [vmem:[%s2600 + $0xa] sm:$0xff]
        %v3383 = vld [vmem:[%s2600 + $0x1a] sm:$0xff]
        %v3384 = vld [vmem:[%s2600 + $0x22] sm:$0xff]
        %v3385 = vld [vmem:[%s2600 + $0x32] sm:$0xff]
        %v3386 = vld [vmem:[%s2600 + $0x3a] sm:$0xff]
        %v3387 = vld [vmem:[%s2600 + $0x4a] sm:$0xff]
        %v3388 = vld [vmem:[%s2600 + $0x52] sm:$0xff]
        %v3389 = vld [vmem:[%s2600 + $0x62] sm:$0xff]
        %v3390 = vld [vmem:[%s2600 + $0x6a] sm:$0xff]
        %v3391 = vld [vmem:[%s2600 + $0x7a] sm:$0xff]
        %v3392 = vld [vmem:[%s2600 + $0x82] sm:$0xff]
        %v3393 = vld [vmem:[%s2600 + $0x92] sm:$0xff]
        %v3394 = vld [vmem:[%s2600 + $0x9a] sm:$0xff]
        %v3395 = vld [vmem:[%s2600 + $0xaa] sm:$0xff]
        %v3396 = vld [vmem:[%s2600 + $0xb2] sm:$0xff]
        %v3397 = vld [vmem:[%s2600 + $0xc2] sm:$0xff]
        %v3398 = vld [vmem:[%s2600 + $0xca] sm:$0xff]
        %v3399 = vld [vmem:[%s2600 + $0xda] sm:$0xff]
        %v3400 = vld [vmem:[%s2600 + $0xe2] sm:$0xff]
        %v3401 = vld [vmem:[%s2600 + $0xf2] sm:$0xff]
        %v3402 = vld [vmem:[%s2600 + $0xfa] sm:$0xff]
        %v3403 = vld [vmem:[%s2600 + $0x10a] sm:$0xff]
        %v3404 = vld [vmem:[%s2600 + $0x112] sm:$0xff]
        %v3405 = vld [vmem:[%s2600 + $0x122] sm:$0xff]
        %v3406 = vld [vmem:[%s2600 + $0x12a] sm:$0xff]
        %v3407 = vld [vmem:[%s2600 + $0x13a] sm:$0xff]
        %v3408 = vld [vmem:[%s2600 + $0x142] sm:$0xff]
        %v3409 = vld [vmem:[%s2600 + $0x152] sm:$0xff]
        %v3410 = vld [vmem:[%s2600 + $0x15a] sm:$0xff]
        %v3411 = vld [vmem:[%s2600 + $0x16a] sm:$0xff]
        %v3412 = vld [vmem:[%s2600 + $0x172] sm:$0xff]
        %s3413 = scalar_lea.vmem [#allocation6], 256
        %v3414 = vld [vmem:[%s3413] sm:$0xff]
        %v3415 = vld [vmem:[%s3413 + $0x8] sm:$0xff]
        %v3416 = vld [vmem:[%s3413 + $0x10] sm:$0xff]
        %v3417 = vld [vmem:[%s3413 + $0x18] sm:$0xff]
        %v3419 = vsel %vm236, %v3381, 0
        %v3422 = vsel %vm236, %v3382, 0
        %v3425 = vsel %vm236, %v3383, 0
        %v3428 = vsel %vm236, %v3384, 0
        %v3431 = vsel %vm236, %v3385, 0
        %v3434 = vsel %vm236, %v3386, 0
        %v3437 = vsel %vm236, %v3387, 0
        %v3440 = vsel %vm236, %v3388, 0
        %v3443 = vsel %vm236, %v3389, 0
        %v3446 = vsel %vm236, %v3390, 0
        %v3449 = vsel %vm236, %v3391, 0
        %v3452 = vsel %vm236, %v3392, 0
        %v3455 = vsel %vm236, %v3393, 0
        %v3458 = vsel %vm236, %v3394, 0
        %v3461 = vsel %vm236, %v3395, 0
        %v3464 = vsel %vm236, %v3396, 0
        %v3467 = vsel %vm236, %v3397, 0
        %v3470 = vsel %vm236, %v3398, 0
        %v3473 = vsel %vm236, %v3399, 0
        %v3476 = vsel %vm236, %v3400, 0
        %v3479 = vsel %vm236, %v3401, 0
        %v3482 = vsel %vm236, %v3402, 0
        %v3485 = vsel %vm236, %v3403, 0
        %v3488 = vsel %vm236, %v3404, 0
        %v3491 = vsel %vm236, %v3405, 0
        %v3494 = vsel %vm236, %v3406, 0
        %v3497 = vsel %vm236, %v3407, 0
        %v3500 = vsel %vm236, %v3408, 0
        %v3503 = vsel %vm236, %v3409, 0
        %v3506 = vsel %vm236, %v3410, 0
        %v3509 = vsel %vm236, %v3411, 0
        %v3512 = vsel %vm236, %v3412, 0
        %3514 = vmatprep.subr.mxu0 0.0
        %3515 = vmatpush1.msra.mxu0 %v3414
        %3516 = vmatprep.subr.mxu0 0.0
        %3517 = vmatpush1.msra.mxu0 %v3415
        %3518 = vmatprep.subr.mxu0 0.0
        %3519 = vmatpush1.msra.mxu0 %v3416
        %3520 = vmatprep.subr.mxu0 0.0
        %3521 = vmatpush1.msra.mxu0 %v3417
        %3522 = vmatprep.subr.mxu0 0.0
        %3523 = vmatpush1.msra.mxu0 0.0
        %3524 = vmatprep.subr.mxu0 0.0
        %3525 = vmatpush1.msra.mxu0 0.0
        %3526 = vmatprep.subr.mxu0 0.0
        %3527 = vmatpush1.msra.mxu0 0.0
        %3528 = vmatprep.subr.mxu0 0.0
        %3529 = vmatpush1.msra.mxu0 0.0
        %3530 = vmatprep.subr.mxu0 0.0
        %3531 = vmatpush1.msra.mxu0 0.0
        %3532 = vmatprep.subr.mxu0 0.0
        %3533 = vmatpush1.msra.mxu0 0.0
        %3534 = vmatprep.subr.mxu0 0.0
        %3535 = vmatpush1.msra.mxu0 0.0
        %3536 = vmatprep.subr.mxu0 0.0
        %3537 = vmatpush1.msra.mxu0 0.0
        %3538 = vmatprep.subr.mxu0 0.0
        %3539 = vmatpush1.msra.mxu0 0.0
        %3540 = vmatprep.subr.mxu0 0.0
        %3541 = vmatpush1.msra.mxu0 0.0
        %3542 = vmatprep.subr.mxu0 0.0
        %3543 = vmatpush1.msra.mxu0 0.0
        %3544 = vmatprep.subr.mxu0 0.0
        %3545 = vmatpush1.msra.mxu0 0.0
        %3546 = vmatprep.subr.mxu0 0.0
        %3547 = vmatpush1.msra.mxu0 0.0
        %3548 = vmatprep.subr.mxu0 0.0
        %3549 = vmatpush1.msra.mxu0 0.0
        %3550 = vmatprep.subr.mxu0 0.0
        %3551 = vmatpush1.msra.mxu0 0.0
        %3552 = vmatprep.subr.mxu0 0.0
        %3553 = vmatpush1.msra.mxu0 0.0
        %3554 = vmatprep.subr.mxu0 0.0
        %3555 = vmatpush1.msra.mxu0 0.0
        %3556 = vmatprep.subr.mxu0 0.0
        %3557 = vmatpush1.msra.mxu0 0.0
        %3558 = vmatprep.subr.mxu0 0.0
        %3559 = vmatpush1.msra.mxu0 0.0
        %3560 = vmatprep.subr.mxu0 0.0
        %3561 = vmatpush1.msra.mxu0 0.0
        %3562 = vmatprep.subr.mxu0 0.0
        %3563 = vmatpush1.msra.mxu0 0.0
        %3564 = vmatprep.subr.mxu0 0.0
        %3565 = vmatpush1.msra.mxu0 0.0
        %3566 = vmatprep.subr.mxu0 0.0
        %3567 = vmatpush1.msra.mxu0 0.0
        %3568 = vmatprep.subr.mxu0 0.0
        %3569 = vmatpush1.msra.mxu0 0.0
        %3570 = vmatprep.subr.mxu0 0.0
        %3571 = vmatpush1.msra.mxu0 0.0
        %3572 = vmatprep.subr.mxu0 0.0
        %3573 = vmatpush1.msra.mxu0 0.0
        %3574 = vmatprep.subr.mxu0 0.0
        %3575 = vmatpush1.msra.mxu0 0.0
        %3576 = vmatprep.subr.mxu0 0.0
        %3577 = vmatpush1.msra.mxu0 0.0
        %3578 = vmatprep.mubr.f32.mxu0 0.0
        %3579 = vmatmul.mubr.f32.gmra.mrb[0].mxu0 %v3419
        %v3580 = vpop.f32.mrb[0].mxu0
        %v3581 = vadd.f32 0.0, %v3580
        %v3582 = vpop.f32.mrb[0].mxu0
        %3583 = vmatprep.mubr.f32.mxu0 0.0
        %3584 = vmatmul.mubr.f32.gmra.mrb[0].mxu0 %v3422
        %v3585 = vpop.f32.mrb[0].mxu0
        %v3586 = vadd.f32 0.0, %v3585
        %v3587 = vpop.f32.mrb[0].mxu0
        %3588 = vmatprep.mubr.f32.mxu0 0.0
        %3589 = vmatmul.mubr.f32.gmra.mrb[0].mxu0 %v3425
        %v3590 = vpop.f32.mrb[0].mxu0
        %v3591 = vadd.f32 0.0, %v3590
        %v3592 = vpop.f32.mrb[0].mxu0
        %3593 = vmatprep.mubr.f32.mxu0 0.0
        %3594 = vmatmul.mubr.f32.gmra.mrb[0].mxu0 %v3428
        %v3595 = vpop.f32.mrb[0].mxu0
        %v3596 = vadd.f32 0.0, %v3595
        %v3597 = vpop.f32.mrb[0].mxu0
        %3598 = vmatprep.mubr.f32.mxu0 0.0
        %3599 = vmatmul.mubr.f32.gmra.mrb[0].mxu0 %v3431
        %v3600 = vpop.f32.mrb[0].mxu0
        %v3601 = vadd.f32 0.0, %v3600
        %v3602 = vpop.f32.mrb[0].mxu0
        %3603 = vmatprep.mubr.f32.mxu0 0.0
        %3604 = vmatmul.mubr.f32.gmra.mrb[0].mxu0 %v3434
        %v3605 = vpop.f32.mrb[0].mxu0
        %v3606 = vadd.f32 0.0, %v3605
        %v3607 = vpop.f32.mrb[0].mxu0
        %3608 = vmatprep.mubr.f32.mxu0 0.0
        %3609 = vmatmul.mubr.f32.gmra.mrb[0].mxu0 %v3437
        %v3610 = vpop.f32.mrb[0].mxu0
        %v3611 = vadd.f32 0.0, %v3610
        %v3612 = vpop.f32.mrb[0].mxu0
        %3613 = vmatprep.mubr.f32.mxu0 0.0
        %3614 = vmatmul.mubr.f32.gmra.mrb[0].mxu0 %v3440
        %v3615 = vpop.f32.mrb[0].mxu0
        %v3616 = vadd.f32 0.0, %v3615
        %v3617 = vpop.f32.mrb[0].mxu0
        %3618 = vmatprep.mubr.f32.mxu0 0.0
        %3619 = vmatmul.mubr.f32.gmra.mrb[0].mxu0 %v3443
        %v3620 = vpop.f32.mrb[0].mxu0
        %v3621 = vadd.f32 0.0, %v3620
        %v3622 = vpop.f32.mrb[0].mxu0
        %3623 = vmatprep.mubr.f32.mxu0 0.0
        %3624 = vmatmul.mubr.f32.gmra.mrb[0].mxu0 %v3446
        %v3625 = vpop.f32.mrb[0].mxu0
        %v3626 = vadd.f32 0.0, %v3625
        %v3627 = vpop.f32.mrb[0].mxu0
        %3628 = vmatprep.mubr.f32.mxu0 0.0
        %3629 = vmatmul.mubr.f32.gmra.mrb[0].mxu0 %v3449
        %v3630 = vpop.f32.mrb[0].mxu0
        %v3631 = vadd.f32 0.0, %v3630
        %v3632 = vpop.f32.mrb[0].mxu0
        %3633 = vmatprep.mubr.f32.mxu0 0.0
        %3634 = vmatmul.mubr.f32.gmra.mrb[0].mxu0 %v3452
        %v3635 = vpop.f32.mrb[0].mxu0
        %v3636 = vadd.f32 0.0, %v3635
        %v3637 = vpop.f32.mrb[0].mxu0
        %3638 = vmatprep.mubr.f32.mxu0 0.0
        %3639 = vmatmul.mubr.f32.gmra.mrb[0].mxu0 %v3455
        %v3640 = vpop.f32.mrb[0].mxu0
        %v3641 = vadd.f32 0.0, %v3640
        %v3642 = vpop.f32.mrb[0].mxu0
        %3643 = vmatprep.mubr.f32.mxu0 0.0
        %3644 = vmatmul.mubr.f32.gmra.mrb[0].mxu0 %v3458
        %v3645 = vpop.f32.mrb[0].mxu0
        %v3646 = vadd.f32 0.0, %v3645
        %v3647 = vpop.f32.mrb[0].mxu0
        %3648 = vmatprep.mubr.f32.mxu0 0.0
        %3649 = vmatmul.mubr.f32.gmra.mrb[0].mxu0 %v3461
        %v3650 = vpop.f32.mrb[0].mxu0
        %v3651 = vadd.f32 0.0, %v3650
        %v3652 = vpop.f32.mrb[0].mxu0
        %3653 = vmatprep.mubr.f32.mxu0 0.0
        %3654 = vmatmul.mubr.f32.gmra.mrb[0].mxu0 %v3464
        %v3655 = vpop.f32.mrb[0].mxu0
        %v3656 = vadd.f32 0.0, %v3655
        %v3657 = vpop.f32.mrb[0].mxu0
        %3658 = vmatprep.mubr.f32.mxu0 0.0
        %3659 = vmatmul.mubr.f32.gmra.mrb[0].mxu0 %v3467
        %v3660 = vpop.f32.mrb[0].mxu0
        %v3661 = vadd.f32 0.0, %v3660
        %v3662 = vpop.f32.mrb[0].mxu0
        %3663 = vmatprep.mubr.f32.mxu0 0.0
        %3664 = vmatmul.mubr.f32.gmra.mrb[0].mxu0 %v3470
        %v3665 = vpop.f32.mrb[0].mxu0
        %v3666 = vadd.f32 0.0, %v3665
        %v3667 = vpop.f32.mrb[0].mxu0
        %3668 = vmatprep.mubr.f32.mxu0 0.0
        %3669 = vmatmul.mubr.f32.gmra.mrb[0].mxu0 %v3473
        %v3670 = vpop.f32.mrb[0].mxu0
        %v3671 = vadd.f32 0.0, %v3670
        %v3672 = vpop.f32.mrb[0].mxu0
        %3673 = vmatprep.mubr.f32.mxu0 0.0
        %3674 = vmatmul.mubr.f32.gmra.mrb[0].mxu0 %v3476
        %v3675 = vpop.f32.mrb[0].mxu0
        %v3676 = vadd.f32 0.0, %v3675
        %v3677 = vpop.f32.mrb[0].mxu0
        %3678 = vmatprep.mubr.f32.mxu0 0.0
        %3679 = vmatmul.mubr.f32.gmra.mrb[0].mxu0 %v3479
        %v3680 = vpop.f32.mrb[0].mxu0
        %v3681 = vadd.f32 0.0, %v3680
        %v3682 = vpop.f32.mrb[0].mxu0
        %3683 = vmatprep.mubr.f32.mxu0 0.0
        %3684 = vmatmul.mubr.f32.gmra.mrb[0].mxu0 %v3482
        %v3685 = vpop.f32.mrb[0].mxu0
        %v3686 = vadd.f32 0.0, %v3685
        %v3687 = vpop.f32.mrb[0].mxu0
        %3688 = vmatprep.mubr.f32.mxu0 0.0
        %3689 = vmatmul.mubr.f32.gmra.mrb[0].mxu0 %v3485
        %v3690 = vpop.f32.mrb[0].mxu0
        %v3691 = vadd.f32 0.0, %v3690
        %v3692 = vpop.f32.mrb[0].mxu0
        %3693 = vmatprep.mubr.f32.mxu0 0.0
        %3694 = vmatmul.mubr.f32.gmra.mrb[0].mxu0 %v3488
        %v3695 = vpop.f32.mrb[0].mxu0
        %v3696 = vadd.f32 0.0, %v3695
        %v3697 = vpop.f32.mrb[0].mxu0
        %3698 = vmatprep.mubr.f32.mxu0 0.0
        %3699 = vmatmul.mubr.f32.gmra.mrb[0].mxu0 %v3491
        %v3700 = vpop.f32.mrb[0].mxu0
        %v3701 = vadd.f32 0.0, %v3700
        %v3702 = vpop.f32.mrb[0].mxu0
        %3703 = vmatprep.mubr.f32.mxu0 0.0
        %3704 = vmatmul.mubr.f32.gmra.mrb[0].mxu0 %v3494
        %v3705 = vpop.f32.mrb[0].mxu0
        %v3706 = vadd.f32 0.0, %v3705
        %v3707 = vpop.f32.mrb[0].mxu0
        %3708 = vmatprep.mubr.f32.mxu0 0.0
        %3709 = vmatmul.mubr.f32.gmra.mrb[0].mxu0 %v3497
        %v3710 = vpop.f32.mrb[0].mxu0
        %v3711 = vadd.f32 0.0, %v3710
        %v3712 = vpop.f32.mrb[0].mxu0
        %3713 = vmatprep.mubr.f32.mxu0 0.0
        %3714 = vmatmul.mubr.f32.gmra.mrb[0].mxu0 %v3500
        %v3715 = vpop.f32.mrb[0].mxu0
        %v3716 = vadd.f32 0.0, %v3715
        %v3717 = vpop.f32.mrb[0].mxu0
        %3718 = vmatprep.mubr.f32.mxu0 0.0
        %3719 = vmatmul.mubr.f32.gmra.mrb[0].mxu0 %v3503
        %v3720 = vpop.f32.mrb[0].mxu0
        %v3721 = vadd.f32 0.0, %v3720
        %v3722 = vpop.f32.mrb[0].mxu0
        %3723 = vmatprep.mubr.f32.mxu0 0.0
        %3724 = vmatmul.mubr.f32.gmra.mrb[0].mxu0 %v3506
        %v3725 = vpop.f32.mrb[0].mxu0
        %v3726 = vadd.f32 0.0, %v3725
        %v3727 = vpop.f32.mrb[0].mxu0
        %3728 = vmatprep.mubr.f32.mxu0 0.0
        %3729 = vmatmul.mubr.f32.gmra.mrb[0].mxu0 %v3509
        %v3730 = vpop.f32.mrb[0].mxu0
        %v3731 = vadd.f32 0.0, %v3730
        %v3732 = vpop.f32.mrb[0].mxu0
        %3733 = vmatprep.mubr.f32.mxu0 0.0
        %3734 = vmatmul.mubr.f32.gmra.mrb[0].mxu0 %v3512
        %v3735 = vpop.f32.mrb[0].mxu0
        %v3736 = vadd.f32 0.0, %v3735
        %v3737 = vpop.f32.mrb[0].mxu0
        %3738 = vdwg.mxu0
        %v3739 = vadd.f32 %v3349, %v3581
        %v3740 = vadd.f32 %v3350, %v3586
        %v3741 = vadd.f32 %v3351, %v3591
        %v3742 = vadd.f32 %v3352, %v3596
        %v3743 = vadd.f32 %v3353, %v3601
        %v3744 = vadd.f32 %v3354, %v3606
        %v3745 = vadd.f32 %v3355, %v3611
        %v3746 = vadd.f32 %v3356, %v3616
        %v3747 = vadd.f32 %v3357, %v3621
        %v3748 = vadd.f32 %v3358, %v3626
        %v3749 = vadd.f32 %v3359, %v3631
        %v3750 = vadd.f32 %v3360, %v3636
        %v3751 = vadd.f32 %v3361, %v3641
        %v3752 = vadd.f32 %v3362, %v3646
        %v3753 = vadd.f32 %v3363, %v3651
        %v3754 = vadd.f32 %v3364, %v3656
        %v3755 = vadd.f32 %v3365, %v3661
        %v3756 = vadd.f32 %v3366, %v3666
        %v3757 = vadd.f32 %v3367, %v3671
        %v3758 = vadd.f32 %v3368, %v3676
        %v3759 = vadd.f32 %v3369, %v3681
        %v3760 = vadd.f32 %v3370, %v3686
        %v3761 = vadd.f32 %v3371, %v3691
        %v3762 = vadd.f32 %v3372, %v3696
        %v3763 = vadd.f32 %v3373, %v3701
        %v3764 = vadd.f32 %v3374, %v3706
        %v3765 = vadd.f32 %v3375, %v3711
        %v3766 = vadd.f32 %v3376, %v3716
        %v3767 = vadd.f32 %v3377, %v3721
        %v3768 = vadd.f32 %v3378, %v3726
        %v3769 = vadd.f32 %v3379, %v3731
        %v3770 = vadd.f32 %v3380, %v3736
        %v3771 = vld [vmem:[%s2] sm:$0x1]
        %v3773 = vlaneseq
        %v3774 = vshrl.u32 %v3773, 7
        %v3775 = vsub.s32 0, %v3774
        %v3776 = vrot.slane %v3771, %v3775
        %v3778 = vadd.f32 %v3739, %v3776
        %v3779 = vadd.f32 %v3740, %v3776
        %v3780 = vadd.f32 %v3741, %v3776
        %v3781 = vadd.f32 %v3742, %v3776
        %v3782 = vadd.f32 %v3743, %v3776
        %v3783 = vadd.f32 %v3744, %v3776
        %v3784 = vadd.f32 %v3745, %v3776
        %v3785 = vadd.f32 %v3746, %v3776
        %v3786 = vadd.f32 %v3747, %v3776
        %v3787 = vadd.f32 %v3748, %v3776
        %v3788 = vadd.f32 %v3749, %v3776
        %v3789 = vadd.f32 %v3750, %v3776
        %v3790 = vadd.f32 %v3751, %v3776
        %v3791 = vadd.f32 %v3752, %v3776
        %v3792 = vadd.f32 %v3753, %v3776
        %v3793 = vadd.f32 %v3754, %v3776
        %v3794 = vadd.f32 %v3755, %v3776
        %v3795 = vadd.f32 %v3756, %v3776
        %v3796 = vadd.f32 %v3757, %v3776
        %v3797 = vadd.f32 %v3758, %v3776
        %v3798 = vadd.f32 %v3759, %v3776
        %v3799 = vadd.f32 %v3760, %v3776
        %v3800 = vadd.f32 %v3761, %v3776
        %v3801 = vadd.f32 %v3762, %v3776
        %v3802 = vadd.f32 %v3763, %v3776
        %v3803 = vadd.f32 %v3764, %v3776
        %v3804 = vadd.f32 %v3765, %v3776
        %v3805 = vadd.f32 %v3766, %v3776
        %v3806 = vadd.f32 %v3767, %v3776
        %v3807 = vadd.f32 %v3768, %v3776
        %v3808 = vadd.f32 %v3769, %v3776
        %v3809 = vadd.f32 %v3770, %v3776
        %3810 = vst.msk [vmem:[%s203] sm:$0xff] %vm236, %v3778
        %3811 = vst.msk [vmem:[%s203 + $0x8] sm:$0xff] %vm236, %v3779
        %3812 = vst.msk [vmem:[%s203 + $0x10] sm:$0xff] %vm236, %v3780
        %3813 = vst.msk [vmem:[%s203 + $0x18] sm:$0xff] %vm236, %v3781
        %3814 = vst.msk [vmem:[%s203 + $0x20] sm:$0xff] %vm236, %v3782
        %3815 = vst.msk [vmem:[%s203 + $0x28] sm:$0xff] %vm236, %v3783
        %3816 = vst.msk [vmem:[%s203 + $0x30] sm:$0xff] %vm236, %v3784
        %3817 = vst.msk [vmem:[%s203 + $0x38] sm:$0xff] %vm236, %v3785
        %3818 = vst.msk [vmem:[%s203 + $0x40] sm:$0xff] %vm236, %v3786
        %3819 = vst.msk [vmem:[%s203 + $0x48] sm:$0xff] %vm236, %v3787
        %3820 = vst.msk [vmem:[%s203 + $0x50] sm:$0xff] %vm236, %v3788
        %3821 = vst.msk [vmem:[%s203 + $0x58] sm:$0xff] %vm236, %v3789
        %3822 = vst.msk [vmem:[%s203 + $0x60] sm:$0xff] %vm236, %v3790
        %3823 = vst.msk [vmem:[%s203 + $0x68] sm:$0xff] %vm236, %v3791
        %3824 = vst.msk [vmem:[%s203 + $0x70] sm:$0xff] %vm236, %v3792
        %3825 = vst.msk [vmem:[%s203 + $0x78] sm:$0xff] %vm236, %v3793
        %3826 = vst.msk [vmem:[%s203 + $0x80] sm:$0xff] %vm236, %v3794
        %3827 = vst.msk [vmem:[%s203 + $0x88] sm:$0xff] %vm236, %v3795
        %3828 = vst.msk [vmem:[%s203 + $0x90] sm:$0xff] %vm236, %v3796
        %3829 = vst.msk [vmem:[%s203 + $0x98] sm:$0xff] %vm236, %v3797
        %3830 = vst.msk [vmem:[%s203 + $0xa0] sm:$0xff] %vm236, %v3798
        %3831 = vst.msk [vmem:[%s203 + $0xa8] sm:$0xff] %vm236, %v3799
        %3832 = vst.msk [vmem:[%s203 + $0xb0] sm:$0xff] %vm236, %v3800
        %3833 = vst.msk [vmem:[%s203 + $0xb8] sm:$0xff] %vm236, %v3801
        %3834 = vst.msk [vmem:[%s203 + $0xc0] sm:$0xff] %vm236, %v3802
        %3835 = vst.msk [vmem:[%s203 + $0xc8] sm:$0xff] %vm236, %v3803
        %3836 = vst.msk [vmem:[%s203 + $0xd0] sm:$0xff] %vm236, %v3804
        %3837 = vst.msk [vmem:[%s203 + $0xd8] sm:$0xff] %vm236, %v3805
        %3838 = vst.msk [vmem:[%s203 + $0xe0] sm:$0xff] %vm236, %v3806
        %3839 = vst.msk [vmem:[%s203 + $0xe8] sm:$0xff] %vm236, %v3807
        %3840 = vst.msk [vmem:[%s203 + $0xf0] sm:$0xff] %vm236, %v3808
        %3841 = vst.msk [vmem:[%s203 + $0xf8] sm:$0xff] %vm236, %v3809
        %s3842 = sand.u32 %s97, 1
        %s3843 = scalar_lea.sflag [#allocation5], %s3842
        %s3844 = sand.u32 %s97, 1
        %s3845 = smul.addr %s3844, 256
        %s3846 = scalar_lea.vmem [#allocation8], %s3845
        // Predicated region
        $region41: #{tpu_custom_call.1} parent=31 // pred_check
          %p3847 = pneg %p107
        $region42: #{tpu_custom_call.1} parent=31 // pred_check_branch
          %3849 = sbr.rel (%p3847) target = $region44
        $region43: #{tpu_custom_call.1} parent=31 // pred_region
          %s3851 = ssub.s32 4096, 4096
          %3852 = vsyncadd %s3843, %s3851
          %s3853 = smul.addr %s21, 32
          %s3854 = smul.addr %s3853, 128
          %s3855 = scalar_lea.hbm %s3, %s3854
          %s3856 = sshll.u32 %s3846, 4
          %s3857 = int_to_ptr.vmem [resolvable:$true] %s3856
          %3862 = dma.vmem_to_hbm [thread:$0]  %s3857, 4096, %s3855, %s3843, 128, 128, 8
        $region44: #{tpu_custom_call.1} parent=31 // pred_fallthru
          _
      $region32: #{tpu_custom_call.1} parent=5 // pred_fallthru
        _
      %p3863 = scmp.le.s32.totalorder 2, %s16
      // Predicated region
      $region45: #{tpu_custom_call.1} parent=5 // pred_check
        %p3864 = pneg %p3863
      $region46: #{tpu_custom_call.1} parent=5 // pred_check_branch
        %3866 = sbr.rel (%p3864) target = $region48
      $region47: #{tpu_custom_call.1} parent=5 // pred_region
        %s3867 = ssub.s32 %s16, 2
        // Predicated region
        $region49: #{tpu_custom_call.1} parent=47 // pred_check
          %p3868 = pneg %p113
        $region50: #{tpu_custom_call.1} parent=47 // pred_check_branch
          %3870 = sbr.rel (%p3868) target = $region52
        $region51: #{tpu_custom_call.1} parent=47 // pred_region
          %s3871 = sand.u32 %s98, 1
          %s3872 = scalar_lea.sflag [#allocation5], %s3871
          %s3873 = sand.u32 %s98, 1
          %s3874 = smul.addr %s3873, 256
          %s3875 = scalar_lea.vmem [#allocation8], %s3874
          %3876 = dma.done %s3872, 4096
        $region52: #{tpu_custom_call.1} parent=47 // pred_fallthru
          _
      $region48: #{tpu_custom_call.1} parent=5 // pred_fallthru
        _
    $region6: #{tpu_custom_call.1} parent=1 // loop_footer
      %s20 = sadd.s32 1, %s16
    $region7: #{tpu_custom_call.1} parent=1 // loop_footer_branch
      %15 = sbr.rel target = $region3
    $region8: #{tpu_custom_call.1} parent=1 // loop_exit
      _
    %3877 = vsyncpa [#allocation4], 1
    %s3878 = scalar_lea.sflag [#allocation4], 1
    %3879 = vsyncpa %s3878, 1
    %3880 = vsyncpa [#allocation7], 1
    %3881 = vsyncpa [#allocation5], 1
    %s3882 = scalar_lea.sflag [#allocation5], 1
    %3883 = vsyncpa %s3882, 1

</llo_original>
